<compile_context>
chip_gen: v6e
topology: v6e:2x2x1
jax: 0.10.0
libtpu: 0.0.40
codegen_flags: <defaults>
</compile_context>

<pallas_src>
import numpy as np

import jax
import jax.numpy as jnp
from jax import lax
from jax.experimental import pallas as pl
from jax.experimental.pallas import tpu as pltpu


# ----------------------------------------------------------------------------
# Layout helpers (plain JAX / numpy glue)
# ----------------------------------------------------------------------------

def _round_up(n, m):
    return ((n + m - 1) // m) * m


def pad_flatten(x):
    """(C, B, H, W) -> (C, Np_pad) zero-padded spatially, lane-padded to x128."""
    C, B, H, W = x.shape
    Hp, Wp = H + 2, W + 2
    Np = B * Hp * Wp
    xp = jnp.pad(x, ((0, 0), (0, 0), (1, 1), (1, 1)))
    xf = xp.reshape(C, Np)
    return jnp.pad(xf, ((0, 0), (0, _round_up(Np, 128) - Np)))


def interior_mask(B, H, W):
    """(1, Np_pad) f32 mask: 1.0 at interior (non-pad) positions, else 0."""
    Hp, Wp = H + 2, W + 2
    Np = B * Hp * Wp
    m = np.zeros((B, Hp, Wp), np.float32)
    m[:, 1:H + 1, 1:W + 1] = 1.0
    m = m.reshape(1, Np)
    m = np.pad(m, ((0, 0), (0, _round_up(Np, 128) - Np)))
    return jnp.asarray(m)


def unflatten_interior(yf, B, H, W):
    """(Cout, Np_pad) padded slab -> (Cout, B, H, W) interior."""
    Hp, Wp = H + 2, W + 2
    Np = B * Hp * Wp
    y = yf[:, :Np].reshape(-1, B, Hp, Wp)
    return y[:, :, 1:H + 1, 1:W + 1]


def _full2d(shape):
    return pl.BlockSpec(shape, lambda i: (0, 0))


# ----------------------------------------------------------------------------
# In-kernel DSConv3x3 building blocks (traced inside pallas kernels)
# ----------------------------------------------------------------------------

def _depthwise_bn_relu(x, mask, dww, dwg, dwb, Wp, inv_cnt):
    """Depthwise 3x3 (padding=1) via lane rolls + per-channel FMA, then masked
    train-mode BN + ReLU. x: (C, Np_pad) zero-bordered slab."""
    npad = x.shape[1]
    acc = jnp.zeros_like(x)
    for k in range(9):                       # static unroll over the 3x3 taps
        di, dj = divmod(k, 3)
        shift = ((1 - di) * Wp + (1 - dj)) % npad
        xs = x if shift == 0 else pltpu.roll(x, shift=shift, axis=1)
        acc = acc + xs * dww[:, k:k + 1]     # (C,1) broadcast along lanes

    mean = jnp.sum(acc * mask, axis=1, keepdims=True) * inv_cnt
    cen = (acc - mean) * mask
    var = jnp.sum(cen * cen, axis=1, keepdims=True) * inv_cnt
    return jnp.maximum((acc - mean) * lax.rsqrt(var + 1e-5) * dwg + dwb, 0.0)


def _bn_relu(z, mask, g, b, inv_cnt):
    mean = jnp.sum(z * mask, axis=1, keepdims=True) * inv_cnt
    cen = (z - mean) * mask
    var = jnp.sum(cen * cen, axis=1, keepdims=True) * inv_cnt
    return jnp.maximum((z - mean) * lax.rsqrt(var + 1e-5) * g + b, 0.0)


def _dsconv_compute(x, mask, dww, dwg, dwb, pww, pwg, pwb, Wp, inv_cnt):
    """Full DSConv3x3 block. Returns (Cout, Np_pad); border NOT re-zeroed."""
    y = _depthwise_bn_relu(x, mask, dww, dwg, dwb, Wp, inv_cnt)
    z = jnp.dot(pww, y, preferred_element_type=jnp.float32)   # MXU: big dim on N
    return _bn_relu(z, mask, pwg, pwb, inv_cnt)


# ----------------------------------------------------------------------------
# Pallas kernel A: conv_fl_up + conv_fl_down + conv_cat_fl, fully fused
# ----------------------------------------------------------------------------

def lowpass_path_call(flu, fld, mask, p_up, p_down, p_cat, B, H, W):
    """flu/fld: (Cin, Np_pad) zero-bordered padded slabs of the DWT lowpass.
    Returns conv_cat_fl(cat(conv_fl_up(flu), conv_fl_down(fld))) as a
    (Cout, Np_pad) slab (interior values valid)."""
    Cin, Np_pad = flu.shape
    Cout = p_cat["pww"].shape[0]
    Wp = W + 2
    inv_cnt = 1.0 / float(B * H * W)

    def kernel(flu_ref, fld_ref, m_ref,
               dwwu, dwgu, dwbu, pwwu, pwgu, pwbu,
               dwwd, dwgd, dwbd, pwwd, pwgd, pwbd,
               dwwc, dwgc, dwbc, pwwc, pwgc, pwbc,
               o_ref):
        m = m_ref[...]
        # Two independent DSConv blocks; re-zero their padded borders so the
        # chained depthwise rolls stay exact.
        cu = _dsconv_compute(flu_ref[...], m, dwwu[...], dwgu[...], dwbu[...],
                             pwwu[...], pwgu[...], pwbu[...], Wp, inv_cnt) * m
        cd = _dsconv_compute(fld_ref[...], m, dwwd[...], dwgd[...], dwbd[...],
                             pwwd[...], pwgd[...], pwbd[...], Wp, inv_cnt) * m

        # conv_cat_fl on the channel-concat [cu; cd] WITHOUT materializing the
        # concat: per-channel depthwise/BN/ReLU split exactly along channels,
        # 1x1 conv as the sum of two (Cout, Cin) @ (Cin, M) matmuls.
        dww_c = dwwc[...]
        dwg_c = dwgc[...]
        dwb_c = dwbc[...]
        pww_c = pwwc[...]
        Cu = cu.shape[0]
        ya = _depthwise_bn_relu(cu, m, dww_c[:Cu], dwg_c[:Cu], dwb_c[:Cu],
                                Wp, inv_cnt)
        yb = _depthwise_bn_relu(cd, m, dww_c[Cu:], dwg_c[Cu:], dwb_c[Cu:],
                                Wp, inv_cnt)
        z = (jnp.dot(pww_c[:, :Cu], ya, preferred_element_type=jnp.float32)
             + jnp.dot(pww_c[:, Cu:], yb, preferred_element_type=jnp.float32))
        o_ref[...] = _bn_relu(z, m, pwgc[...], pwbc[...], inv_cnt)

    args = (flu, fld, mask,
            p_up["dww"], p_up["dwg"], p_up["dwb"],
            p_up["pww"], p_up["pwg"], p_up["pwb"],
            p_down["dww"], p_down["dwg"], p_down["dwb"],
            p_down["pww"], p_down["pwg"], p_down["pwb"],
            p_cat["dww"], p_cat["dwg"], p_cat["dwb"],
            p_cat["pww"], p_cat["pwg"], p_cat["pwb"])
    return pl.pallas_call(
        kernel,
        out_shape=jax.ShapeDtypeStruct((Cout, Np_pad), jnp.float32),
        grid=(1,),
        in_specs=[_full2d(a.shape) for a in args],
        out_specs=_full2d((Cout, Np_pad)),
        compiler_params=pltpu.CompilerParams(dimension_semantics=("arbitrary",)),
    )(*args)


# ----------------------------------------------------------------------------
# Pallas kernel B: conv_FFT_up + conv_FFT_down + (cu*x_up + cd*x_down)
#                  + conv_out, fully fused
# ----------------------------------------------------------------------------

def highpass_out_call(fu, fd, xu, xd, mask, p_fu, p_fd, p_out, B, H, W):
    Cin, Np_pad = fu.shape
    Cout = p_out["pww"].shape[0]
    Wp = W + 2
    inv_cnt = 1.0 / float(B * H * W)

    def kernel(fu_ref, fd_ref, xu_ref, xd_ref, m_ref,
               dww1, dwg1, dwb1, pww1, pwg1, pwb1,
               dww2, dwg2, dwb2, pww2, pwg2, pwb2,
               dww3, dwg3, dwb3, pww3, pwg3, pwb3,
               o_ref):
        m = m_ref[...]
        cu = _dsconv_compute(fu_ref[...], m, dww1[...], dwg1[...], dwb1[...],
                             pww1[...], pwg1[...], pwb1[...], Wp, inv_cnt)
        cd = _dsconv_compute(fd_ref[...], m, dww2[...], dwg2[...], dwb2[...],
                             pww2[...], pwg2[...], pwb2[...], Wp, inv_cnt)
        # x_up / x_down slabs are zero at border + lane tail, so the fused sum
        # is already a valid zero-bordered padded slab for the chained conv.
        fused = cu * xu_ref[...] + cd * xd_ref[...]
        o_ref[...] = _dsconv_compute(fused, m, dww3[...], dwg3[...], dwb3[...],
                                     pww3[...], pwg3[...], pwb3[...],
                                     Wp, inv_cnt)

    args = (fu, fd, xu, xd, mask,
            p_fu["dww"], p_fu["dwg"], p_fu["dwb"],
            p_fu["pww"], p_fu["pwg"], p_fu["pwb"],
            p_fd["dww"], p_fd["dwg"], p_fd["dwb"],
            p_fd["pww"], p_fd["pwg"], p_fd["pwb"],
            p_out["dww"], p_out["dwg"], p_out["dwb"],
            p_out["pww"], p_out["pwg"], p_out["pwb"])
    return pl.pallas_call(
        kernel,
        out_shape=jax.ShapeDtypeStruct((Cout, Np_pad), jnp.float32),
        grid=(1,),
        in_specs=[_full2d(a.shape) for a in args],
        out_specs=_full2d((Cout, Np_pad)),
        compiler_params=pltpu.CompilerParams(dimension_semantics=("arbitrary",)),
    )(*args)


# ----------------------------------------------------------------------------
# Wavelet substitute (plain-JAX glue, reshape/stack based -- no scatter)
# ----------------------------------------------------------------------------

def _haar_dwt_level(x):
    C, B, H, W = x.shape
    xr = x.reshape(C, B, H // 2, 2, W // 2, 2)
    a = xr[:, :, :, 0, :, 0]
    b = xr[:, :, :, 0, :, 1]
    c = xr[:, :, :, 1, :, 0]
    d = xr[:, :, :, 1, :, 1]
    ll = (a + b + c + d) * 0.5
    return ll, ((a + b - c - d) * 0.5,
                (a - b + c - d) * 0.5,
                (a - b - c + d) * 0.5)


def _haar_idwt_level(ll, high):
    lh, hl, hh = high
    a = (ll + lh + hl + hh) * 0.5
    b = (ll + lh - hl - hh) * 0.5
    c = (ll - lh + hl - hh) * 0.5
    d = (ll - lh - hl + hh) * 0.5
    C, B, h, w = ll.shape
    top = jnp.stack([a, b], axis=-1).reshape(C, B, h, 2 * w)
    bot = jnp.stack([c, d], axis=-1).reshape(C, B, h, 2 * w)
    return jnp.stack([top, bot], axis=-2).reshape(C, B, 2 * h, 2 * w)


def dwt(x, J=3):
    highs, ll = [], x
    for _ in range(J):
        ll, h = _haar_dwt_level(ll)
        highs.append(h)
    return ll, highs


def idwt(ll, highs):
    for h in reversed(highs):
        ll = _haar_idwt_level(ll, h)
    return ll


# ----------------------------------------------------------------------------
# Parameter init (deterministic, synthetic)
# ----------------------------------------------------------------------------

def init_dsconv_params(key, cin, cout):
    k = jax.random.split(key, 6)
    return dict(
        dww=jax.random.normal(k[0], (cin, 9), jnp.float32) * 0.2,
        dwg=1.0 + 0.1 * jax.random.normal(k[1], (cin, 1), jnp.float32),
        dwb=0.1 * jax.random.normal(k[2], (cin, 1), jnp.float32),
        pww=jax.random.normal(k[3], (cout, cin), jnp.float32) / jnp.sqrt(float(cin)),
        pwg=1.0 + 0.1 * jax.random.normal(k[4], (cout, 1), jnp.float32),
        pwb=0.1 * jax.random.normal(k[5], (cout, 1), jnp.float32),
    )


def init_fdw_v2_params(key, in_channel):
    names_cin = [
        ("conv_fl_up", in_channel),
        ("conv_fl_down", in_channel),
        ("conv_cat_fl", 2 * in_channel),
        ("conv_out", in_channel),
        ("conv_FFT_up", in_channel),
        ("conv_FFT_down", in_channel),
    ]
    keys = jax.random.split(key, len(names_cin))
    return {name: init_dsconv_params(k, cin, in_channel)
            for (name, cin), k in zip(names_cin, keys)}


# ----------------------------------------------------------------------------
# FDW_v2 forward: NCHW in/out, 2 pallas_call launches total
# ----------------------------------------------------------------------------

def fdw_v2_forward(x_up_nchw, x_down_nchw, params):
    xu = jnp.transpose(x_up_nchw, (1, 0, 2, 3)).astype(jnp.float32)
    xd = jnp.transpose(x_down_nchw, (1, 0, 2, 3)).astype(jnp.float32)
    C, B, H, W = xu.shape

    fl_up, fh_up = dwt(xu, J=3)
    fl_down, fh_down = dwt(xd, J=3)
    hl, wl = fl_up.shape[2], fl_up.shape[3]

    # Lowpass path: conv_fl_up / conv_fl_down / conv_cat_fl in one kernel.
    mask_l = interior_mask(B, hl, wl)
    fl_cat = lowpass_path_call(pad_flatten(fl_up), pad_flatten(fl_down), mask_l,
                               params["conv_fl_up"], params["conv_fl_down"],
                               params["conv_cat_fl"], B, hl, wl)
    fl_cat = unflatten_interior(fl_cat, B, hl, wl)           # (C, B, hl, wl)

    fft_up = idwt(fl_cat, fh_up)                             # (C, B, H, W)
    fft_down = idwt(fl_cat, fh_down)

    # conv_FFT_up / conv_FFT_down / mul-add / conv_out in one kernel.
    mask = interior_mask(B, H, W)
    out = highpass_out_call(
        pad_flatten(fft_up), pad_flatten(fft_down),
        pad_flatten(xu), pad_flatten(xd), mask,
        params["conv_FFT_up"], params["conv_FFT_down"], params["conv_out"],
        B, H, W)
    out = unflatten_interior(out, B, H, W)                   # (C, B, H, W)
    return jnp.transpose(out, (1, 0, 2, 3))                  # back to NCHW


# ----------------------------------------------------------------------------
# Main
# ----------------------------------------------------------------------------

if __name__ == "__main__":
    B, C, H, W = 2, 8, 16, 16          # H, W divisible by 2^J with J=3
    key = jax.random.PRNGKey(0)
    k_par, k_up, k_down = jax.random.split(key, 3)

    params = init_fdw_v2_params(k_par, C)
    x_up = jax.random.normal(k_up, (B, C, H, W), jnp.float32)
    x_down = jax.random.normal(k_down, (B, C, H, W), jnp.float32)

    fwd = jax.jit(fdw_v2_forward)
    out = jax.block_until_ready(fwd(x_up, x_down, params))

    assert out.shape == (B, C, H, W) and out.dtype == jnp.float32
    assert bool(jnp.all(jnp.isfinite(out)))
    print("KERNEL_OK")
</pallas_src>

<mosaic_0001>
module attributes {stable_mosaic.version = 11 : i64} {
  func.func @kernel(%arg0: i32, %arg1: memref<8x128xf32, #tpu.memory_space<vmem>>, %arg2: memref<8x128xf32, #tpu.memory_space<vmem>>, %arg3: memref<1x128xf32, #tpu.memory_space<vmem>>, %arg4: memref<8x9xf32, #tpu.memory_space<vmem>>, %arg5: memref<8x1xf32, #tpu.memory_space<vmem>>, %arg6: memref<8x1xf32, #tpu.memory_space<vmem>>, %arg7: memref<8x8xf32, #tpu.memory_space<vmem>>, %arg8: memref<8x1xf32, #tpu.memory_space<vmem>>, %arg9: memref<8x1xf32, #tpu.memory_space<vmem>>, %arg10: memref<8x9xf32, #tpu.memory_space<vmem>>, %arg11: memref<8x1xf32, #tpu.memory_space<vmem>>, %arg12: memref<8x1xf32, #tpu.memory_space<vmem>>, %arg13: memref<8x8xf32, #tpu.memory_space<vmem>>, %arg14: memref<8x1xf32, #tpu.memory_space<vmem>>, %arg15: memref<8x1xf32, #tpu.memory_space<vmem>>, %arg16: memref<16x9xf32, #tpu.memory_space<vmem>>, %arg17: memref<16x1xf32, #tpu.memory_space<vmem>>, %arg18: memref<16x1xf32, #tpu.memory_space<vmem>>, %arg19: memref<8x16xf32, #tpu.memory_space<vmem>>, %arg20: memref<8x1xf32, #tpu.memory_space<vmem>>, %arg21: memref<8x1xf32, #tpu.memory_space<vmem>>, %arg22: memref<8x128xf32, #tpu.memory_space<vmem>>) attributes {dimension_semantics = [#tpu.dimension_semantics<arbitrary>], iteration_bounds = array<i64: 1>, scalar_prefetch = 0 : i64, scratch_operands = 0 : i64, tpu.core_type = #tpu.core_type<tc>, window_params = [{pipeline_mode = #tpu.pipeline_mode<synchronous>, transform_indices = @transform_0, window_bounds = array<i64: 8, 128>}, {pipeline_mode = #tpu.pipeline_mode<synchronous>, transform_indices = @transform_1, window_bounds = array<i64: 8, 128>}, {pipeline_mode = #tpu.pipeline_mode<synchronous>, transform_indices = @transform_2, window_bounds = array<i64: 1, 128>}, {pipeline_mode = #tpu.pipeline_mode<synchronous>, transform_indices = @transform_3, window_bounds = array<i64: 8, 9>}, {pipeline_mode = #tpu.pipeline_mode<synchronous>, transform_indices = @transform_4, window_bounds = array<i64: 8, 1>}, {pipeline_mode = #tpu.pipeline_mode<synchronous>, transform_indices = @transform_5, window_bounds = array<i64: 8, 1>}, {pipeline_mode = #tpu.pipeline_mode<synchronous>, transform_indices = @transform_6, window_bounds = array<i64: 8, 8>}, {pipeline_mode = #tpu.pipeline_mode<synchronous>, transform_indices = @transform_7, window_bounds = array<i64: 8, 1>}, {pipeline_mode = #tpu.pipeline_mode<synchronous>, transform_indices = @transform_8, window_bounds = array<i64: 8, 1>}, {pipeline_mode = #tpu.pipeline_mode<synchronous>, transform_indices = @transform_9, window_bounds = array<i64: 8, 9>}, {pipeline_mode = #tpu.pipeline_mode<synchronous>, transform_indices = @transform_10, window_bounds = array<i64: 8, 1>}, {pipeline_mode = #tpu.pipeline_mode<synchronous>, transform_indices = @transform_11, window_bounds = array<i64: 8, 1>}, {pipeline_mode = #tpu.pipeline_mode<synchronous>, transform_indices = @transform_12, window_bounds = array<i64: 8, 8>}, {pipeline_mode = #tpu.pipeline_mode<synchronous>, transform_indices = @transform_13, window_bounds = array<i64: 8, 1>}, {pipeline_mode = #tpu.pipeline_mode<synchronous>, transform_indices = @transform_14, window_bounds = array<i64: 8, 1>}, {pipeline_mode = #tpu.pipeline_mode<synchronous>, transform_indices = @transform_15, window_bounds = array<i64: 16, 9>}, {pipeline_mode = #tpu.pipeline_mode<synchronous>, transform_indices = @transform_16, window_bounds = array<i64: 16, 1>}, {pipeline_mode = #tpu.pipeline_mode<synchronous>, transform_indices = @transform_17, window_bounds = array<i64: 16, 1>}, {pipeline_mode = #tpu.pipeline_mode<synchronous>, transform_indices = @transform_18, window_bounds = array<i64: 8, 16>}, {pipeline_mode = #tpu.pipeline_mode<synchronous>, transform_indices = @transform_19, window_bounds = array<i64: 8, 1>}, {pipeline_mode = #tpu.pipeline_mode<synchronous>, transform_indices = @transform_20, window_bounds = array<i64: 8, 1>}, {pipeline_mode = #tpu.pipeline_mode<synchronous>, transform_indices = @transform_21, window_bounds = array<i64: 8, 128>}]} {
    %c0 = arith.constant 0 : index
    %c0_0 = arith.constant 0 : index
    %0 = vector.load %arg3[%c0, %c0_0] : memref<1x128xf32, #tpu.memory_space<vmem>>, vector<1x128xf32>
    %c0_1 = arith.constant 0 : index
    %c0_2 = arith.constant 0 : index
    %1 = vector.load %arg1[%c0_1, %c0_2] : memref<8x128xf32, #tpu.memory_space<vmem>>, vector<8x128xf32>
    %c0_3 = arith.constant 0 : index
    %c0_4 = arith.constant 0 : index
    %2 = vector.load %arg4[%c0_3, %c0_4] : memref<8x9xf32, #tpu.memory_space<vmem>>, vector<8x9xf32>
    %c0_5 = arith.constant 0 : index
    %c0_6 = arith.constant 0 : index
    %3 = vector.load %arg5[%c0_5, %c0_6] : memref<8x1xf32, #tpu.memory_space<vmem>>, vector<8x1xf32>
    %c0_7 = arith.constant 0 : index
    %c0_8 = arith.constant 0 : index
    %4 = vector.load %arg6[%c0_7, %c0_8] : memref<8x1xf32, #tpu.memory_space<vmem>>, vector<8x1xf32>
    %c0_9 = arith.constant 0 : index
    %c0_10 = arith.constant 0 : index
    %5 = vector.load %arg7[%c0_9, %c0_10] : memref<8x8xf32, #tpu.memory_space<vmem>>, vector<8x8xf32>
    %c0_11 = arith.constant 0 : index
    %c0_12 = arith.constant 0 : index
    %6 = vector.load %arg8[%c0_11, %c0_12] : memref<8x1xf32, #tpu.memory_space<vmem>>, vector<8x1xf32>
    %c0_13 = arith.constant 0 : index
    %c0_14 = arith.constant 0 : index
    %7 = vector.load %arg9[%c0_13, %c0_14] : memref<8x1xf32, #tpu.memory_space<vmem>>, vector<8x1xf32>
    %cst = arith.constant 0.000000e+00 : f32
    %8 = vector.broadcast %cst : f32 to vector<8x128xf32>
    %c5_i32 = arith.constant 5 : i32
    %9 = tpu.dynamic_rotate %1 by %c5_i32 dim 1 : vector<8x128xf32>, i32 -> vector<8x128xf32>
    %10 = vector.extract_strided_slice %2 {offsets = [0, 0], sizes = [8, 1], strides = [1, 1]} : vector<8x9xf32> to vector<8x1xf32>
    %11 = vector.broadcast %10 : vector<8x1xf32> to vector<8x128xf32>
    %12 = arith.mulf %9, %11 : vector<8x128xf32>
    %13 = arith.addf %8, %12 : vector<8x128xf32>
    %c4_i32 = arith.constant 4 : i32
    %14 = tpu.dynamic_rotate %1 by %c4_i32 dim 1 : vector<8x128xf32>, i32 -> vector<8x128xf32>
    %15 = vector.extract_strided_slice %2 {offsets = [0, 1], sizes = [8, 1], strides = [1, 1]} : vector<8x9xf32> to vector<8x1xf32>
    %16 = vector.broadcast %15 : vector<8x1xf32> to vector<8x128xf32>
    %17 = arith.mulf %14, %16 : vector<8x128xf32>
    %18 = arith.addf %13, %17 : vector<8x128xf32>
    %c3_i32 = arith.constant 3 : i32
    %19 = tpu.dynamic_rotate %1 by %c3_i32 dim 1 : vector<8x128xf32>, i32 -> vector<8x128xf32>
    %20 = vector.extract_strided_slice %2 {offsets = [0, 2], sizes = [8, 1], strides = [1, 1]} : vector<8x9xf32> to vector<8x1xf32>
    %21 = vector.broadcast %20 : vector<8x1xf32> to vector<8x128xf32>
    %22 = arith.mulf %19, %21 : vector<8x128xf32>
    %23 = arith.addf %18, %22 : vector<8x128xf32>
    %c1_i32 = arith.constant 1 : i32
    %24 = tpu.dynamic_rotate %1 by %c1_i32 dim 1 : vector<8x128xf32>, i32 -> vector<8x128xf32>
    %25 = vector.extract_strided_slice %2 {offsets = [0, 3], sizes = [8, 1], strides = [1, 1]} : vector<8x9xf32> to vector<8x1xf32>
    %26 = vector.broadcast %25 : vector<8x1xf32> to vector<8x128xf32>
    %27 = arith.mulf %24, %26 : vector<8x128xf32>
    %28 = arith.addf %23, %27 : vector<8x128xf32>
    %29 = vector.extract_strided_slice %2 {offsets = [0, 4], sizes = [8, 1], strides = [1, 1]} : vector<8x9xf32> to vector<8x1xf32>
    %30 = vector.broadcast %29 : vector<8x1xf32> to vector<8x128xf32>
    %31 = arith.mulf %1, %30 : vector<8x128xf32>
    %32 = arith.addf %28, %31 : vector<8x128xf32>
    %c127_i32 = arith.constant 127 : i32
    %33 = tpu.dynamic_rotate %1 by %c127_i32 dim 1 : vector<8x128xf32>, i32 -> vector<8x128xf32>
    %34 = vector.extract_strided_slice %2 {offsets = [0, 5], sizes = [8, 1], strides = [1, 1]} : vector<8x9xf32> to vector<8x1xf32>
    %35 = vector.broadcast %34 : vector<8x1xf32> to vector<8x128xf32>
    %36 = arith.mulf %33, %35 : vector<8x128xf32>
    %37 = arith.addf %32, %36 : vector<8x128xf32>
    %c125_i32 = arith.constant 125 : i32
    %38 = tpu.dynamic_rotate %1 by %c125_i32 dim 1 : vector<8x128xf32>, i32 -> vector<8x128xf32>
    %39 = vector.extract_strided_slice %2 {offsets = [0, 6], sizes = [8, 1], strides = [1, 1]} : vector<8x9xf32> to vector<8x1xf32>
    %40 = vector.broadcast %39 : vector<8x1xf32> to vector<8x128xf32>
    %41 = arith.mulf %38, %40 : vector<8x128xf32>
    %42 = arith.addf %37, %41 : vector<8x128xf32>
    %c124_i32 = arith.constant 124 : i32
    %43 = tpu.dynamic_rotate %1 by %c124_i32 dim 1 : vector<8x128xf32>, i32 -> vector<8x128xf32>
    %44 = vector.extract_strided_slice %2 {offsets = [0, 7], sizes = [8, 1], strides = [1, 1]} : vector<8x9xf32> to vector<8x1xf32>
    %45 = vector.broadcast %44 : vector<8x1xf32> to vector<8x128xf32>
    %46 = arith.mulf %43, %45 : vector<8x128xf32>
    %47 = arith.addf %42, %46 : vector<8x128xf32>
    %c123_i32 = arith.constant 123 : i32
    %48 = tpu.dynamic_rotate %1 by %c123_i32 dim 1 : vector<8x128xf32>, i32 -> vector<8x128xf32>
    %49 = vector.extract_strided_slice %2 {offsets = [0, 8], sizes = [8, 1], strides = [1, 1]} : vector<8x9xf32> to vector<8x1xf32>
    %50 = vector.broadcast %49 : vector<8x1xf32> to vector<8x128xf32>
    %51 = arith.mulf %48, %50 : vector<8x128xf32>
    %52 = arith.addf %47, %51 : vector<8x128xf32>
    %53 = vector.broadcast %0 : vector<1x128xf32> to vector<8x128xf32>
    %54 = arith.mulf %52, %53 : vector<8x128xf32>
    %cst_15 = arith.constant dense<0.000000e+00> : vector<8xf32>
    %55 = vector.multi_reduction <add>, %54, %cst_15 [1] : vector<8x128xf32> to vector<8xf32>
    %56 = vector.shape_cast %55 : vector<8xf32> to vector<8x1xf32>
    %cst_16 = arith.constant 1.250000e-01 : f32
    %57 = vector.broadcast %cst_16 : f32 to vector<8x1xf32>
    %58 = arith.mulf %56, %57 : vector<8x1xf32>
    %59 = vector.broadcast %58 : vector<8x1xf32> to vector<8x128xf32>
    %60 = arith.subf %52, %59 : vector<8x128xf32>
    %61 = vector.broadcast %0 : vector<1x128xf32> to vector<8x128xf32>
    %62 = arith.mulf %60, %61 : vector<8x128xf32>
    %63 = arith.mulf %62, %62 : vector<8x128xf32>
    %cst_17 = arith.constant dense<0.000000e+00> : vector<8xf32>
    %64 = vector.multi_reduction <add>, %63, %cst_17 [1] : vector<8x128xf32> to vector<8xf32>
    %65 = vector.shape_cast %64 : vector<8xf32> to vector<8x1xf32>
    %cst_18 = arith.constant 1.250000e-01 : f32
    %66 = vector.broadcast %cst_18 : f32 to vector<8x1xf32>
    %67 = arith.mulf %65, %66 : vector<8x1xf32>
    %68 = vector.broadcast %58 : vector<8x1xf32> to vector<8x128xf32>
    %69 = arith.subf %52, %68 : vector<8x128xf32>
    %cst_19 = arith.constant 9.99999974E-6 : f32
    %70 = vector.broadcast %cst_19 : f32 to vector<8x1xf32>
    %71 = arith.addf %67, %70 : vector<8x1xf32>
    %72 = math.rsqrt %71 : vector<8x1xf32>
    %73 = vector.broadcast %72 : vector<8x1xf32> to vector<8x128xf32>
    %74 = arith.mulf %69, %73 : vector<8x128xf32>
    %75 = vector.broadcast %3 : vector<8x1xf32> to vector<8x128xf32>
    %76 = arith.mulf %74, %75 : vector<8x128xf32>
    %77 = vector.broadcast %4 : vector<8x1xf32> to vector<8x128xf32>
    %78 = arith.addf %76, %77 : vector<8x128xf32>
    %cst_20 = arith.constant 0.000000e+00 : f32
    %79 = vector.broadcast %cst_20 : f32 to vector<8x128xf32>
    %80 = arith.maximumf %78, %79 : vector<8x128xf32>
    %cst_21 = arith.constant dense<0.000000e+00> : vector<8x128xf32>
    %81 = tpu.matmul %5, %80, %cst_21 {dimension_numbers = #tpu.dot_dimension_numbers<[1], [0], [0], [1], [0, 0, 1, 1], [], []>} : vector<8x8xf32>, vector<8x128xf32>, vector<8x128xf32> -> vector<8x128xf32>
    %82 = vector.broadcast %0 : vector<1x128xf32> to vector<8x128xf32>
    %83 = arith.mulf %81, %82 : vector<8x128xf32>
    %cst_22 = arith.constant dense<0.000000e+00> : vector<8xf32>
    %84 = vector.multi_reduction <add>, %83, %cst_22 [1] : vector<8x128xf32> to vector<8xf32>
    %85 = vector.shape_cast %84 : vector<8xf32> to vector<8x1xf32>
    %cst_23 = arith.constant 1.250000e-01 : f32
    %86 = vector.broadcast %cst_23 : f32 to vector<8x1xf32>
    %87 = arith.mulf %85, %86 : vector<8x1xf32>
    %88 = vector.broadcast %87 : vector<8x1xf32> to vector<8x128xf32>
    %89 = arith.subf %81, %88 : vector<8x128xf32>
    %90 = vector.broadcast %0 : vector<1x128xf32> to vector<8x128xf32>
    %91 = arith.mulf %89, %90 : vector<8x128xf32>
    %92 = arith.mulf %91, %91 : vector<8x128xf32>
    %cst_24 = arith.constant dense<0.000000e+00> : vector<8xf32>
    %93 = vector.multi_reduction <add>, %92, %cst_24 [1] : vector<8x128xf32> to vector<8xf32>
    %94 = vector.shape_cast %93 : vector<8xf32> to vector<8x1xf32>
    %cst_25 = arith.constant 1.250000e-01 : f32
    %95 = vector.broadcast %cst_25 : f32 to vector<8x1xf32>
    %96 = arith.mulf %94, %95 : vector<8x1xf32>
    %97 = vector.broadcast %87 : vector<8x1xf32> to vector<8x128xf32>
    %98 = arith.subf %81, %97 : vector<8x128xf32>
    %cst_26 = arith.constant 9.99999974E-6 : f32
    %99 = vector.broadcast %cst_26 : f32 to vector<8x1xf32>
    %100 = arith.addf %96, %99 : vector<8x1xf32>
    %101 = math.rsqrt %100 : vector<8x1xf32>
    %102 = vector.broadcast %101 : vector<8x1xf32> to vector<8x128xf32>
    %103 = arith.mulf %98, %102 : vector<8x128xf32>
    %104 = vector.broadcast %6 : vector<8x1xf32> to vector<8x128xf32>
    %105 = arith.mulf %103, %104 : vector<8x128xf32>
    %106 = vector.broadcast %7 : vector<8x1xf32> to vector<8x128xf32>
    %107 = arith.addf %105, %106 : vector<8x128xf32>
    %cst_27 = arith.constant 0.000000e+00 : f32
    %108 = vector.broadcast %cst_27 : f32 to vector<8x128xf32>
    %109 = arith.maximumf %107, %108 : vector<8x128xf32>
    %110 = vector.broadcast %0 : vector<1x128xf32> to vector<8x128xf32>
    %111 = arith.mulf %109, %110 : vector<8x128xf32>
    %c0_28 = arith.constant 0 : index
    %c0_29 = arith.constant 0 : index
    %112 = vector.load %arg2[%c0_28, %c0_29] : memref<8x128xf32, #tpu.memory_space<vmem>>, vector<8x128xf32>
    %c0_30 = arith.constant 0 : index
    %c0_31 = arith.constant 0 : index
    %113 = vector.load %arg10[%c0_30, %c0_31] : memref<8x9xf32, #tpu.memory_space<vmem>>, vector<8x9xf32>
    %c0_32 = arith.constant 0 : index
    %c0_33 = arith.constant 0 : index
    %114 = vector.load %arg11[%c0_32, %c0_33] : memref<8x1xf32, #tpu.memory_space<vmem>>, vector<8x1xf32>
    %c0_34 = arith.constant 0 : index
    %c0_35 = arith.constant 0 : index
    %115 = vector.load %arg12[%c0_34, %c0_35] : memref<8x1xf32, #tpu.memory_space<vmem>>, vector<8x1xf32>
    %c0_36 = arith.constant 0 : index
    %c0_37 = arith.constant 0 : index
    %116 = vector.load %arg13[%c0_36, %c0_37] : memref<8x8xf32, #tpu.memory_space<vmem>>, vector<8x8xf32>
    %c0_38 = arith.constant 0 : index
    %c0_39 = arith.constant 0 : index
    %117 = vector.load %arg14[%c0_38, %c0_39] : memref<8x1xf32, #tpu.memory_space<vmem>>, vector<8x1xf32>
    %c0_40 = arith.constant 0 : index
    %c0_41 = arith.constant 0 : index
    %118 = vector.load %arg15[%c0_40, %c0_41] : memref<8x1xf32, #tpu.memory_space<vmem>>, vector<8x1xf32>
    %cst_42 = arith.constant 0.000000e+00 : f32
    %119 = vector.broadcast %cst_42 : f32 to vector<8x128xf32>
    %c5_i32_43 = arith.constant 5 : i32
    %120 = tpu.dynamic_rotate %112 by %c5_i32_43 dim 1 : vector<8x128xf32>, i32 -> vector<8x128xf32>
    %121 = vector.extract_strided_slice %113 {offsets = [0, 0], sizes = [8, 1], strides = [1, 1]} : vector<8x9xf32> to vector<8x1xf32>
    %122 = vector.broadcast %121 : vector<8x1xf32> to vector<8x128xf32>
    %123 = arith.mulf %120, %122 : vector<8x128xf32>
    %124 = arith.addf %119, %123 : vector<8x128xf32>
    %c4_i32_44 = arith.constant 4 : i32
    %125 = tpu.dynamic_rotate %112 by %c4_i32_44 dim 1 : vector<8x128xf32>, i32 -> vector<8x128xf32>
    %126 = vector.extract_strided_slice %113 {offsets = [0, 1], sizes = [8, 1], strides = [1, 1]} : vector<8x9xf32> to vector<8x1xf32>
    %127 = vector.broadcast %126 : vector<8x1xf32> to vector<8x128xf32>
    %128 = arith.mulf %125, %127 : vector<8x128xf32>
    %129 = arith.addf %124, %128 : vector<8x128xf32>
    %c3_i32_45 = arith.constant 3 : i32
    %130 = tpu.dynamic_rotate %112 by %c3_i32_45 dim 1 : vector<8x128xf32>, i32 -> vector<8x128xf32>
    %131 = vector.extract_strided_slice %113 {offsets = [0, 2], sizes = [8, 1], strides = [1, 1]} : vector<8x9xf32> to vector<8x1xf32>
    %132 = vector.broadcast %131 : vector<8x1xf32> to vector<8x128xf32>
    %133 = arith.mulf %130, %132 : vector<8x128xf32>
    %134 = arith.addf %129, %133 : vector<8x128xf32>
    %c1_i32_46 = arith.constant 1 : i32
    %135 = tpu.dynamic_rotate %112 by %c1_i32_46 dim 1 : vector<8x128xf32>, i32 -> vector<8x128xf32>
    %136 = vector.extract_strided_slice %113 {offsets = [0, 3], sizes = [8, 1], strides = [1, 1]} : vector<8x9xf32> to vector<8x1xf32>
    %137 = vector.broadcast %136 : vector<8x1xf32> to vector<8x128xf32>
    %138 = arith.mulf %135, %137 : vector<8x128xf32>
    %139 = arith.addf %134, %138 : vector<8x128xf32>
    %140 = vector.extract_strided_slice %113 {offsets = [0, 4], sizes = [8, 1], strides = [1, 1]} : vector<8x9xf32> to vector<8x1xf32>
    %141 = vector.broadcast %140 : vector<8x1xf32> to vector<8x128xf32>
    %142 = arith.mulf %112, %141 : vector<8x128xf32>
    %143 = arith.addf %139, %142 : vector<8x128xf32>
    %c127_i32_47 = arith.constant 127 : i32
    %144 = tpu.dynamic_rotate %112 by %c127_i32_47 dim 1 : vector<8x128xf32>, i32 -> vector<8x128xf32>
    %145 = vector.extract_strided_slice %113 {offsets = [0, 5], sizes = [8, 1], strides = [1, 1]} : vector<8x9xf32> to vector<8x1xf32>
    %146 = vector.broadcast %145 : vector<8x1xf32> to vector<8x128xf32>
    %147 = arith.mulf %144, %146 : vector<8x128xf32>
    %148 = arith.addf %143, %147 : vector<8x128xf32>
    %c125_i32_48 = arith.constant 125 : i32
    %149 = tpu.dynamic_rotate %112 by %c125_i32_48 dim 1 : vector<8x128xf32>, i32 -> vector<8x128xf32>
    %150 = vector.extract_strided_slice %113 {offsets = [0, 6], sizes = [8, 1], strides = [1, 1]} : vector<8x9xf32> to vector<8x1xf32>
    %151 = vector.broadcast %150 : vector<8x1xf32> to vector<8x128xf32>
    %152 = arith.mulf %149, %151 : vector<8x128xf32>
    %153 = arith.addf %148, %152 : vector<8x128xf32>
    %c124_i32_49 = arith.constant 124 : i32
    %154 = tpu.dynamic_rotate %112 by %c124_i32_49 dim 1 : vector<8x128xf32>, i32 -> vector<8x128xf32>
    %155 = vector.extract_strided_slice %113 {offsets = [0, 7], sizes = [8, 1], strides = [1, 1]} : vector<8x9xf32> to vector<8x1xf32>
    %156 = vector.broadcast %155 : vector<8x1xf32> to vector<8x128xf32>
    %157 = arith.mulf %154, %156 : vector<8x128xf32>
    %158 = arith.addf %153, %157 : vector<8x128xf32>
    %c123_i32_50 = arith.constant 123 : i32
    %159 = tpu.dynamic_rotate %112 by %c123_i32_50 dim 1 : vector<8x128xf32>, i32 -> vector<8x128xf32>
    %160 = vector.extract_strided_slice %113 {offsets = [0, 8], sizes = [8, 1], strides = [1, 1]} : vector<8x9xf32> to vector<8x1xf32>
    %161 = vector.broadcast %160 : vector<8x1xf32> to vector<8x128xf32>
    %162 = arith.mulf %159, %161 : vector<8x128xf32>
    %163 = arith.addf %158, %162 : vector<8x128xf32>
    %164 = vector.broadcast %0 : vector<1x128xf32> to vector<8x128xf32>
    %165 = arith.mulf %163, %164 : vector<8x128xf32>
    %cst_51 = arith.constant dense<0.000000e+00> : vector<8xf32>
    %166 = vector.multi_reduction <add>, %165, %cst_51 [1] : vector<8x128xf32> to vector<8xf32>
    %167 = vector.shape_cast %166 : vector<8xf32> to vector<8x1xf32>
    %cst_52 = arith.constant 1.250000e-01 : f32
    %168 = vector.broadcast %cst_52 : f32 to vector<8x1xf32>
    %169 = arith.mulf %167, %168 : vector<8x1xf32>
    %170 = vector.broadcast %169 : vector<8x1xf32> to vector<8x128xf32>
    %171 = arith.subf %163, %170 : vector<8x128xf32>
    %172 = vector.broadcast %0 : vector<1x128xf32> to vector<8x128xf32>
    %173 = arith.mulf %171, %172 : vector<8x128xf32>
    %174 = arith.mulf %173, %173 : vector<8x128xf32>
    %cst_53 = arith.constant dense<0.000000e+00> : vector<8xf32>
    %175 = vector.multi_reduction <add>, %174, %cst_53 [1] : vector<8x128xf32> to vector<8xf32>
    %176 = vector.shape_cast %175 : vector<8xf32> to vector<8x1xf32>
    %cst_54 = arith.constant 1.250000e-01 : f32
    %177 = vector.broadcast %cst_54 : f32 to vector<8x1xf32>
    %178 = arith.mulf %176, %177 : vector<8x1xf32>
    %179 = vector.broadcast %169 : vector<8x1xf32> to vector<8x128xf32>
    %180 = arith.subf %163, %179 : vector<8x128xf32>
    %cst_55 = arith.constant 9.99999974E-6 : f32
    %181 = vector.broadcast %cst_55 : f32 to vector<8x1xf32>
    %182 = arith.addf %178, %181 : vector<8x1xf32>
    %183 = math.rsqrt %182 : vector<8x1xf32>
    %184 = vector.broadcast %183 : vector<8x1xf32> to vector<8x128xf32>
    %185 = arith.mulf %180, %184 : vector<8x128xf32>
    %186 = vector.broadcast %114 : vector<8x1xf32> to vector<8x128xf32>
    %187 = arith.mulf %185, %186 : vector<8x128xf32>
    %188 = vector.broadcast %115 : vector<8x1xf32> to vector<8x128xf32>
    %189 = arith.addf %187, %188 : vector<8x128xf32>
    %cst_56 = arith.constant 0.000000e+00 : f32
    %190 = vector.broadcast %cst_56 : f32 to vector<8x128xf32>
    %191 = arith.maximumf %189, %190 : vector<8x128xf32>
    %cst_57 = arith.constant dense<0.000000e+00> : vector<8x128xf32>
    %192 = tpu.matmul %116, %191, %cst_57 {dimension_numbers = #tpu.dot_dimension_numbers<[1], [0], [0], [1], [0, 0, 1, 1], [], []>} : vector<8x8xf32>, vector<8x128xf32>, vector<8x128xf32> -> vector<8x128xf32>
    %193 = vector.broadcast %0 : vector<1x128xf32> to vector<8x128xf32>
    %194 = arith.mulf %192, %193 : vector<8x128xf32>
    %cst_58 = arith.constant dense<0.000000e+00> : vector<8xf32>
    %195 = vector.multi_reduction <add>, %194, %cst_58 [1] : vector<8x128xf32> to vector<8xf32>
    %196 = vector.shape_cast %195 : vector<8xf32> to vector<8x1xf32>
    %cst_59 = arith.constant 1.250000e-01 : f32
    %197 = vector.broadcast %cst_59 : f32 to vector<8x1xf32>
    %198 = arith.mulf %196, %197 : vector<8x1xf32>
    %199 = vector.broadcast %198 : vector<8x1xf32> to vector<8x128xf32>
    %200 = arith.subf %192, %199 : vector<8x128xf32>
    %201 = vector.broadcast %0 : vector<1x128xf32> to vector<8x128xf32>
    %202 = arith.mulf %200, %201 : vector<8x128xf32>
    %203 = arith.mulf %202, %202 : vector<8x128xf32>
    %cst_60 = arith.constant dense<0.000000e+00> : vector<8xf32>
    %204 = vector.multi_reduction <add>, %203, %cst_60 [1] : vector<8x128xf32> to vector<8xf32>
    %205 = vector.shape_cast %204 : vector<8xf32> to vector<8x1xf32>
    %cst_61 = arith.constant 1.250000e-01 : f32
    %206 = vector.broadcast %cst_61 : f32 to vector<8x1xf32>
    %207 = arith.mulf %205, %206 : vector<8x1xf32>
    %208 = vector.broadcast %198 : vector<8x1xf32> to vector<8x128xf32>
    %209 = arith.subf %192, %208 : vector<8x128xf32>
    %cst_62 = arith.constant 9.99999974E-6 : f32
    %210 = vector.broadcast %cst_62 : f32 to vector<8x1xf32>
    %211 = arith.addf %207, %210 : vector<8x1xf32>
    %212 = math.rsqrt %211 : vector<8x1xf32>
    %213 = vector.broadcast %212 : vector<8x1xf32> to vector<8x128xf32>
    %214 = arith.mulf %209, %213 : vector<8x128xf32>
    %215 = vector.broadcast %117 : vector<8x1xf32> to vector<8x128xf32>
    %216 = arith.mulf %214, %215 : vector<8x128xf32>
    %217 = vector.broadcast %118 : vector<8x1xf32> to vector<8x128xf32>
    %218 = arith.addf %216, %217 : vector<8x128xf32>
    %cst_63 = arith.constant 0.000000e+00 : f32
    %219 = vector.broadcast %cst_63 : f32 to vector<8x128xf32>
    %220 = arith.maximumf %218, %219 : vector<8x128xf32>
    %221 = vector.broadcast %0 : vector<1x128xf32> to vector<8x128xf32>
    %222 = arith.mulf %220, %221 : vector<8x128xf32>
    %c0_64 = arith.constant 0 : index
    %c0_65 = arith.constant 0 : index
    %223 = vector.load %arg16[%c0_64, %c0_65] : memref<16x9xf32, #tpu.memory_space<vmem>>, vector<16x9xf32>
    %c0_66 = arith.constant 0 : index
    %c0_67 = arith.constant 0 : index
    %224 = vector.load %arg17[%c0_66, %c0_67] : memref<16x1xf32, #tpu.memory_space<vmem>>, vector<16x1xf32>
    %c0_68 = arith.constant 0 : index
    %c0_69 = arith.constant 0 : index
    %225 = vector.load %arg18[%c0_68, %c0_69] : memref<16x1xf32, #tpu.memory_space<vmem>>, vector<16x1xf32>
    %c0_70 = arith.constant 0 : index
    %c0_71 = arith.constant 0 : index
    %226 = vector.load %arg19[%c0_70, %c0_71] : memref<8x16xf32, #tpu.memory_space<vmem>>, vector<8x16xf32>
    %227 = vector.extract_strided_slice %223 {offsets = [0, 0], sizes = [8, 9], strides = [1, 1]} : vector<16x9xf32> to vector<8x9xf32>
    %228 = vector.extract_strided_slice %224 {offsets = [0, 0], sizes = [8, 1], strides = [1, 1]} : vector<16x1xf32> to vector<8x1xf32>
    %229 = vector.extract_strided_slice %225 {offsets = [0, 0], sizes = [8, 1], strides = [1, 1]} : vector<16x1xf32> to vector<8x1xf32>
    %cst_72 = arith.constant 0.000000e+00 : f32
    %230 = vector.broadcast %cst_72 : f32 to vector<8x128xf32>
    %c5_i32_73 = arith.constant 5 : i32
    %231 = tpu.dynamic_rotate %111 by %c5_i32_73 dim 1 : vector<8x128xf32>, i32 -> vector<8x128xf32>
    %232 = vector.extract_strided_slice %227 {offsets = [0, 0], sizes = [8, 1], strides = [1, 1]} : vector<8x9xf32> to vector<8x1xf32>
    %233 = vector.broadcast %232 : vector<8x1xf32> to vector<8x128xf32>
    %234 = arith.mulf %231, %233 : vector<8x128xf32>
    %235 = arith.addf %230, %234 : vector<8x128xf32>
    %c4_i32_74 = arith.constant 4 : i32
    %236 = tpu.dynamic_rotate %111 by %c4_i32_74 dim 1 : vector<8x128xf32>, i32 -> vector<8x128xf32>
    %237 = vector.extract_strided_slice %227 {offsets = [0, 1], sizes = [8, 1], strides = [1, 1]} : vector<8x9xf32> to vector<8x1xf32>
    %238 = vector.broadcast %237 : vector<8x1xf32> to vector<8x128xf32>
    %239 = arith.mulf %236, %238 : vector<8x128xf32>
    %240 = arith.addf %235, %239 : vector<8x128xf32>
    %c3_i32_75 = arith.constant 3 : i32
    %241 = tpu.dynamic_rotate %111 by %c3_i32_75 dim 1 : vector<8x128xf32>, i32 -> vector<8x128xf32>
    %242 = vector.extract_strided_slice %227 {offsets = [0, 2], sizes = [8, 1], strides = [1, 1]} : vector<8x9xf32> to vector<8x1xf32>
    %243 = vector.broadcast %242 : vector<8x1xf32> to vector<8x128xf32>
    %244 = arith.mulf %241, %243 : vector<8x128xf32>
    %245 = arith.addf %240, %244 : vector<8x128xf32>
    %c1_i32_76 = arith.constant 1 : i32
    %246 = tpu.dynamic_rotate %111 by %c1_i32_76 dim 1 : vector<8x128xf32>, i32 -> vector<8x128xf32>
    %247 = vector.extract_strided_slice %227 {offsets = [0, 3], sizes = [8, 1], strides = [1, 1]} : vector<8x9xf32> to vector<8x1xf32>
    %248 = vector.broadcast %247 : vector<8x1xf32> to vector<8x128xf32>
    %249 = arith.mulf %246, %248 : vector<8x128xf32>
    %250 = arith.addf %245, %249 : vector<8x128xf32>
    %251 = vector.extract_strided_slice %227 {offsets = [0, 4], sizes = [8, 1], strides = [1, 1]} : vector<8x9xf32> to vector<8x1xf32>
    %252 = vector.broadcast %251 : vector<8x1xf32> to vector<8x128xf32>
    %253 = arith.mulf %111, %252 : vector<8x128xf32>
    %254 = arith.addf %250, %253 : vector<8x128xf32>
    %c127_i32_77 = arith.constant 127 : i32
    %255 = tpu.dynamic_rotate %111 by %c127_i32_77 dim 1 : vector<8x128xf32>, i32 -> vector<8x128xf32>
    %256 = vector.extract_strided_slice %227 {offsets = [0, 5], sizes = [8, 1], strides = [1, 1]} : vector<8x9xf32> to vector<8x1xf32>
    %257 = vector.broadcast %256 : vector<8x1xf32> to vector<8x128xf32>
    %258 = arith.mulf %255, %257 : vector<8x128xf32>
    %259 = arith.addf %254, %258 : vector<8x128xf32>
    %c125_i32_78 = arith.constant 125 : i32
    %260 = tpu.dynamic_rotate %111 by %c125_i32_78 dim 1 : vector<8x128xf32>, i32 -> vector<8x128xf32>
    %261 = vector.extract_strided_slice %227 {offsets = [0, 6], sizes = [8, 1], strides = [1, 1]} : vector<8x9xf32> to vector<8x1xf32>
    %262 = vector.broadcast %261 : vector<8x1xf32> to vector<8x128xf32>
    %263 = arith.mulf %260, %262 : vector<8x128xf32>
    %264 = arith.addf %259, %263 : vector<8x128xf32>
    %c124_i32_79 = arith.constant 124 : i32
    %265 = tpu.dynamic_rotate %111 by %c124_i32_79 dim 1 : vector<8x128xf32>, i32 -> vector<8x128xf32>
    %266 = vector.extract_strided_slice %227 {offsets = [0, 7], sizes = [8, 1], strides = [1, 1]} : vector<8x9xf32> to vector<8x1xf32>
    %267 = vector.broadcast %266 : vector<8x1xf32> to vector<8x128xf32>
    %268 = arith.mulf %265, %267 : vector<8x128xf32>
    %269 = arith.addf %264, %268 : vector<8x128xf32>
    %c123_i32_80 = arith.constant 123 : i32
    %270 = tpu.dynamic_rotate %111 by %c123_i32_80 dim 1 : vector<8x128xf32>, i32 -> vector<8x128xf32>
    %271 = vector.extract_strided_slice %227 {offsets = [0, 8], sizes = [8, 1], strides = [1, 1]} : vector<8x9xf32> to vector<8x1xf32>
    %272 = vector.broadcast %271 : vector<8x1xf32> to vector<8x128xf32>
    %273 = arith.mulf %270, %272 : vector<8x128xf32>
    %274 = arith.addf %269, %273 : vector<8x128xf32>
    %275 = vector.broadcast %0 : vector<1x128xf32> to vector<8x128xf32>
    %276 = arith.mulf %274, %275 : vector<8x128xf32>
    %cst_81 = arith.constant dense<0.000000e+00> : vector<8xf32>
    %277 = vector.multi_reduction <add>, %276, %cst_81 [1] : vector<8x128xf32> to vector<8xf32>
    %278 = vector.shape_cast %277 : vector<8xf32> to vector<8x1xf32>
    %cst_82 = arith.constant 1.250000e-01 : f32
    %279 = vector.broadcast %cst_82 : f32 to vector<8x1xf32>
    %280 = arith.mulf %278, %279 : vector<8x1xf32>
    %281 = vector.broadcast %280 : vector<8x1xf32> to vector<8x128xf32>
    %282 = arith.subf %274, %281 : vector<8x128xf32>
    %283 = vector.broadcast %0 : vector<1x128xf32> to vector<8x128xf32>
    %284 = arith.mulf %282, %283 : vector<8x128xf32>
    %285 = arith.mulf %284, %284 : vector<8x128xf32>
    %cst_83 = arith.constant dense<0.000000e+00> : vector<8xf32>
    %286 = vector.multi_reduction <add>, %285, %cst_83 [1] : vector<8x128xf32> to vector<8xf32>
    %287 = vector.shape_cast %286 : vector<8xf32> to vector<8x1xf32>
    %cst_84 = arith.constant 1.250000e-01 : f32
    %288 = vector.broadcast %cst_84 : f32 to vector<8x1xf32>
    %289 = arith.mulf %287, %288 : vector<8x1xf32>
    %290 = vector.broadcast %280 : vector<8x1xf32> to vector<8x128xf32>
    %291 = arith.subf %274, %290 : vector<8x128xf32>
    %cst_85 = arith.constant 9.99999974E-6 : f32
    %292 = vector.broadcast %cst_85 : f32 to vector<8x1xf32>
    %293 = arith.addf %289, %292 : vector<8x1xf32>
    %294 = math.rsqrt %293 : vector<8x1xf32>
    %295 = vector.broadcast %294 : vector<8x1xf32> to vector<8x128xf32>
    %296 = arith.mulf %291, %295 : vector<8x128xf32>
    %297 = vector.broadcast %228 : vector<8x1xf32> to vector<8x128xf32>
    %298 = arith.mulf %296, %297 : vector<8x128xf32>
    %299 = vector.broadcast %229 : vector<8x1xf32> to vector<8x128xf32>
    %300 = arith.addf %298, %299 : vector<8x128xf32>
    %cst_86 = arith.constant 0.000000e+00 : f32
    %301 = vector.broadcast %cst_86 : f32 to vector<8x128xf32>
    %302 = arith.maximumf %300, %301 : vector<8x128xf32>
    %303 = vector.extract_strided_slice %223 {offsets = [8, 0], sizes = [8, 9], strides = [1, 1]} : vector<16x9xf32> to vector<8x9xf32>
    %304 = vector.extract_strided_slice %224 {offsets = [8, 0], sizes = [8, 1], strides = [1, 1]} : vector<16x1xf32> to vector<8x1xf32>
    %305 = vector.extract_strided_slice %225 {offsets = [8, 0], sizes = [8, 1], strides = [1, 1]} : vector<16x1xf32> to vector<8x1xf32>
    %cst_87 = arith.constant 0.000000e+00 : f32
    %306 = vector.broadcast %cst_87 : f32 to vector<8x128xf32>
    %c5_i32_88 = arith.constant 5 : i32
    %307 = tpu.dynamic_rotate %222 by %c5_i32_88 dim 1 : vector<8x128xf32>, i32 -> vector<8x128xf32>
    %308 = vector.extract_strided_slice %303 {offsets = [0, 0], sizes = [8, 1], strides = [1, 1]} : vector<8x9xf32> to vector<8x1xf32>
    %309 = vector.broadcast %308 : vector<8x1xf32> to vector<8x128xf32>
    %310 = arith.mulf %307, %309 : vector<8x128xf32>
    %311 = arith.addf %306, %310 : vector<8x128xf32>
    %c4_i32_89 = arith.constant 4 : i32
    %312 = tpu.dynamic_rotate %222 by %c4_i32_89 dim 1 : vector<8x128xf32>, i32 -> vector<8x128xf32>
    %313 = vector.extract_strided_slice %303 {offsets = [0, 1], sizes = [8, 1], strides = [1, 1]} : vector<8x9xf32> to vector<8x1xf32>
    %314 = vector.broadcast %313 : vector<8x1xf32> to vector<8x128xf32>
    %315 = arith.mulf %312, %314 : vector<8x128xf32>
    %316 = arith.addf %311, %315 : vector<8x128xf32>
    %c3_i32_90 = arith.constant 3 : i32
    %317 = tpu.dynamic_rotate %222 by %c3_i32_90 dim 1 : vector<8x128xf32>, i32 -> vector<8x128xf32>
    %318 = vector.extract_strided_slice %303 {offsets = [0, 2], sizes = [8, 1], strides = [1, 1]} : vector<8x9xf32> to vector<8x1xf32>
    %319 = vector.broadcast %318 : vector<8x1xf32> to vector<8x128xf32>
    %320 = arith.mulf %317, %319 : vector<8x128xf32>
    %321 = arith.addf %316, %320 : vector<8x128xf32>
    %c1_i32_91 = arith.constant 1 : i32
    %322 = tpu.dynamic_rotate %222 by %c1_i32_91 dim 1 : vector<8x128xf32>, i32 -> vector<8x128xf32>
    %323 = vector.extract_strided_slice %303 {offsets = [0, 3], sizes = [8, 1], strides = [1, 1]} : vector<8x9xf32> to vector<8x1xf32>
    %324 = vector.broadcast %323 : vector<8x1xf32> to vector<8x128xf32>
    %325 = arith.mulf %322, %324 : vector<8x128xf32>
    %326 = arith.addf %321, %325 : vector<8x128xf32>
    %327 = vector.extract_strided_slice %303 {offsets = [0, 4], sizes = [8, 1], strides = [1, 1]} : vector<8x9xf32> to vector<8x1xf32>
    %328 = vector.broadcast %327 : vector<8x1xf32> to vector<8x128xf32>
    %329 = arith.mulf %222, %328 : vector<8x128xf32>
    %330 = arith.addf %326, %329 : vector<8x128xf32>
    %c127_i32_92 = arith.constant 127 : i32
    %331 = tpu.dynamic_rotate %222 by %c127_i32_92 dim 1 : vector<8x128xf32>, i32 -> vector<8x128xf32>
    %332 = vector.extract_strided_slice %303 {offsets = [0, 5], sizes = [8, 1], strides = [1, 1]} : vector<8x9xf32> to vector<8x1xf32>
    %333 = vector.broadcast %332 : vector<8x1xf32> to vector<8x128xf32>
    %334 = arith.mulf %331, %333 : vector<8x128xf32>
    %335 = arith.addf %330, %334 : vector<8x128xf32>
    %c125_i32_93 = arith.constant 125 : i32
    %336 = tpu.dynamic_rotate %222 by %c125_i32_93 dim 1 : vector<8x128xf32>, i32 -> vector<8x128xf32>
    %337 = vector.extract_strided_slice %303 {offsets = [0, 6], sizes = [8, 1], strides = [1, 1]} : vector<8x9xf32> to vector<8x1xf32>
    %338 = vector.broadcast %337 : vector<8x1xf32> to vector<8x128xf32>
    %339 = arith.mulf %336, %338 : vector<8x128xf32>
    %340 = arith.addf %335, %339 : vector<8x128xf32>
    %c124_i32_94 = arith.constant 124 : i32
    %341 = tpu.dynamic_rotate %222 by %c124_i32_94 dim 1 : vector<8x128xf32>, i32 -> vector<8x128xf32>
    %342 = vector.extract_strided_slice %303 {offsets = [0, 7], sizes = [8, 1], strides = [1, 1]} : vector<8x9xf32> to vector<8x1xf32>
    %343 = vector.broadcast %342 : vector<8x1xf32> to vector<8x128xf32>
    %344 = arith.mulf %341, %343 : vector<8x128xf32>
    %345 = arith.addf %340, %344 : vector<8x128xf32>
    %c123_i32_95 = arith.constant 123 : i32
    %346 = tpu.dynamic_rotate %222 by %c123_i32_95 dim 1 : vector<8x128xf32>, i32 -> vector<8x128xf32>
    %347 = vector.extract_strided_slice %303 {offsets = [0, 8], sizes = [8, 1], strides = [1, 1]} : vector<8x9xf32> to vector<8x1xf32>
    %348 = vector.broadcast %347 : vector<8x1xf32> to vector<8x128xf32>
    %349 = arith.mulf %346, %348 : vector<8x128xf32>
    %350 = arith.addf %345, %349 : vector<8x128xf32>
    %351 = vector.broadcast %0 : vector<1x128xf32> to vector<8x128xf32>
    %352 = arith.mulf %350, %351 : vector<8x128xf32>
    %cst_96 = arith.constant dense<0.000000e+00> : vector<8xf32>
    %353 = vector.multi_reduction <add>, %352, %cst_96 [1] : vector<8x128xf32> to vector<8xf32>
    %354 = vector.shape_cast %353 : vector<8xf32> to vector<8x1xf32>
    %cst_97 = arith.constant 1.250000e-01 : f32
    %355 = vector.broadcast %cst_97 : f32 to vector<8x1xf32>
    %356 = arith.mulf %354, %355 : vector<8x1xf32>
    %357 = vector.broadcast %356 : vector<8x1xf32> to vector<8x128xf32>
    %358 = arith.subf %350, %357 : vector<8x128xf32>
    %359 = vector.broadcast %0 : vector<1x128xf32> to vector<8x128xf32>
    %360 = arith.mulf %358, %359 : vector<8x128xf32>
    %361 = arith.mulf %360, %360 : vector<8x128xf32>
    %cst_98 = arith.constant dense<0.000000e+00> : vector<8xf32>
    %362 = vector.multi_reduction <add>, %361, %cst_98 [1] : vector<8x128xf32> to vector<8xf32>
    %363 = vector.shape_cast %362 : vector<8xf32> to vector<8x1xf32>
    %cst_99 = arith.constant 1.250000e-01 : f32
    %364 = vector.broadcast %cst_99 : f32 to vector<8x1xf32>
    %365 = arith.mulf %363, %364 : vector<8x1xf32>
    %366 = vector.broadcast %356 : vector<8x1xf32> to vector<8x128xf32>
    %367 = arith.subf %350, %366 : vector<8x128xf32>
    %cst_100 = arith.constant 9.99999974E-6 : f32
    %368 = vector.broadcast %cst_100 : f32 to vector<8x1xf32>
    %369 = arith.addf %365, %368 : vector<8x1xf32>
    %370 = math.rsqrt %369 : vector<8x1xf32>
    %371 = vector.broadcast %370 : vector<8x1xf32> to vector<8x128xf32>
    %372 = arith.mulf %367, %371 : vector<8x128xf32>
    %373 = vector.broadcast %304 : vector<8x1xf32> to vector<8x128xf32>
    %374 = arith.mulf %372, %373 : vector<8x128xf32>
    %375 = vector.broadcast %305 : vector<8x1xf32> to vector<8x128xf32>
    %376 = arith.addf %374, %375 : vector<8x128xf32>
    %cst_101 = arith.constant 0.000000e+00 : f32
    %377 = vector.broadcast %cst_101 : f32 to vector<8x128xf32>
    %378 = arith.maximumf %376, %377 : vector<8x128xf32>
    %379 = vector.extract_strided_slice %226 {offsets = [0, 0], sizes = [8, 8], strides = [1, 1]} : vector<8x16xf32> to vector<8x8xf32>
    %cst_102 = arith.constant dense<0.000000e+00> : vector<8x128xf32>
    %380 = tpu.matmul %379, %302, %cst_102 {dimension_numbers = #tpu.dot_dimension_numbers<[1], [0], [0], [1], [0, 0, 1, 1], [], []>} : vector<8x8xf32>, vector<8x128xf32>, vector<8x128xf32> -> vector<8x128xf32>
    %381 = vector.extract_strided_slice %226 {offsets = [0, 8], sizes = [8, 8], strides = [1, 1]} : vector<8x16xf32> to vector<8x8xf32>
    %cst_103 = arith.constant dense<0.000000e+00> : vector<8x128xf32>
    %382 = tpu.matmul %381, %378, %cst_103 {dimension_numbers = #tpu.dot_dimension_numbers<[1], [0], [0], [1], [0, 0, 1, 1], [], []>} : vector<8x8xf32>, vector<8x128xf32>, vector<8x128xf32> -> vector<8x128xf32>
    %383 = arith.addf %380, %382 : vector<8x128xf32>
    %c0_104 = arith.constant 0 : index
    %c0_105 = arith.constant 0 : index
    %384 = vector.load %arg20[%c0_104, %c0_105] : memref<8x1xf32, #tpu.memory_space<vmem>>, vector<8x1xf32>
    %c0_106 = arith.constant 0 : index
    %c0_107 = arith.constant 0 : index
    %385 = vector.load %arg21[%c0_106, %c0_107] : memref<8x1xf32, #tpu.memory_space<vmem>>, vector<8x1xf32>
    %386 = vector.broadcast %0 : vector<1x128xf32> to vector<8x128xf32>
    %387 = arith.mulf %383, %386 : vector<8x128xf32>
    %cst_108 = arith.constant dense<0.000000e+00> : vector<8xf32>
    %388 = vector.multi_reduction <add>, %387, %cst_108 [1] : vector<8x128xf32> to vector<8xf32>
    %389 = vector.shape_cast %388 : vector<8xf32> to vector<8x1xf32>
    %cst_109 = arith.constant 1.250000e-01 : f32
    %390 = vector.broadcast %cst_109 : f32 to vector<8x1xf32>
    %391 = arith.mulf %389, %390 : vector<8x1xf32>
    %392 = vector.broadcast %391 : vector<8x1xf32> to vector<8x128xf32>
    %393 = arith.subf %383, %392 : vector<8x128xf32>
    %394 = vector.broadcast %0 : vector<1x128xf32> to vector<8x128xf32>
    %395 = arith.mulf %393, %394 : vector<8x128xf32>
    %396 = arith.mulf %395, %395 : vector<8x128xf32>
    %cst_110 = arith.constant dense<0.000000e+00> : vector<8xf32>
    %397 = vector.multi_reduction <add>, %396, %cst_110 [1] : vector<8x128xf32> to vector<8xf32>
    %398 = vector.shape_cast %397 : vector<8xf32> to vector<8x1xf32>
    %cst_111 = arith.constant 1.250000e-01 : f32
    %399 = vector.broadcast %cst_111 : f32 to vector<8x1xf32>
    %400 = arith.mulf %398, %399 : vector<8x1xf32>
    %401 = vector.broadcast %391 : vector<8x1xf32> to vector<8x128xf32>
    %402 = arith.subf %383, %401 : vector<8x128xf32>
    %cst_112 = arith.constant 9.99999974E-6 : f32
    %403 = vector.broadcast %cst_112 : f32 to vector<8x1xf32>
    %404 = arith.addf %400, %403 : vector<8x1xf32>
    %405 = math.rsqrt %404 : vector<8x1xf32>
    %406 = vector.broadcast %405 : vector<8x1xf32> to vector<8x128xf32>
    %407 = arith.mulf %402, %406 : vector<8x128xf32>
    %408 = vector.broadcast %384 : vector<8x1xf32> to vector<8x128xf32>
    %409 = arith.mulf %407, %408 : vector<8x128xf32>
    %410 = vector.broadcast %385 : vector<8x1xf32> to vector<8x128xf32>
    %411 = arith.addf %409, %410 : vector<8x128xf32>
    %cst_113 = arith.constant 0.000000e+00 : f32
    %412 = vector.broadcast %cst_113 : f32 to vector<8x128xf32>
    %413 = arith.maximumf %411, %412 : vector<8x128xf32>
    %c0_114 = arith.constant 0 : index
    %c0_115 = arith.constant 0 : index
    %414 = vector.load %arg22[%c0_114, %c0_115] : memref<8x128xf32, #tpu.memory_space<vmem>>, vector<8x128xf32>
    tpu.vector_store %arg22[%c0_114, %c0_115], %413 {strides = array<i32>} : memref<8x128xf32, #tpu.memory_space<vmem>>, vector<8x128xf32>,
    return
  }
  func.func @transform_0(%arg0: i32) -> (i32, i32) {
    %c0_i32 = arith.constant 0 : i32
    %c0_i32_0 = arith.constant 0 : i32
    %c0_i32_1 = arith.constant 0 : i32
    return %c0_i32, %c0_i32_0 : i32, i32
  }
  func.func @transform_1(%arg0: i32) -> (i32, i32) {
    %c0_i32 = arith.constant 0 : i32
    %c0_i32_0 = arith.constant 0 : i32
    %c0_i32_1 = arith.constant 0 : i32
    return %c0_i32, %c0_i32_0 : i32, i32
  }
  func.func @transform_2(%arg0: i32) -> (i32, i32) {
    %c0_i32 = arith.constant 0 : i32
    %c0_i32_0 = arith.constant 0 : i32
    %c0_i32_1 = arith.constant 0 : i32
    return %c0_i32, %c0_i32_0 : i32, i32
  }
  func.func @transform_3(%arg0: i32) -> (i32, i32) {
    %c0_i32 = arith.constant 0 : i32
    %c0_i32_0 = arith.constant 0 : i32
    %c0_i32_1 = arith.constant 0 : i32
    return %c0_i32, %c0_i32_0 : i32, i32
  }
  func.func @transform_4(%arg0: i32) -> (i32, i32) {
    %c0_i32 = arith.constant 0 : i32
    %c0_i32_0 = arith.constant 0 : i32
    %c0_i32_1 = arith.constant 0 : i32
    return %c0_i32, %c0_i32_0 : i32, i32
  }
  func.func @transform_5(%arg0: i32) -> (i32, i32) {
    %c0_i32 = arith.constant 0 : i32
    %c0_i32_0 = arith.constant 0 : i32
    %c0_i32_1 = arith.constant 0 : i32
    return %c0_i32, %c0_i32_0 : i32, i32
  }
  func.func @transform_6(%arg0: i32) -> (i32, i32) {
    %c0_i32 = arith.constant 0 : i32
    %c0_i32_0 = arith.constant 0 : i32
    %c0_i32_1 = arith.constant 0 : i32
    return %c0_i32, %c0_i32_0 : i32, i32
  }
  func.func @transform_7(%arg0: i32) -> (i32, i32) {
    %c0_i32 = arith.constant 0 : i32
    %c0_i32_0 = arith.constant 0 : i32
    %c0_i32_1 = arith.constant 0 : i32
    return %c0_i32, %c0_i32_0 : i32, i32
  }
  func.func @transform_8(%arg0: i32) -> (i32, i32) {
    %c0_i32 = arith.constant 0 : i32
    %c0_i32_0 = arith.constant 0 : i32
    %c0_i32_1 = arith.constant 0 : i32
    return %c0_i32, %c0_i32_0 : i32, i32
  }
  func.func @transform_9(%arg0: i32) -> (i32, i32) {
    %c0_i32 = arith.constant 0 : i32
    %c0_i32_0 = arith.constant 0 : i32
    %c0_i32_1 = arith.constant 0 : i32
    return %c0_i32, %c0_i32_0 : i32, i32
  }
  func.func @transform_10(%arg0: i32) -> (i32, i32) {
    %c0_i32 = arith.constant 0 : i32
    %c0_i32_0 = arith.constant 0 : i32
    %c0_i32_1 = arith.constant 0 : i32
    return %c0_i32, %c0_i32_0 : i32, i32
  }
  func.func @transform_11(%arg0: i32) -> (i32, i32) {
    %c0_i32 = arith.constant 0 : i32
    %c0_i32_0 = arith.constant 0 : i32
    %c0_i32_1 = arith.constant 0 : i32
    return %c0_i32, %c0_i32_0 : i32, i32
  }
  func.func @transform_12(%arg0: i32) -> (i32, i32) {
    %c0_i32 = arith.constant 0 : i32
    %c0_i32_0 = arith.constant 0 : i32
    %c0_i32_1 = arith.constant 0 : i32
    return %c0_i32, %c0_i32_0 : i32, i32
  }
  func.func @transform_13(%arg0: i32) -> (i32, i32) {
    %c0_i32 = arith.constant 0 : i32
    %c0_i32_0 = arith.constant 0 : i32
    %c0_i32_1 = arith.constant 0 : i32
    return %c0_i32, %c0_i32_0 : i32, i32
  }
  func.func @transform_14(%arg0: i32) -> (i32, i32) {
    %c0_i32 = arith.constant 0 : i32
    %c0_i32_0 = arith.constant 0 : i32
    %c0_i32_1 = arith.constant 0 : i32
    return %c0_i32, %c0_i32_0 : i32, i32
  }
  func.func @transform_15(%arg0: i32) -> (i32, i32) {
    %c0_i32 = arith.constant 0 : i32
    %c0_i32_0 = arith.constant 0 : i32
    %c0_i32_1 = arith.constant 0 : i32
    return %c0_i32, %c0_i32_0 : i32, i32
  }
  func.func @transform_16(%arg0: i32) -> (i32, i32) {
    %c0_i32 = arith.constant 0 : i32
    %c0_i32_0 = arith.constant 0 : i32
    %c0_i32_1 = arith.constant 0 : i32
    return %c0_i32, %c0_i32_0 : i32, i32
  }
  func.func @transform_17(%arg0: i32) -> (i32, i32) {
    %c0_i32 = arith.constant 0 : i32
    %c0_i32_0 = arith.constant 0 : i32
    %c0_i32_1 = arith.constant 0 : i32
    return %c0_i32, %c0_i32_0 : i32, i32
  }
  func.func @transform_18(%arg0: i32) -> (i32, i32) {
    %c0_i32 = arith.constant 0 : i32
    %c0_i32_0 = arith.constant 0 : i32
    %c0_i32_1 = arith.constant 0 : i32
    return %c0_i32, %c0_i32_0 : i32, i32
  }
  func.func @transform_19(%arg0: i32) -> (i32, i32) {
    %c0_i32 = arith.constant 0 : i32
    %c0_i32_0 = arith.constant 0 : i32
    %c0_i32_1 = arith.constant 0 : i32
    return %c0_i32, %c0_i32_0 : i32, i32
  }
  func.func @transform_20(%arg0: i32) -> (i32, i32) {
    %c0_i32 = arith.constant 0 : i32
    %c0_i32_0 = arith.constant 0 : i32
    %c0_i32_1 = arith.constant 0 : i32
    return %c0_i32, %c0_i32_0 : i32, i32
  }
  func.func @transform_21(%arg0: i32) -> (i32, i32) {
    %c0_i32 = arith.constant 0 : i32
    %c0_i32_0 = arith.constant 0 : i32
    %c0_i32_1 = arith.constant 0 : i32
    return %c0_i32, %c0_i32_0 : i32, i32
  }
}

module attributes {stable_mosaic.version = 11 : i64} {
  func.func @kernel(%arg0: i32, %arg1: memref<8x768xf32, #tpu.memory_space<vmem>>, %arg2: memref<8x768xf32, #tpu.memory_space<vmem>>, %arg3: memref<8x768xf32, #tpu.memory_space<vmem>>, %arg4: memref<8x768xf32, #tpu.memory_space<vmem>>, %arg5: memref<1x768xf32, #tpu.memory_space<vmem>>, %arg6: memref<8x9xf32, #tpu.memory_space<vmem>>, %arg7: memref<8x1xf32, #tpu.memory_space<vmem>>, %arg8: memref<8x1xf32, #tpu.memory_space<vmem>>, %arg9: memref<8x8xf32, #tpu.memory_space<vmem>>, %arg10: memref<8x1xf32, #tpu.memory_space<vmem>>, %arg11: memref<8x1xf32, #tpu.memory_space<vmem>>, %arg12: memref<8x9xf32, #tpu.memory_space<vmem>>, %arg13: memref<8x1xf32, #tpu.memory_space<vmem>>, %arg14: memref<8x1xf32, #tpu.memory_space<vmem>>, %arg15: memref<8x8xf32, #tpu.memory_space<vmem>>, %arg16: memref<8x1xf32, #tpu.memory_space<vmem>>, %arg17: memref<8x1xf32, #tpu.memory_space<vmem>>, %arg18: memref<8x9xf32, #tpu.memory_space<vmem>>, %arg19: memref<8x1xf32, #tpu.memory_space<vmem>>, %arg20: memref<8x1xf32, #tpu.memory_space<vmem>>, %arg21: memref<8x8xf32, #tpu.memory_space<vmem>>, %arg22: memref<8x1xf32, #tpu.memory_space<vmem>>, %arg23: memref<8x1xf32, #tpu.memory_space<vmem>>, %arg24: memref<8x768xf32, #tpu.memory_space<vmem>>) attributes {dimension_semantics = [#tpu.dimension_semantics<arbitrary>], iteration_bounds = array<i64: 1>, scalar_prefetch = 0 : i64, scratch_operands = 0 : i64, tpu.core_type = #tpu.core_type<tc>, window_params = [{pipeline_mode = #tpu.pipeline_mode<synchronous>, transform_indices = @transform_0, window_bounds = array<i64: 8, 768>}, {pipeline_mode = #tpu.pipeline_mode<synchronous>, transform_indices = @transform_1, window_bounds = array<i64: 8, 768>}, {pipeline_mode = #tpu.pipeline_mode<synchronous>, transform_indices = @transform_2, window_bounds = array<i64: 8, 768>}, {pipeline_mode = #tpu.pipeline_mode<synchronous>, transform_indices = @transform_3, window_bounds = array<i64: 8, 768>}, {pipeline_mode = #tpu.pipeline_mode<synchronous>, transform_indices = @transform_4, window_bounds = array<i64: 1, 768>}, {pipeline_mode = #tpu.pipeline_mode<synchronous>, transform_indices = @transform_5, window_bounds = array<i64: 8, 9>}, {pipeline_mode = #tpu.pipeline_mode<synchronous>, transform_indices = @transform_6, window_bounds = array<i64: 8, 1>}, {pipeline_mode = #tpu.pipeline_mode<synchronous>, transform_indices = @transform_7, window_bounds = array<i64: 8, 1>}, {pipeline_mode = #tpu.pipeline_mode<synchronous>, transform_indices = @transform_8, window_bounds = array<i64: 8, 8>}, {pipeline_mode = #tpu.pipeline_mode<synchronous>, transform_indices = @transform_9, window_bounds = array<i64: 8, 1>}, {pipeline_mode = #tpu.pipeline_mode<synchronous>, transform_indices = @transform_10, window_bounds = array<i64: 8, 1>}, {pipeline_mode = #tpu.pipeline_mode<synchronous>, transform_indices = @transform_11, window_bounds = array<i64: 8, 9>}, {pipeline_mode = #tpu.pipeline_mode<synchronous>, transform_indices = @transform_12, window_bounds = array<i64: 8, 1>}, {pipeline_mode = #tpu.pipeline_mode<synchronous>, transform_indices = @transform_13, window_bounds = array<i64: 8, 1>}, {pipeline_mode = #tpu.pipeline_mode<synchronous>, transform_indices = @transform_14, window_bounds = array<i64: 8, 8>}, {pipeline_mode = #tpu.pipeline_mode<synchronous>, transform_indices = @transform_15, window_bounds = array<i64: 8, 1>}, {pipeline_mode = #tpu.pipeline_mode<synchronous>, transform_indices = @transform_16, window_bounds = array<i64: 8, 1>}, {pipeline_mode = #tpu.pipeline_mode<synchronous>, transform_indices = @transform_17, window_bounds = array<i64: 8, 9>}, {pipeline_mode = #tpu.pipeline_mode<synchronous>, transform_indices = @transform_18, window_bounds = array<i64: 8, 1>}, {pipeline_mode = #tpu.pipeline_mode<synchronous>, transform_indices = @transform_19, window_bounds = array<i64: 8, 1>}, {pipeline_mode = #tpu.pipeline_mode<synchronous>, transform_indices = @transform_20, window_bounds = array<i64: 8, 8>}, {pipeline_mode = #tpu.pipeline_mode<synchronous>, transform_indices = @transform_21, window_bounds = array<i64: 8, 1>}, {pipeline_mode = #tpu.pipeline_mode<synchronous>, transform_indices = @transform_22, window_bounds = array<i64: 8, 1>}, {pipeline_mode = #tpu.pipeline_mode<synchronous>, transform_indices = @transform_23, window_bounds = array<i64: 8, 768>}]} {
    %c0 = arith.constant 0 : index
    %c0_0 = arith.constant 0 : index
    %0 = vector.load %arg5[%c0, %c0_0] : memref<1x768xf32, #tpu.memory_space<vmem>>, vector<1x768xf32>
    %c0_1 = arith.constant 0 : index
    %c0_2 = arith.constant 0 : index
    %1 = vector.load %arg1[%c0_1, %c0_2] : memref<8x768xf32, #tpu.memory_space<vmem>>, vector<8x768xf32>
    %c0_3 = arith.constant 0 : index
    %c0_4 = arith.constant 0 : index
    %2 = vector.load %arg6[%c0_3, %c0_4] : memref<8x9xf32, #tpu.memory_space<vmem>>, vector<8x9xf32>
    %c0_5 = arith.constant 0 : index
    %c0_6 = arith.constant 0 : index
    %3 = vector.load %arg7[%c0_5, %c0_6] : memref<8x1xf32, #tpu.memory_space<vmem>>, vector<8x1xf32>
    %c0_7 = arith.constant 0 : index
    %c0_8 = arith.constant 0 : index
    %4 = vector.load %arg8[%c0_7, %c0_8] : memref<8x1xf32, #tpu.memory_space<vmem>>, vector<8x1xf32>
    %c0_9 = arith.constant 0 : index
    %c0_10 = arith.constant 0 : index
    %5 = vector.load %arg9[%c0_9, %c0_10] : memref<8x8xf32, #tpu.memory_space<vmem>>, vector<8x8xf32>
    %c0_11 = arith.constant 0 : index
    %c0_12 = arith.constant 0 : index
    %6 = vector.load %arg10[%c0_11, %c0_12] : memref<8x1xf32, #tpu.memory_space<vmem>>, vector<8x1xf32>
    %c0_13 = arith.constant 0 : index
    %c0_14 = arith.constant 0 : index
    %7 = vector.load %arg11[%c0_13, %c0_14] : memref<8x1xf32, #tpu.memory_space<vmem>>, vector<8x1xf32>
    %cst = arith.constant 0.000000e+00 : f32
    %8 = vector.broadcast %cst : f32 to vector<8x768xf32>
    %c19_i32 = arith.constant 19 : i32
    %9 = tpu.dynamic_rotate %1 by %c19_i32 dim 1 : vector<8x768xf32>, i32 -> vector<8x768xf32>
    %10 = vector.extract_strided_slice %2 {offsets = [0, 0], sizes = [8, 1], strides = [1, 1]} : vector<8x9xf32> to vector<8x1xf32>
    %11 = vector.broadcast %10 : vector<8x1xf32> to vector<8x768xf32>
    %12 = arith.mulf %9, %11 : vector<8x768xf32>
    %13 = arith.addf %8, %12 : vector<8x768xf32>
    %c18_i32 = arith.constant 18 : i32
    %14 = tpu.dynamic_rotate %1 by %c18_i32 dim 1 : vector<8x768xf32>, i32 -> vector<8x768xf32>
    %15 = vector.extract_strided_slice %2 {offsets = [0, 1], sizes = [8, 1], strides = [1, 1]} : vector<8x9xf32> to vector<8x1xf32>
    %16 = vector.broadcast %15 : vector<8x1xf32> to vector<8x768xf32>
    %17 = arith.mulf %14, %16 : vector<8x768xf32>
    %18 = arith.addf %13, %17 : vector<8x768xf32>
    %c17_i32 = arith.constant 17 : i32
    %19 = tpu.dynamic_rotate %1 by %c17_i32 dim 1 : vector<8x768xf32>, i32 -> vector<8x768xf32>
    %20 = vector.extract_strided_slice %2 {offsets = [0, 2], sizes = [8, 1], strides = [1, 1]} : vector<8x9xf32> to vector<8x1xf32>
    %21 = vector.broadcast %20 : vector<8x1xf32> to vector<8x768xf32>
    %22 = arith.mulf %19, %21 : vector<8x768xf32>
    %23 = arith.addf %18, %22 : vector<8x768xf32>
    %c1_i32 = arith.constant 1 : i32
    %24 = tpu.dynamic_rotate %1 by %c1_i32 dim 1 : vector<8x768xf32>, i32 -> vector<8x768xf32>
    %25 = vector.extract_strided_slice %2 {offsets = [0, 3], sizes = [8, 1], strides = [1, 1]} : vector<8x9xf32> to vector<8x1xf32>
    %26 = vector.broadcast %25 : vector<8x1xf32> to vector<8x768xf32>
    %27 = arith.mulf %24, %26 : vector<8x768xf32>
    %28 = arith.addf %23, %27 : vector<8x768xf32>
    %29 = vector.extract_strided_slice %2 {offsets = [0, 4], sizes = [8, 1], strides = [1, 1]} : vector<8x9xf32> to vector<8x1xf32>
    %30 = vector.broadcast %29 : vector<8x1xf32> to vector<8x768xf32>
    %31 = arith.mulf %1, %30 : vector<8x768xf32>
    %32 = arith.addf %28, %31 : vector<8x768xf32>
    %c767_i32 = arith.constant 767 : i32
    %33 = tpu.dynamic_rotate %1 by %c767_i32 dim 1 : vector<8x768xf32>, i32 -> vector<8x768xf32>
    %34 = vector.extract_strided_slice %2 {offsets = [0, 5], sizes = [8, 1], strides = [1, 1]} : vector<8x9xf32> to vector<8x1xf32>
    %35 = vector.broadcast %34 : vector<8x1xf32> to vector<8x768xf32>
    %36 = arith.mulf %33, %35 : vector<8x768xf32>
    %37 = arith.addf %32, %36 : vector<8x768xf32>
    %c751_i32 = arith.constant 751 : i32
    %38 = tpu.dynamic_rotate %1 by %c751_i32 dim 1 : vector<8x768xf32>, i32 -> vector<8x768xf32>
    %39 = vector.extract_strided_slice %2 {offsets = [0, 6], sizes = [8, 1], strides = [1, 1]} : vector<8x9xf32> to vector<8x1xf32>
    %40 = vector.broadcast %39 : vector<8x1xf32> to vector<8x768xf32>
    %41 = arith.mulf %38, %40 : vector<8x768xf32>
    %42 = arith.addf %37, %41 : vector<8x768xf32>
    %c750_i32 = arith.constant 750 : i32
    %43 = tpu.dynamic_rotate %1 by %c750_i32 dim 1 : vector<8x768xf32>, i32 -> vector<8x768xf32>
    %44 = vector.extract_strided_slice %2 {offsets = [0, 7], sizes = [8, 1], strides = [1, 1]} : vector<8x9xf32> to vector<8x1xf32>
    %45 = vector.broadcast %44 : vector<8x1xf32> to vector<8x768xf32>
    %46 = arith.mulf %43, %45 : vector<8x768xf32>
    %47 = arith.addf %42, %46 : vector<8x768xf32>
    %c749_i32 = arith.constant 749 : i32
    %48 = tpu.dynamic_rotate %1 by %c749_i32 dim 1 : vector<8x768xf32>, i32 -> vector<8x768xf32>
    %49 = vector.extract_strided_slice %2 {offsets = [0, 8], sizes = [8, 1], strides = [1, 1]} : vector<8x9xf32> to vector<8x1xf32>
    %50 = vector.broadcast %49 : vector<8x1xf32> to vector<8x768xf32>
    %51 = arith.mulf %48, %50 : vector<8x768xf32>
    %52 = arith.addf %47, %51 : vector<8x768xf32>
    %53 = vector.broadcast %0 : vector<1x768xf32> to vector<8x768xf32>
    %54 = arith.mulf %52, %53 : vector<8x768xf32>
    %cst_15 = arith.constant dense<0.000000e+00> : vector<8xf32>
    %55 = vector.multi_reduction <add>, %54, %cst_15 [1] : vector<8x768xf32> to vector<8xf32>
    %56 = vector.shape_cast %55 : vector<8xf32> to vector<8x1xf32>
    %cst_16 = arith.constant 0.001953125 : f32
    %57 = vector.broadcast %cst_16 : f32 to vector<8x1xf32>
    %58 = arith.mulf %56, %57 : vector<8x1xf32>
    %59 = vector.broadcast %58 : vector<8x1xf32> to vector<8x768xf32>
    %60 = arith.subf %52, %59 : vector<8x768xf32>
    %61 = vector.broadcast %0 : vector<1x768xf32> to vector<8x768xf32>
    %62 = arith.mulf %60, %61 : vector<8x768xf32>
    %63 = arith.mulf %62, %62 : vector<8x768xf32>
    %cst_17 = arith.constant dense<0.000000e+00> : vector<8xf32>
    %64 = vector.multi_reduction <add>, %63, %cst_17 [1] : vector<8x768xf32> to vector<8xf32>
    %65 = vector.shape_cast %64 : vector<8xf32> to vector<8x1xf32>
    %cst_18 = arith.constant 0.001953125 : f32
    %66 = vector.broadcast %cst_18 : f32 to vector<8x1xf32>
    %67 = arith.mulf %65, %66 : vector<8x1xf32>
    %68 = vector.broadcast %58 : vector<8x1xf32> to vector<8x768xf32>
    %69 = arith.subf %52, %68 : vector<8x768xf32>
    %cst_19 = arith.constant 9.99999974E-6 : f32
    %70 = vector.broadcast %cst_19 : f32 to vector<8x1xf32>
    %71 = arith.addf %67, %70 : vector<8x1xf32>
    %72 = math.rsqrt %71 : vector<8x1xf32>
    %73 = vector.broadcast %72 : vector<8x1xf32> to vector<8x768xf32>
    %74 = arith.mulf %69, %73 : vector<8x768xf32>
    %75 = vector.broadcast %3 : vector<8x1xf32> to vector<8x768xf32>
    %76 = arith.mulf %74, %75 : vector<8x768xf32>
    %77 = vector.broadcast %4 : vector<8x1xf32> to vector<8x768xf32>
    %78 = arith.addf %76, %77 : vector<8x768xf32>
    %cst_20 = arith.constant 0.000000e+00 : f32
    %79 = vector.broadcast %cst_20 : f32 to vector<8x768xf32>
    %80 = arith.maximumf %78, %79 : vector<8x768xf32>
    %cst_21 = arith.constant dense<0.000000e+00> : vector<8x768xf32>
    %81 = tpu.matmul %5, %80, %cst_21 {dimension_numbers = #tpu.dot_dimension_numbers<[1], [0], [0], [1], [0, 0, 1, 1], [], []>} : vector<8x8xf32>, vector<8x768xf32>, vector<8x768xf32> -> vector<8x768xf32>
    %82 = vector.broadcast %0 : vector<1x768xf32> to vector<8x768xf32>
    %83 = arith.mulf %81, %82 : vector<8x768xf32>
    %cst_22 = arith.constant dense<0.000000e+00> : vector<8xf32>
    %84 = vector.multi_reduction <add>, %83, %cst_22 [1] : vector<8x768xf32> to vector<8xf32>
    %85 = vector.shape_cast %84 : vector<8xf32> to vector<8x1xf32>
    %cst_23 = arith.constant 0.001953125 : f32
    %86 = vector.broadcast %cst_23 : f32 to vector<8x1xf32>
    %87 = arith.mulf %85, %86 : vector<8x1xf32>
    %88 = vector.broadcast %87 : vector<8x1xf32> to vector<8x768xf32>
    %89 = arith.subf %81, %88 : vector<8x768xf32>
    %90 = vector.broadcast %0 : vector<1x768xf32> to vector<8x768xf32>
    %91 = arith.mulf %89, %90 : vector<8x768xf32>
    %92 = arith.mulf %91, %91 : vector<8x768xf32>
    %cst_24 = arith.constant dense<0.000000e+00> : vector<8xf32>
    %93 = vector.multi_reduction <add>, %92, %cst_24 [1] : vector<8x768xf32> to vector<8xf32>
    %94 = vector.shape_cast %93 : vector<8xf32> to vector<8x1xf32>
    %cst_25 = arith.constant 0.001953125 : f32
    %95 = vector.broadcast %cst_25 : f32 to vector<8x1xf32>
    %96 = arith.mulf %94, %95 : vector<8x1xf32>
    %97 = vector.broadcast %87 : vector<8x1xf32> to vector<8x768xf32>
    %98 = arith.subf %81, %97 : vector<8x768xf32>
    %cst_26 = arith.constant 9.99999974E-6 : f32
    %99 = vector.broadcast %cst_26 : f32 to vector<8x1xf32>
    %100 = arith.addf %96, %99 : vector<8x1xf32>
    %101 = math.rsqrt %100 : vector<8x1xf32>
    %102 = vector.broadcast %101 : vector<8x1xf32> to vector<8x768xf32>
    %103 = arith.mulf %98, %102 : vector<8x768xf32>
    %104 = vector.broadcast %6 : vector<8x1xf32> to vector<8x768xf32>
    %105 = arith.mulf %103, %104 : vector<8x768xf32>
    %106 = vector.broadcast %7 : vector<8x1xf32> to vector<8x768xf32>
    %107 = arith.addf %105, %106 : vector<8x768xf32>
    %cst_27 = arith.constant 0.000000e+00 : f32
    %108 = vector.broadcast %cst_27 : f32 to vector<8x768xf32>
    %109 = arith.maximumf %107, %108 : vector<8x768xf32>
    %c0_28 = arith.constant 0 : index
    %c0_29 = arith.constant 0 : index
    %110 = vector.load %arg2[%c0_28, %c0_29] : memref<8x768xf32, #tpu.memory_space<vmem>>, vector<8x768xf32>
    %c0_30 = arith.constant 0 : index
    %c0_31 = arith.constant 0 : index
    %111 = vector.load %arg12[%c0_30, %c0_31] : memref<8x9xf32, #tpu.memory_space<vmem>>, vector<8x9xf32>
    %c0_32 = arith.constant 0 : index
    %c0_33 = arith.constant 0 : index
    %112 = vector.load %arg13[%c0_32, %c0_33] : memref<8x1xf32, #tpu.memory_space<vmem>>, vector<8x1xf32>
    %c0_34 = arith.constant 0 : index
    %c0_35 = arith.constant 0 : index
    %113 = vector.load %arg14[%c0_34, %c0_35] : memref<8x1xf32, #tpu.memory_space<vmem>>, vector<8x1xf32>
    %c0_36 = arith.constant 0 : index
    %c0_37 = arith.constant 0 : index
    %114 = vector.load %arg15[%c0_36, %c0_37] : memref<8x8xf32, #tpu.memory_space<vmem>>, vector<8x8xf32>
    %c0_38 = arith.constant 0 : index
    %c0_39 = arith.constant 0 : index
    %115 = vector.load %arg16[%c0_38, %c0_39] : memref<8x1xf32, #tpu.memory_space<vmem>>, vector<8x1xf32>
    %c0_40 = arith.constant 0 : index
    %c0_41 = arith.constant 0 : index
    %116 = vector.load %arg17[%c0_40, %c0_41] : memref<8x1xf32, #tpu.memory_space<vmem>>, vector<8x1xf32>
    %cst_42 = arith.constant 0.000000e+00 : f32
    %117 = vector.broadcast %cst_42 : f32 to vector<8x768xf32>
    %c19_i32_43 = arith.constant 19 : i32
    %118 = tpu.dynamic_rotate %110 by %c19_i32_43 dim 1 : vector<8x768xf32>, i32 -> vector<8x768xf32>
    %119 = vector.extract_strided_slice %111 {offsets = [0, 0], sizes = [8, 1], strides = [1, 1]} : vector<8x9xf32> to vector<8x1xf32>
    %120 = vector.broadcast %119 : vector<8x1xf32> to vector<8x768xf32>
    %121 = arith.mulf %118, %120 : vector<8x768xf32>
    %122 = arith.addf %117, %121 : vector<8x768xf32>
    %c18_i32_44 = arith.constant 18 : i32
    %123 = tpu.dynamic_rotate %110 by %c18_i32_44 dim 1 : vector<8x768xf32>, i32 -> vector<8x768xf32>
    %124 = vector.extract_strided_slice %111 {offsets = [0, 1], sizes = [8, 1], strides = [1, 1]} : vector<8x9xf32> to vector<8x1xf32>
    %125 = vector.broadcast %124 : vector<8x1xf32> to vector<8x768xf32>
    %126 = arith.mulf %123, %125 : vector<8x768xf32>
    %127 = arith.addf %122, %126 : vector<8x768xf32>
    %c17_i32_45 = arith.constant 17 : i32
    %128 = tpu.dynamic_rotate %110 by %c17_i32_45 dim 1 : vector<8x768xf32>, i32 -> vector<8x768xf32>
    %129 = vector.extract_strided_slice %111 {offsets = [0, 2], sizes = [8, 1], strides = [1, 1]} : vector<8x9xf32> to vector<8x1xf32>
    %130 = vector.broadcast %129 : vector<8x1xf32> to vector<8x768xf32>
    %131 = arith.mulf %128, %130 : vector<8x768xf32>
    %132 = arith.addf %127, %131 : vector<8x768xf32>
    %c1_i32_46 = arith.constant 1 : i32
    %133 = tpu.dynamic_rotate %110 by %c1_i32_46 dim 1 : vector<8x768xf32>, i32 -> vector<8x768xf32>
    %134 = vector.extract_strided_slice %111 {offsets = [0, 3], sizes = [8, 1], strides = [1, 1]} : vector<8x9xf32> to vector<8x1xf32>
    %135 = vector.broadcast %134 : vector<8x1xf32> to vector<8x768xf32>
    %136 = arith.mulf %133, %135 : vector<8x768xf32>
    %137 = arith.addf %132, %136 : vector<8x768xf32>
    %138 = vector.extract_strided_slice %111 {offsets = [0, 4], sizes = [8, 1], strides = [1, 1]} : vector<8x9xf32> to vector<8x1xf32>
    %139 = vector.broadcast %138 : vector<8x1xf32> to vector<8x768xf32>
    %140 = arith.mulf %110, %139 : vector<8x768xf32>
    %141 = arith.addf %137, %140 : vector<8x768xf32>
    %c767_i32_47 = arith.constant 767 : i32
    %142 = tpu.dynamic_rotate %110 by %c767_i32_47 dim 1 : vector<8x768xf32>, i32 -> vector<8x768xf32>
    %143 = vector.extract_strided_slice %111 {offsets = [0, 5], sizes = [8, 1], strides = [1, 1]} : vector<8x9xf32> to vector<8x1xf32>
    %144 = vector.broadcast %143 : vector<8x1xf32> to vector<8x768xf32>
    %145 = arith.mulf %142, %144 : vector<8x768xf32>
    %146 = arith.addf %141, %145 : vector<8x768xf32>
    %c751_i32_48 = arith.constant 751 : i32
    %147 = tpu.dynamic_rotate %110 by %c751_i32_48 dim 1 : vector<8x768xf32>, i32 -> vector<8x768xf32>
    %148 = vector.extract_strided_slice %111 {offsets = [0, 6], sizes = [8, 1], strides = [1, 1]} : vector<8x9xf32> to vector<8x1xf32>
    %149 = vector.broadcast %148 : vector<8x1xf32> to vector<8x768xf32>
    %150 = arith.mulf %147, %149 : vector<8x768xf32>
    %151 = arith.addf %146, %150 : vector<8x768xf32>
    %c750_i32_49 = arith.constant 750 : i32
    %152 = tpu.dynamic_rotate %110 by %c750_i32_49 dim 1 : vector<8x768xf32>, i32 -> vector<8x768xf32>
    %153 = vector.extract_strided_slice %111 {offsets = [0, 7], sizes = [8, 1], strides = [1, 1]} : vector<8x9xf32> to vector<8x1xf32>
    %154 = vector.broadcast %153 : vector<8x1xf32> to vector<8x768xf32>
    %155 = arith.mulf %152, %154 : vector<8x768xf32>
    %156 = arith.addf %151, %155 : vector<8x768xf32>
    %c749_i32_50 = arith.constant 749 : i32
    %157 = tpu.dynamic_rotate %110 by %c749_i32_50 dim 1 : vector<8x768xf32>, i32 -> vector<8x768xf32>
    %158 = vector.extract_strided_slice %111 {offsets = [0, 8], sizes = [8, 1], strides = [1, 1]} : vector<8x9xf32> to vector<8x1xf32>
    %159 = vector.broadcast %158 : vector<8x1xf32> to vector<8x768xf32>
    %160 = arith.mulf %157, %159 : vector<8x768xf32>
    %161 = arith.addf %156, %160 : vector<8x768xf32>
    %162 = vector.broadcast %0 : vector<1x768xf32> to vector<8x768xf32>
    %163 = arith.mulf %161, %162 : vector<8x768xf32>
    %cst_51 = arith.constant dense<0.000000e+00> : vector<8xf32>
    %164 = vector.multi_reduction <add>, %163, %cst_51 [1] : vector<8x768xf32> to vector<8xf32>
    %165 = vector.shape_cast %164 : vector<8xf32> to vector<8x1xf32>
    %cst_52 = arith.constant 0.001953125 : f32
    %166 = vector.broadcast %cst_52 : f32 to vector<8x1xf32>
    %167 = arith.mulf %165, %166 : vector<8x1xf32>
    %168 = vector.broadcast %167 : vector<8x1xf32> to vector<8x768xf32>
    %169 = arith.subf %161, %168 : vector<8x768xf32>
    %170 = vector.broadcast %0 : vector<1x768xf32> to vector<8x768xf32>
    %171 = arith.mulf %169, %170 : vector<8x768xf32>
    %172 = arith.mulf %171, %171 : vector<8x768xf32>
    %cst_53 = arith.constant dense<0.000000e+00> : vector<8xf32>
    %173 = vector.multi_reduction <add>, %172, %cst_53 [1] : vector<8x768xf32> to vector<8xf32>
    %174 = vector.shape_cast %173 : vector<8xf32> to vector<8x1xf32>
    %cst_54 = arith.constant 0.001953125 : f32
    %175 = vector.broadcast %cst_54 : f32 to vector<8x1xf32>
    %176 = arith.mulf %174, %175 : vector<8x1xf32>
    %177 = vector.broadcast %167 : vector<8x1xf32> to vector<8x768xf32>
    %178 = arith.subf %161, %177 : vector<8x768xf32>
    %cst_55 = arith.constant 9.99999974E-6 : f32
    %179 = vector.broadcast %cst_55 : f32 to vector<8x1xf32>
    %180 = arith.addf %176, %179 : vector<8x1xf32>
    %181 = math.rsqrt %180 : vector<8x1xf32>
    %182 = vector.broadcast %181 : vector<8x1xf32> to vector<8x768xf32>
    %183 = arith.mulf %178, %182 : vector<8x768xf32>
    %184 = vector.broadcast %112 : vector<8x1xf32> to vector<8x768xf32>
    %185 = arith.mulf %183, %184 : vector<8x768xf32>
    %186 = vector.broadcast %113 : vector<8x1xf32> to vector<8x768xf32>
    %187 = arith.addf %185, %186 : vector<8x768xf32>
    %cst_56 = arith.constant 0.000000e+00 : f32
    %188 = vector.broadcast %cst_56 : f32 to vector<8x768xf32>
    %189 = arith.maximumf %187, %188 : vector<8x768xf32>
    %cst_57 = arith.constant dense<0.000000e+00> : vector<8x768xf32>
    %190 = tpu.matmul %114, %189, %cst_57 {dimension_numbers = #tpu.dot_dimension_numbers<[1], [0], [0], [1], [0, 0, 1, 1], [], []>} : vector<8x8xf32>, vector<8x768xf32>, vector<8x768xf32> -> vector<8x768xf32>
    %191 = vector.broadcast %0 : vector<1x768xf32> to vector<8x768xf32>
    %192 = arith.mulf %190, %191 : vector<8x768xf32>
    %cst_58 = arith.constant dense<0.000000e+00> : vector<8xf32>
    %193 = vector.multi_reduction <add>, %192, %cst_58 [1] : vector<8x768xf32> to vector<8xf32>
    %194 = vector.shape_cast %193 : vector<8xf32> to vector<8x1xf32>
    %cst_59 = arith.constant 0.001953125 : f32
    %195 = vector.broadcast %cst_59 : f32 to vector<8x1xf32>
    %196 = arith.mulf %194, %195 : vector<8x1xf32>
    %197 = vector.broadcast %196 : vector<8x1xf32> to vector<8x768xf32>
    %198 = arith.subf %190, %197 : vector<8x768xf32>
    %199 = vector.broadcast %0 : vector<1x768xf32> to vector<8x768xf32>
    %200 = arith.mulf %198, %199 : vector<8x768xf32>
    %201 = arith.mulf %200, %200 : vector<8x768xf32>
    %cst_60 = arith.constant dense<0.000000e+00> : vector<8xf32>
    %202 = vector.multi_reduction <add>, %201, %cst_60 [1] : vector<8x768xf32> to vector<8xf32>
    %203 = vector.shape_cast %202 : vector<8xf32> to vector<8x1xf32>
    %cst_61 = arith.constant 0.001953125 : f32
    %204 = vector.broadcast %cst_61 : f32 to vector<8x1xf32>
    %205 = arith.mulf %203, %204 : vector<8x1xf32>
    %206 = vector.broadcast %196 : vector<8x1xf32> to vector<8x768xf32>
    %207 = arith.subf %190, %206 : vector<8x768xf32>
    %cst_62 = arith.constant 9.99999974E-6 : f32
    %208 = vector.broadcast %cst_62 : f32 to vector<8x1xf32>
    %209 = arith.addf %205, %208 : vector<8x1xf32>
    %210 = math.rsqrt %209 : vector<8x1xf32>
    %211 = vector.broadcast %210 : vector<8x1xf32> to vector<8x768xf32>
    %212 = arith.mulf %207, %211 : vector<8x768xf32>
    %213 = vector.broadcast %115 : vector<8x1xf32> to vector<8x768xf32>
    %214 = arith.mulf %212, %213 : vector<8x768xf32>
    %215 = vector.broadcast %116 : vector<8x1xf32> to vector<8x768xf32>
    %216 = arith.addf %214, %215 : vector<8x768xf32>
    %cst_63 = arith.constant 0.000000e+00 : f32
    %217 = vector.broadcast %cst_63 : f32 to vector<8x768xf32>
    %218 = arith.maximumf %216, %217 : vector<8x768xf32>
    %c0_64 = arith.constant 0 : index
    %c0_65 = arith.constant 0 : index
    %219 = vector.load %arg3[%c0_64, %c0_65] : memref<8x768xf32, #tpu.memory_space<vmem>>, vector<8x768xf32>
    %220 = arith.mulf %109, %219 : vector<8x768xf32>
    %c0_66 = arith.constant 0 : index
    %c0_67 = arith.constant 0 : index
    %221 = vector.load %arg4[%c0_66, %c0_67] : memref<8x768xf32, #tpu.memory_space<vmem>>, vector<8x768xf32>
    %222 = arith.mulf %218, %221 : vector<8x768xf32>
    %223 = arith.addf %220, %222 : vector<8x768xf32>
    %c0_68 = arith.constant 0 : index
    %c0_69 = arith.constant 0 : index
    %224 = vector.load %arg18[%c0_68, %c0_69] : memref<8x9xf32, #tpu.memory_space<vmem>>, vector<8x9xf32>
    %c0_70 = arith.constant 0 : index
    %c0_71 = arith.constant 0 : index
    %225 = vector.load %arg19[%c0_70, %c0_71] : memref<8x1xf32, #tpu.memory_space<vmem>>, vector<8x1xf32>
    %c0_72 = arith.constant 0 : index
    %c0_73 = arith.constant 0 : index
    %226 = vector.load %arg20[%c0_72, %c0_73] : memref<8x1xf32, #tpu.memory_space<vmem>>, vector<8x1xf32>
    %c0_74 = arith.constant 0 : index
    %c0_75 = arith.constant 0 : index
    %227 = vector.load %arg21[%c0_74, %c0_75] : memref<8x8xf32, #tpu.memory_space<vmem>>, vector<8x8xf32>
    %c0_76 = arith.constant 0 : index
    %c0_77 = arith.constant 0 : index
    %228 = vector.load %arg22[%c0_76, %c0_77] : memref<8x1xf32, #tpu.memory_space<vmem>>, vector<8x1xf32>
    %c0_78 = arith.constant 0 : index
    %c0_79 = arith.constant 0 : index
    %229 = vector.load %arg23[%c0_78, %c0_79] : memref<8x1xf32, #tpu.memory_space<vmem>>, vector<8x1xf32>
    %cst_80 = arith.constant 0.000000e+00 : f32
    %230 = vector.broadcast %cst_80 : f32 to vector<8x768xf32>
    %c19_i32_81 = arith.constant 19 : i32
    %231 = tpu.dynamic_rotate %223 by %c19_i32_81 dim 1 : vector<8x768xf32>, i32 -> vector<8x768xf32>
    %232 = vector.extract_strided_slice %224 {offsets = [0, 0], sizes = [8, 1], strides = [1, 1]} : vector<8x9xf32> to vector<8x1xf32>
    %233 = vector.broadcast %232 : vector<8x1xf32> to vector<8x768xf32>
    %234 = arith.mulf %231, %233 : vector<8x768xf32>
    %235 = arith.addf %230, %234 : vector<8x768xf32>
    %c18_i32_82 = arith.constant 18 : i32
    %236 = tpu.dynamic_rotate %223 by %c18_i32_82 dim 1 : vector<8x768xf32>, i32 -> vector<8x768xf32>
    %237 = vector.extract_strided_slice %224 {offsets = [0, 1], sizes = [8, 1], strides = [1, 1]} : vector<8x9xf32> to vector<8x1xf32>
    %238 = vector.broadcast %237 : vector<8x1xf32> to vector<8x768xf32>
    %239 = arith.mulf %236, %238 : vector<8x768xf32>
    %240 = arith.addf %235, %239 : vector<8x768xf32>
    %c17_i32_83 = arith.constant 17 : i32
    %241 = tpu.dynamic_rotate %223 by %c17_i32_83 dim 1 : vector<8x768xf32>, i32 -> vector<8x768xf32>
    %242 = vector.extract_strided_slice %224 {offsets = [0, 2], sizes = [8, 1], strides = [1, 1]} : vector<8x9xf32> to vector<8x1xf32>
    %243 = vector.broadcast %242 : vector<8x1xf32> to vector<8x768xf32>
    %244 = arith.mulf %241, %243 : vector<8x768xf32>
    %245 = arith.addf %240, %244 : vector<8x768xf32>
    %c1_i32_84 = arith.constant 1 : i32
    %246 = tpu.dynamic_rotate %223 by %c1_i32_84 dim 1 : vector<8x768xf32>, i32 -> vector<8x768xf32>
    %247 = vector.extract_strided_slice %224 {offsets = [0, 3], sizes = [8, 1], strides = [1, 1]} : vector<8x9xf32> to vector<8x1xf32>
    %248 = vector.broadcast %247 : vector<8x1xf32> to vector<8x768xf32>
    %249 = arith.mulf %246, %248 : vector<8x768xf32>
    %250 = arith.addf %245, %249 : vector<8x768xf32>
    %251 = vector.extract_strided_slice %224 {offsets = [0, 4], sizes = [8, 1], strides = [1, 1]} : vector<8x9xf32> to vector<8x1xf32>
    %252 = vector.broadcast %251 : vector<8x1xf32> to vector<8x768xf32>
    %253 = arith.mulf %223, %252 : vector<8x768xf32>
    %254 = arith.addf %250, %253 : vector<8x768xf32>
    %c767_i32_85 = arith.constant 767 : i32
    %255 = tpu.dynamic_rotate %223 by %c767_i32_85 dim 1 : vector<8x768xf32>, i32 -> vector<8x768xf32>
    %256 = vector.extract_strided_slice %224 {offsets = [0, 5], sizes = [8, 1], strides = [1, 1]} : vector<8x9xf32> to vector<8x1xf32>
    %257 = vector.broadcast %256 : vector<8x1xf32> to vector<8x768xf32>
    %258 = arith.mulf %255, %257 : vector<8x768xf32>
    %259 = arith.addf %254, %258 : vector<8x768xf32>
    %c751_i32_86 = arith.constant 751 : i32
    %260 = tpu.dynamic_rotate %223 by %c751_i32_86 dim 1 : vector<8x768xf32>, i32 -> vector<8x768xf32>
    %261 = vector.extract_strided_slice %224 {offsets = [0, 6], sizes = [8, 1], strides = [1, 1]} : vector<8x9xf32> to vector<8x1xf32>
    %262 = vector.broadcast %261 : vector<8x1xf32> to vector<8x768xf32>
    %263 = arith.mulf %260, %262 : vector<8x768xf32>
    %264 = arith.addf %259, %263 : vector<8x768xf32>
    %c750_i32_87 = arith.constant 750 : i32
    %265 = tpu.dynamic_rotate %223 by %c750_i32_87 dim 1 : vector<8x768xf32>, i32 -> vector<8x768xf32>
    %266 = vector.extract_strided_slice %224 {offsets = [0, 7], sizes = [8, 1], strides = [1, 1]} : vector<8x9xf32> to vector<8x1xf32>
    %267 = vector.broadcast %266 : vector<8x1xf32> to vector<8x768xf32>
    %268 = arith.mulf %265, %267 : vector<8x768xf32>
    %269 = arith.addf %264, %268 : vector<8x768xf32>
    %c749_i32_88 = arith.constant 749 : i32
    %270 = tpu.dynamic_rotate %223 by %c749_i32_88 dim 1 : vector<8x768xf32>, i32 -> vector<8x768xf32>
    %271 = vector.extract_strided_slice %224 {offsets = [0, 8], sizes = [8, 1], strides = [1, 1]} : vector<8x9xf32> to vector<8x1xf32>
    %272 = vector.broadcast %271 : vector<8x1xf32> to vector<8x768xf32>
    %273 = arith.mulf %270, %272 : vector<8x768xf32>
    %274 = arith.addf %269, %273 : vector<8x768xf32>
    %275 = vector.broadcast %0 : vector<1x768xf32> to vector<8x768xf32>
    %276 = arith.mulf %274, %275 : vector<8x768xf32>
    %cst_89 = arith.constant dense<0.000000e+00> : vector<8xf32>
    %277 = vector.multi_reduction <add>, %276, %cst_89 [1] : vector<8x768xf32> to vector<8xf32>
    %278 = vector.shape_cast %277 : vector<8xf32> to vector<8x1xf32>
    %cst_90 = arith.constant 0.001953125 : f32
    %279 = vector.broadcast %cst_90 : f32 to vector<8x1xf32>
    %280 = arith.mulf %278, %279 : vector<8x1xf32>
    %281 = vector.broadcast %280 : vector<8x1xf32> to vector<8x768xf32>
    %282 = arith.subf %274, %281 : vector<8x768xf32>
    %283 = vector.broadcast %0 : vector<1x768xf32> to vector<8x768xf32>
    %284 = arith.mulf %282, %283 : vector<8x768xf32>
    %285 = arith.mulf %284, %284 : vector<8x768xf32>
    %cst_91 = arith.constant dense<0.000000e+00> : vector<8xf32>
    %286 = vector.multi_reduction <add>, %285, %cst_91 [1] : vector<8x768xf32> to vector<8xf32>
    %287 = vector.shape_cast %286 : vector<8xf32> to vector<8x1xf32>
    %cst_92 = arith.constant 0.001953125 : f32
    %288 = vector.broadcast %cst_92 : f32 to vector<8x1xf32>
    %289 = arith.mulf %287, %288 : vector<8x1xf32>
    %290 = vector.broadcast %280 : vector<8x1xf32> to vector<8x768xf32>
    %291 = arith.subf %274, %290 : vector<8x768xf32>
    %cst_93 = arith.constant 9.99999974E-6 : f32
    %292 = vector.broadcast %cst_93 : f32 to vector<8x1xf32>
    %293 = arith.addf %289, %292 : vector<8x1xf32>
    %294 = math.rsqrt %293 : vector<8x1xf32>
    %295 = vector.broadcast %294 : vector<8x1xf32> to vector<8x768xf32>
    %296 = arith.mulf %291, %295 : vector<8x768xf32>
    %297 = vector.broadcast %225 : vector<8x1xf32> to vector<8x768xf32>
    %298 = arith.mulf %296, %297 : vector<8x768xf32>
    %299 = vector.broadcast %226 : vector<8x1xf32> to vector<8x768xf32>
    %300 = arith.addf %298, %299 : vector<8x768xf32>
    %cst_94 = arith.constant 0.000000e+00 : f32
    %301 = vector.broadcast %cst_94 : f32 to vector<8x768xf32>
    %302 = arith.maximumf %300, %301 : vector<8x768xf32>
    %cst_95 = arith.constant dense<0.000000e+00> : vector<8x768xf32>
    %303 = tpu.matmul %227, %302, %cst_95 {dimension_numbers = #tpu.dot_dimension_numbers<[1], [0], [0], [1], [0, 0, 1, 1], [], []>} : vector<8x8xf32>, vector<8x768xf32>, vector<8x768xf32> -> vector<8x768xf32>
    %304 = vector.broadcast %0 : vector<1x768xf32> to vector<8x768xf32>
    %305 = arith.mulf %303, %304 : vector<8x768xf32>
    %cst_96 = arith.constant dense<0.000000e+00> : vector<8xf32>
    %306 = vector.multi_reduction <add>, %305, %cst_96 [1] : vector<8x768xf32> to vector<8xf32>
    %307 = vector.shape_cast %306 : vector<8xf32> to vector<8x1xf32>
    %cst_97 = arith.constant 0.001953125 : f32
    %308 = vector.broadcast %cst_97 : f32 to vector<8x1xf32>
    %309 = arith.mulf %307, %308 : vector<8x1xf32>
    %310 = vector.broadcast %309 : vector<8x1xf32> to vector<8x768xf32>
    %311 = arith.subf %303, %310 : vector<8x768xf32>
    %312 = vector.broadcast %0 : vector<1x768xf32> to vector<8x768xf32>
    %313 = arith.mulf %311, %312 : vector<8x768xf32>
    %314 = arith.mulf %313, %313 : vector<8x768xf32>
    %cst_98 = arith.constant dense<0.000000e+00> : vector<8xf32>
    %315 = vector.multi_reduction <add>, %314, %cst_98 [1] : vector<8x768xf32> to vector<8xf32>
    %316 = vector.shape_cast %315 : vector<8xf32> to vector<8x1xf32>
    %cst_99 = arith.constant 0.001953125 : f32
    %317 = vector.broadcast %cst_99 : f32 to vector<8x1xf32>
    %318 = arith.mulf %316, %317 : vector<8x1xf32>
    %319 = vector.broadcast %309 : vector<8x1xf32> to vector<8x768xf32>
    %320 = arith.subf %303, %319 : vector<8x768xf32>
    %cst_100 = arith.constant 9.99999974E-6 : f32
    %321 = vector.broadcast %cst_100 : f32 to vector<8x1xf32>
    %322 = arith.addf %318, %321 : vector<8x1xf32>
    %323 = math.rsqrt %322 : vector<8x1xf32>
    %324 = vector.broadcast %323 : vector<8x1xf32> to vector<8x768xf32>
    %325 = arith.mulf %320, %324 : vector<8x768xf32>
    %326 = vector.broadcast %228 : vector<8x1xf32> to vector<8x768xf32>
    %327 = arith.mulf %325, %326 : vector<8x768xf32>
    %328 = vector.broadcast %229 : vector<8x1xf32> to vector<8x768xf32>
    %329 = arith.addf %327, %328 : vector<8x768xf32>
    %cst_101 = arith.constant 0.000000e+00 : f32
    %330 = vector.broadcast %cst_101 : f32 to vector<8x768xf32>
    %331 = arith.maximumf %329, %330 : vector<8x768xf32>
    %c0_102 = arith.constant 0 : index
    %c0_103 = arith.constant 0 : index
    %332 = vector.load %arg24[%c0_102, %c0_103] : memref<8x768xf32, #tpu.memory_space<vmem>>, vector<8x768xf32>
    tpu.vector_store %arg24[%c0_102, %c0_103], %331 {strides = array<i32>} : memref<8x768xf32, #tpu.memory_space<vmem>>, vector<8x768xf32>,
    return
  }
  func.func @transform_0(%arg0: i32) -> (i32, i32) {
    %c0_i32 = arith.constant 0 : i32
    %c0_i32_0 = arith.constant 0 : i32
    %c0_i32_1 = arith.constant 0 : i32
    return %c0_i32, %c0_i32_0 : i32, i32
  }
  func.func @transform_1(%arg0: i32) -> (i32, i32) {
    %c0_i32 = arith.constant 0 : i32
    %c0_i32_0 = arith.constant 0 : i32
    %c0_i32_1 = arith.constant 0 : i32
    return %c0_i32, %c0_i32_0 : i32, i32
  }
  func.func @transform_2(%arg0: i32) -> (i32, i32) {
    %c0_i32 = arith.constant 0 : i32
    %c0_i32_0 = arith.constant 0 : i32
    %c0_i32_1 = arith.constant 0 : i32
    return %c0_i32, %c0_i32_0 : i32, i32
  }
  func.func @transform_3(%arg0: i32) -> (i32, i32) {
    %c0_i32 = arith.constant 0 : i32
    %c0_i32_0 = arith.constant 0 : i32
    %c0_i32_1 = arith.constant 0 : i32
    return %c0_i32, %c0_i32_0 : i32, i32
  }
  func.func @transform_4(%arg0: i32) -> (i32, i32) {
    %c0_i32 = arith.constant 0 : i32
    %c0_i32_0 = arith.constant 0 : i32
    %c0_i32_1 = arith.constant 0 : i32
    return %c0_i32, %c0_i32_0 : i32, i32
  }
  func.func @transform_5(%arg0: i32) -> (i32, i32) {
    %c0_i32 = arith.constant 0 : i32
    %c0_i32_0 = arith.constant 0 : i32
    %c0_i32_1 = arith.constant 0 : i32
    return %c0_i32, %c0_i32_0 : i32, i32
  }
  func.func @transform_6(%arg0: i32) -> (i32, i32) {
    %c0_i32 = arith.constant 0 : i32
    %c0_i32_0 = arith.constant 0 : i32
    %c0_i32_1 = arith.constant 0 : i32
    return %c0_i32, %c0_i32_0 : i32, i32
  }
  func.func @transform_7(%arg0: i32) -> (i32, i32) {
    %c0_i32 = arith.constant 0 : i32
    %c0_i32_0 = arith.constant 0 : i32
    %c0_i32_1 = arith.constant 0 : i32
    return %c0_i32, %c0_i32_0 : i32, i32
  }
  func.func @transform_8(%arg0: i32) -> (i32, i32) {
    %c0_i32 = arith.constant 0 : i32
    %c0_i32_0 = arith.constant 0 : i32
    %c0_i32_1 = arith.constant 0 : i32
    return %c0_i32, %c0_i32_0 : i32, i32
  }
  func.func @transform_9(%arg0: i32) -> (i32, i32) {
    %c0_i32 = arith.constant 0 : i32
    %c0_i32_0 = arith.constant 0 : i32
    %c0_i32_1 = arith.constant 0 : i32
    return %c0_i32, %c0_i32_0 : i32, i32
  }
  func.func @transform_10(%arg0: i32) -> (i32, i32) {
    %c0_i32 = arith.constant 0 : i32
    %c0_i32_0 = arith.constant 0 : i32
    %c0_i32_1 = arith.constant 0 : i32
    return %c0_i32, %c0_i32_0 : i32, i32
  }
  func.func @transform_11(%arg0: i32) -> (i32, i32) {
    %c0_i32 = arith.constant 0 : i32
    %c0_i32_0 = arith.constant 0 : i32
    %c0_i32_1 = arith.constant 0 : i32
    return %c0_i32, %c0_i32_0 : i32, i32
  }
  func.func @transform_12(%arg0: i32) -> (i32, i32) {
    %c0_i32 = arith.constant 0 : i32
    %c0_i32_0 = arith.constant 0 : i32
    %c0_i32_1 = arith.constant 0 : i32
    return %c0_i32, %c0_i32_0 : i32, i32
  }
  func.func @transform_13(%arg0: i32) -> (i32, i32) {
    %c0_i32 = arith.constant 0 : i32
    %c0_i32_0 = arith.constant 0 : i32
    %c0_i32_1 = arith.constant 0 : i32
    return %c0_i32, %c0_i32_0 : i32, i32
  }
  func.func @transform_14(%arg0: i32) -> (i32, i32) {
    %c0_i32 = arith.constant 0 : i32
    %c0_i32_0 = arith.constant 0 : i32
    %c0_i32_1 = arith.constant 0 : i32
    return %c0_i32, %c0_i32_0 : i32, i32
  }
  func.func @transform_15(%arg0: i32) -> (i32, i32) {
    %c0_i32 = arith.constant 0 : i32
    %c0_i32_0 = arith.constant 0 : i32
    %c0_i32_1 = arith.constant 0 : i32
    return %c0_i32, %c0_i32_0 : i32, i32
  }
  func.func @transform_16(%arg0: i32) -> (i32, i32) {
    %c0_i32 = arith.constant 0 : i32
    %c0_i32_0 = arith.constant 0 : i32
    %c0_i32_1 = arith.constant 0 : i32
    return %c0_i32, %c0_i32_0 : i32, i32
  }
  func.func @transform_17(%arg0: i32) -> (i32, i32) {
    %c0_i32 = arith.constant 0 : i32
    %c0_i32_0 = arith.constant 0 : i32
    %c0_i32_1 = arith.constant 0 : i32
    return %c0_i32, %c0_i32_0 : i32, i32
  }
  func.func @transform_18(%arg0: i32) -> (i32, i32) {
    %c0_i32 = arith.constant 0 : i32
    %c0_i32_0 = arith.constant 0 : i32
    %c0_i32_1 = arith.constant 0 : i32
    return %c0_i32, %c0_i32_0 : i32, i32
  }
  func.func @transform_19(%arg0: i32) -> (i32, i32) {
    %c0_i32 = arith.constant 0 : i32
    %c0_i32_0 = arith.constant 0 : i32
    %c0_i32_1 = arith.constant 0 : i32
    return %c0_i32, %c0_i32_0 : i32, i32
  }
  func.func @transform_20(%arg0: i32) -> (i32, i32) {
    %c0_i32 = arith.constant 0 : i32
    %c0_i32_0 = arith.constant 0 : i32
    %c0_i32_1 = arith.constant 0 : i32
    return %c0_i32, %c0_i32_0 : i32, i32
  }
  func.func @transform_21(%arg0: i32) -> (i32, i32) {
    %c0_i32 = arith.constant 0 : i32
    %c0_i32_0 = arith.constant 0 : i32
    %c0_i32_1 = arith.constant 0 : i32
    return %c0_i32, %c0_i32_0 : i32, i32
  }
  func.func @transform_22(%arg0: i32) -> (i32, i32) {
    %c0_i32 = arith.constant 0 : i32
    %c0_i32_0 = arith.constant 0 : i32
    %c0_i32_1 = arith.constant 0 : i32
    return %c0_i32, %c0_i32_0 : i32, i32
  }
  func.func @transform_23(%arg0: i32) -> (i32, i32) {
    %c0_i32 = arith.constant 0 : i32
    %c0_i32_0 = arith.constant 0 : i32
    %c0_i32_1 = arith.constant 0 : i32
    return %c0_i32, %c0_i32_0 : i32, i32
  }
}

</mosaic_0001>

<llo_original>
// kernel: fdw_v2_forward.2
$region0: #{fdw_v2_forward.2}
  #allocation0 [shape = 'u32[]', space=smem, size = 0x4, offset = 0x4, fixed_abs, tag = 'smem constant byte address 0x4 - core index']
  #allocation1 [shape = 'u32[144,128]{1,0:T(1,128)}', space=vmem, size = 0x12000, scoped, tag = 'internal scratch']
  %s0 = inlined_call_operand.vmem [shape: f32[8,128], index: 0, kind: input, shape index: {}]
  %s1 = inlined_call_operand.vmem [shape: f32[8,128], index: 1, kind: input, shape index: {}]
  %s2 = inlined_call_operand.vmem [shape: f32[1,128], index: 2, kind: input, shape index: {}]
  %s3 = inlined_call_operand.vmem [shape: f32[8,9], index: 3, kind: input, shape index: {}]
  %s4 = inlined_call_operand.vmem [shape: f32[8,1], index: 4, kind: input, shape index: {}]
  %s5 = inlined_call_operand.vmem [shape: f32[8,1], index: 5, kind: input, shape index: {}]
  %s6 = inlined_call_operand.vmem [shape: f32[8,8], index: 6, kind: input, shape index: {}]
  %s7 = inlined_call_operand.vmem [shape: f32[8,1], index: 7, kind: input, shape index: {}]
  %s8 = inlined_call_operand.vmem [shape: f32[8,1], index: 8, kind: input, shape index: {}]
  %s9 = inlined_call_operand.vmem [shape: f32[8,9], index: 9, kind: input, shape index: {}]
  %s10 = inlined_call_operand.vmem [shape: f32[8,1], index: 10, kind: input, shape index: {}]
  %s11 = inlined_call_operand.vmem [shape: f32[8,1], index: 11, kind: input, shape index: {}]
  %s12 = inlined_call_operand.vmem [shape: f32[8,8], index: 12, kind: input, shape index: {}]
  %s13 = inlined_call_operand.vmem [shape: f32[8,1], index: 13, kind: input, shape index: {}]
  %s14 = inlined_call_operand.vmem [shape: f32[8,1], index: 14, kind: input, shape index: {}]
  %s15 = inlined_call_operand.vmem [shape: f32[16,9], index: 15, kind: input, shape index: {}]
  %s16 = inlined_call_operand.vmem [shape: f32[16,1], index: 16, kind: input, shape index: {}]
  %s17 = inlined_call_operand.vmem [shape: f32[16,1], index: 17, kind: input, shape index: {}]
  %s18 = inlined_call_operand.vmem [shape: f32[8,16], index: 18, kind: input, shape index: {}]
  %s19 = inlined_call_operand.vmem [shape: f32[8,1], index: 19, kind: input, shape index: {}]
  %s20 = inlined_call_operand.vmem [shape: f32[8,1], index: 20, kind: input, shape index: {}]
  %s21 = inlined_call_operand.vmem [shape: f32[8,128], index: 21, kind: output, shape index: {}]
  %s22 = sld [smem:[#allocation0]]
  $region94: #{fdw_v2_forward.2} parent=0
    _
  %s24 = ssub.s32 1, %s22
  %s25 = scalar_select 0, %s24, %s22
  // Predicated region
  $region2: #{fdw_v2_forward.2} parent=0 // pred_check
    _
  $region3: #{fdw_v2_forward.2} parent=0 // pred_check_branch
    %27 = sbr.rel (0) target = $region5
  $region4: #{fdw_v2_forward.2} parent=0 // pred_region
    _
  $region5: #{fdw_v2_forward.2} parent=0 // pred_fallthru
    _
  // Predicated region
  $region6: #{fdw_v2_forward.2} parent=0 // pred_check
    _
  $region7: #{fdw_v2_forward.2} parent=0 // pred_check_branch
    %29 = sbr.rel (0) target = $region9
  $region8: #{fdw_v2_forward.2} parent=0 // pred_region
    _
  $region9: #{fdw_v2_forward.2} parent=0 // pred_fallthru
    _
  // Predicated region
  $region10: #{fdw_v2_forward.2} parent=0 // pred_check
    _
  $region11: #{fdw_v2_forward.2} parent=0 // pred_check_branch
    %31 = sbr.rel (0) target = $region13
  $region12: #{fdw_v2_forward.2} parent=0 // pred_region
    _
  $region13: #{fdw_v2_forward.2} parent=0 // pred_fallthru
    _
  // Predicated region
  $region14: #{fdw_v2_forward.2} parent=0 // pred_check
    _
  $region15: #{fdw_v2_forward.2} parent=0 // pred_check_branch
    %33 = sbr.rel (0) target = $region17
  $region16: #{fdw_v2_forward.2} parent=0 // pred_region
    _
  $region17: #{fdw_v2_forward.2} parent=0 // pred_fallthru
    _
  // Predicated region
  $region18: #{fdw_v2_forward.2} parent=0 // pred_check
    _
  $region19: #{fdw_v2_forward.2} parent=0 // pred_check_branch
    %35 = sbr.rel (0) target = $region21
  $region20: #{fdw_v2_forward.2} parent=0 // pred_region
    _
  $region21: #{fdw_v2_forward.2} parent=0 // pred_fallthru
    _
  // Predicated region
  $region22: #{fdw_v2_forward.2} parent=0 // pred_check
    _
  $region23: #{fdw_v2_forward.2} parent=0 // pred_check_branch
    %37 = sbr.rel (0) target = $region25
  $region24: #{fdw_v2_forward.2} parent=0 // pred_region
    _
  $region25: #{fdw_v2_forward.2} parent=0 // pred_fallthru
    _
  // Predicated region
  $region26: #{fdw_v2_forward.2} parent=0 // pred_check
    _
  $region27: #{fdw_v2_forward.2} parent=0 // pred_check_branch
    %39 = sbr.rel (0) target = $region29
  $region28: #{fdw_v2_forward.2} parent=0 // pred_region
    _
  $region29: #{fdw_v2_forward.2} parent=0 // pred_fallthru
    _
  // Predicated region
  $region30: #{fdw_v2_forward.2} parent=0 // pred_check
    _
  $region31: #{fdw_v2_forward.2} parent=0 // pred_check_branch
    %41 = sbr.rel (0) target = $region33
  $region32: #{fdw_v2_forward.2} parent=0 // pred_region
    _
  $region33: #{fdw_v2_forward.2} parent=0 // pred_fallthru
    _
  // Predicated region
  $region34: #{fdw_v2_forward.2} parent=0 // pred_check
    _
  $region35: #{fdw_v2_forward.2} parent=0 // pred_check_branch
    %43 = sbr.rel (0) target = $region37
  $region36: #{fdw_v2_forward.2} parent=0 // pred_region
    _
  $region37: #{fdw_v2_forward.2} parent=0 // pred_fallthru
    _
  // Predicated region
  $region38: #{fdw_v2_forward.2} parent=0 // pred_check
    _
  $region39: #{fdw_v2_forward.2} parent=0 // pred_check_branch
    %45 = sbr.rel (0) target = $region41
  $region40: #{fdw_v2_forward.2} parent=0 // pred_region
    _
  $region41: #{fdw_v2_forward.2} parent=0 // pred_fallthru
    _
  // Predicated region
  $region42: #{fdw_v2_forward.2} parent=0 // pred_check
    _
  $region43: #{fdw_v2_forward.2} parent=0 // pred_check_branch
    %47 = sbr.rel (0) target = $region45
  $region44: #{fdw_v2_forward.2} parent=0 // pred_region
    _
  $region45: #{fdw_v2_forward.2} parent=0 // pred_fallthru
    _
  // Predicated region
  $region46: #{fdw_v2_forward.2} parent=0 // pred_check
    _
  $region47: #{fdw_v2_forward.2} parent=0 // pred_check_branch
    %49 = sbr.rel (0) target = $region49
  $region48: #{fdw_v2_forward.2} parent=0 // pred_region
    _
  $region49: #{fdw_v2_forward.2} parent=0 // pred_fallthru
    _
  // Predicated region
  $region50: #{fdw_v2_forward.2} parent=0 // pred_check
    _
  $region51: #{fdw_v2_forward.2} parent=0 // pred_check_branch
    %51 = sbr.rel (0) target = $region53
  $region52: #{fdw_v2_forward.2} parent=0 // pred_region
    _
  $region53: #{fdw_v2_forward.2} parent=0 // pred_fallthru
    _
  // Predicated region
  $region54: #{fdw_v2_forward.2} parent=0 // pred_check
    _
  $region55: #{fdw_v2_forward.2} parent=0 // pred_check_branch
    %53 = sbr.rel (0) target = $region57
  $region56: #{fdw_v2_forward.2} parent=0 // pred_region
    _
  $region57: #{fdw_v2_forward.2} parent=0 // pred_fallthru
    _
  // Predicated region
  $region58: #{fdw_v2_forward.2} parent=0 // pred_check
    _
  $region59: #{fdw_v2_forward.2} parent=0 // pred_check_branch
    %55 = sbr.rel (0) target = $region61
  $region60: #{fdw_v2_forward.2} parent=0 // pred_region
    _
  $region61: #{fdw_v2_forward.2} parent=0 // pred_fallthru
    _
  // Predicated region
  $region62: #{fdw_v2_forward.2} parent=0 // pred_check
    _
  $region63: #{fdw_v2_forward.2} parent=0 // pred_check_branch
    %57 = sbr.rel (0) target = $region65
  $region64: #{fdw_v2_forward.2} parent=0 // pred_region
    _
  $region65: #{fdw_v2_forward.2} parent=0 // pred_fallthru
    _
  // Predicated region
  $region66: #{fdw_v2_forward.2} parent=0 // pred_check
    _
  $region67: #{fdw_v2_forward.2} parent=0 // pred_check_branch
    %59 = sbr.rel (0) target = $region69
  $region68: #{fdw_v2_forward.2} parent=0 // pred_region
    _
  $region69: #{fdw_v2_forward.2} parent=0 // pred_fallthru
    _
  // Predicated region
  $region70: #{fdw_v2_forward.2} parent=0 // pred_check
    _
  $region71: #{fdw_v2_forward.2} parent=0 // pred_check_branch
    %61 = sbr.rel (0) target = $region73
  $region72: #{fdw_v2_forward.2} parent=0 // pred_region
    _
  $region73: #{fdw_v2_forward.2} parent=0 // pred_fallthru
    _
  // Predicated region
  $region74: #{fdw_v2_forward.2} parent=0 // pred_check
    _
  $region75: #{fdw_v2_forward.2} parent=0 // pred_check_branch
    %63 = sbr.rel (0) target = $region77
  $region76: #{fdw_v2_forward.2} parent=0 // pred_region
    _
  $region77: #{fdw_v2_forward.2} parent=0 // pred_fallthru
    _
  // Predicated region
  $region78: #{fdw_v2_forward.2} parent=0 // pred_check
    _
  $region79: #{fdw_v2_forward.2} parent=0 // pred_check_branch
    %65 = sbr.rel (0) target = $region81
  $region80: #{fdw_v2_forward.2} parent=0 // pred_region
    _
  $region81: #{fdw_v2_forward.2} parent=0 // pred_fallthru
    _
  // Predicated region
  $region82: #{fdw_v2_forward.2} parent=0 // pred_check
    _
  $region83: #{fdw_v2_forward.2} parent=0 // pred_check_branch
    %67 = sbr.rel (0) target = $region85
  $region84: #{fdw_v2_forward.2} parent=0 // pred_region
    _
  $region85: #{fdw_v2_forward.2} parent=0 // pred_fallthru
    _
  %v68 = vld [vmem:[%s2] sm:$0x1]
  %v69 = vld [vmem:[%s0] sm:$0xff]
  %v70 = vld [vmem:[%s3] sm:$0xff]
  %v71 = vld [vmem:[%s4] sm:$0xff]
  %v72 = vld [vmem:[%s5] sm:$0xff]
  %v73 = vld [vmem:[%s6] sm:$0xff]
  %v74 = vld [vmem:[%s7] sm:$0xff]
  %v75 = vld [vmem:[%s8] sm:$0xff]
  %76 = vrot.lane.b32.xlu0 %v69, 5
  %v77 = vpop.permute.xlu0 %76
  %79 = vset.pattern.permute.xlu0 0
  %80 = vperm.xlu0 %79, %v70
  %v81 = vpop.permute.xlu0 %80
  %v83 = vmul.f32 %v77, %v81
  %v84 = vadd.f32 %v83, 0.0
  %85 = vrot.lane.b32.xlu0 %v69, 4
  %v86 = vpop.permute.xlu0 %85
  %87 = vset.pattern.permute.xlu0 1
  %88 = vperm.xlu0 %87, %v70
  %v89 = vpop.permute.xlu0 %88
  %v91 = vmul.f32 %v86, %v89
  %v92 = vadd.f32 %v84, %v91
  %93 = vrot.lane.b32.xlu0 %v69, 3
  %v94 = vpop.permute.xlu0 %93
  %95 = vset.pattern.permute.xlu0 2
  %96 = vperm.xlu0 %95, %v70
  %v97 = vpop.permute.xlu0 %96
  %v99 = vmul.f32 %v94, %v97
  %v100 = vadd.f32 %v92, %v99
  %101 = vrot.lane.b32.xlu0 %v69, 1
  %v102 = vpop.permute.xlu0 %101
  %103 = vset.pattern.permute.xlu0 3
  %104 = vperm.xlu0 %103, %v70
  %v105 = vpop.permute.xlu0 %104
  %v107 = vmul.f32 %v102, %v105
  %v108 = vadd.f32 %v100, %v107
  %109 = vset.pattern.permute.xlu0 4
  %110 = vperm.xlu0 %109, %v70
  %v111 = vpop.permute.xlu0 %110
  %v113 = vmul.f32 %v69, %v111
  %v114 = vadd.f32 %v108, %v113
  %115 = vrot.lane.b32.xlu0 %v69, 127
  %v116 = vpop.permute.xlu0 %115
  %117 = vset.pattern.permute.xlu0 5
  %118 = vperm.xlu0 %117, %v70
  %v119 = vpop.permute.xlu0 %118
  %v121 = vmul.f32 %v116, %v119
  %v122 = vadd.f32 %v114, %v121
  %123 = vrot.lane.b32.xlu0 %v69, 125
  %v124 = vpop.permute.xlu0 %123
  %125 = vset.pattern.permute.xlu0 6
  %126 = vperm.xlu0 %125, %v70
  %v127 = vpop.permute.xlu0 %126
  %v129 = vmul.f32 %v124, %v127
  %v130 = vadd.f32 %v122, %v129
  %131 = vrot.lane.b32.xlu0 %v69, 124
  %v132 = vpop.permute.xlu0 %131
  %133 = vset.pattern.permute.xlu0 7
  %134 = vperm.xlu0 %133, %v70
  %v135 = vpop.permute.xlu0 %134
  %v137 = vmul.f32 %v132, %v135
  %v138 = vadd.f32 %v130, %v137
  %139 = vrot.lane.b32.xlu0 %v69, 123
  %v140 = vpop.permute.xlu0 %139
  %141 = vset.pattern.permute.xlu0 8
  %142 = vperm.xlu0 %141, %v70
  %v143 = vpop.permute.xlu0 %142
  %v145 = vmul.f32 %v140, %v143
  %v146 = vadd.f32 %v138, %v145
  %v148 = vlaneseq
  %v149 = vshrl.u32 %v148, 7
  %v150 = vsub.s32 0, %v149
  %v151 = vrot.slane %v68, %v150
  %v153 = vmul.f32 %v146, %v151
  %154 = vadd.xlane.f32.xlu0 %v153
  %v155 = vpop.xlane.xlu0 %154
  %v156 = vmul.f32 %v155, 0.125
  %v157 = vsub.f32 %v146, %v156
  %v158 = vmul.f32 %v157, %v151
  %v159 = vmul.f32 %v158, %v158
  %160 = vadd.xlane.f32.xlu0 %v159
  %v161 = vpop.xlane.xlu0 %160
  %v162 = vmul.f32 %v161, 0.125
  %v163 = vadd.f32 %v162, 1e-05
  %v164 = vrsqrt.pop %v163
  %v165 = vmul.f32 %v157, %v164
  %167 = vset.pattern.permute.xlu0 0
  %168 = vperm.xlu0 %167, %v71
  %v169 = vpop.permute.xlu0 %168
  %v171 = vmul.f32 %v165, %v169
  %173 = vset.pattern.permute.xlu0 0
  %174 = vperm.xlu0 %173, %v72
  %v175 = vpop.permute.xlu0 %174
  %v177 = vadd.f32 %v171, %v175
  %v178 = vmax.f32 %v177, 0.0
  %vm179 = vcmask 64512
  %v181 = vsel %vm179, %v73, 0
  %183 = vmatprep.subr.mxu0 0.0
  %184 = vmatpush1.msra.mxu0 0.0
  %185 = vmatprep.subr.mxu0 0.0
  %186 = vmatpush1.msra.mxu0 0.0
  %187 = vmatprep.subr.mxu0 0.0
  %188 = vmatpush1.msra.mxu0 0.0
  %189 = vmatprep.subr.mxu0 0.0
  %190 = vmatpush1.msra.mxu0 0.0
  %191 = vmatprep.subr.mxu0 0.0
  %192 = vmatpush1.msra.mxu0 0.0
  %193 = vmatprep.subr.mxu0 0.0
  %194 = vmatpush1.msra.mxu0 0.0
  %195 = vmatprep.subr.mxu0 0.0
  %196 = vmatpush1.msra.mxu0 0.0
  %197 = vmatprep.subr.mxu0 0.0
  %198 = vmatpush1.msra.mxu0 0.0
  %199 = vmatprep.subr.mxu0 0.0
  %200 = vmatpush1.msra.mxu0 0.0
  %201 = vmatprep.subr.mxu0 0.0
  %202 = vmatpush1.msra.mxu0 0.0
  %203 = vmatprep.subr.mxu0 0.0
  %204 = vmatpush1.msra.mxu0 0.0
  %205 = vmatprep.subr.mxu0 0.0
  %206 = vmatpush1.msra.mxu0 0.0
  %207 = vmatprep.subr.mxu0 0.0
  %208 = vmatpush1.msra.mxu0 0.0
  %209 = vmatprep.subr.mxu0 0.0
  %210 = vmatpush1.msra.mxu0 0.0
  %211 = vmatprep.subr.mxu0 0.0
  %212 = vmatpush1.msra.mxu0 0.0
  %213 = vmatprep.subr.mxu0 0.0
  %214 = vmatpush1.msra.mxu0 %v178
  %215 = vmatprep.subr.mxu0 0.0
  %216 = vmatpush2.msra.mxu0 0.0
  %217 = vmatprep.subr.mxu0 0.0
  %218 = vmatpush2.msra.mxu0 0.0
  %219 = vmatprep.subr.mxu0 0.0
  %220 = vmatpush2.msra.mxu0 0.0
  %221 = vmatprep.subr.mxu0 0.0
  %222 = vmatpush2.msra.mxu0 0.0
  %223 = vmatprep.subr.mxu0 0.0
  %224 = vmatpush2.msra.mxu0 0.0
  %225 = vmatprep.subr.mxu0 0.0
  %226 = vmatpush2.msra.mxu0 0.0
  %227 = vmatprep.subr.mxu0 0.0
  %228 = vmatpush2.msra.mxu0 0.0
  %229 = vmatprep.subr.mxu0 0.0
  %230 = vmatpush2.msra.mxu0 0.0
  %231 = vmatprep.subr.mxu0 0.0
  %232 = vmatpush2.msra.mxu0 0.0
  %233 = vmatprep.subr.mxu0 0.0
  %234 = vmatpush2.msra.mxu0 0.0
  %235 = vmatprep.subr.mxu0 0.0
  %236 = vmatpush2.msra.mxu0 0.0
  %237 = vmatprep.subr.mxu0 0.0
  %238 = vmatpush2.msra.mxu0 0.0
  %239 = vmatprep.subr.mxu0 0.0
  %240 = vmatpush2.msra.mxu0 0.0
  %241 = vmatprep.subr.mxu0 0.0
  %242 = vmatpush2.msra.mxu0 0.0
  %243 = vmatprep.subr.mxu0 0.0
  %244 = vmatpush2.msra.mxu0 0.0
  %245 = vmatprep.subr.mxu0 0.0
  %246 = vmatpush2.msra.mxu0 0.0
  %247 = vmatprep.mubr.f32.mxu0 0.0
  %248 = vmatmul.mubr.f32.gmra.mxu0 %v181
  %v249 = vpop.f32.mrf.mxu0
  %v250 = vadd.f32 0.0, %v249
  %v251 = vpop.f32.mrf.mxu0
  %252 = vdwg.mxu0
  %v253 = vmul.f32 %v250, %v151
  %254 = vadd.xlane.f32.xlu0 %v253
  %v255 = vpop.xlane.xlu0 %254
  %v256 = vmul.f32 %v255, 0.125
  %v257 = vsub.f32 %v250, %v256
  %v258 = vmul.f32 %v257, %v151
  %v259 = vmul.f32 %v258, %v258
  %260 = vadd.xlane.f32.xlu0 %v259
  %v261 = vpop.xlane.xlu0 %260
  %v262 = vmul.f32 %v261, 0.125
  %v263 = vadd.f32 %v262, 1e-05
  %v264 = vrsqrt.pop %v263
  %v265 = vmul.f32 %v257, %v264
  %267 = vset.pattern.permute.xlu0 0
  %268 = vperm.xlu0 %267, %v74
  %v269 = vpop.permute.xlu0 %268
  %v271 = vmul.f32 %v265, %v269
  %273 = vset.pattern.permute.xlu0 0
  %274 = vperm.xlu0 %273, %v75
  %v275 = vpop.permute.xlu0 %274
  %v277 = vadd.f32 %v271, %v275
  %v278 = vmax.f32 %v277, 0.0
  %v279 = vmul.f32 %v278, %v151
  %v280 = vld [vmem:[%s1] sm:$0xff]
  %v281 = vld [vmem:[%s9] sm:$0xff]
  %v282 = vld [vmem:[%s10] sm:$0xff]
  %v283 = vld [vmem:[%s11] sm:$0xff]
  %v284 = vld [vmem:[%s12] sm:$0xff]
  %v285 = vld [vmem:[%s13] sm:$0xff]
  %v286 = vld [vmem:[%s14] sm:$0xff]
  %287 = vrot.lane.b32.xlu0 %v280, 5
  %v288 = vpop.permute.xlu0 %287
  %290 = vset.pattern.permute.xlu0 0
  %291 = vperm.xlu0 %290, %v281
  %v292 = vpop.permute.xlu0 %291
  %v294 = vmul.f32 %v288, %v292
  %v295 = vadd.f32 %v294, 0.0
  %296 = vrot.lane.b32.xlu0 %v280, 4
  %v297 = vpop.permute.xlu0 %296
  %298 = vset.pattern.permute.xlu0 1
  %299 = vperm.xlu0 %298, %v281
  %v300 = vpop.permute.xlu0 %299
  %v302 = vmul.f32 %v297, %v300
  %v303 = vadd.f32 %v295, %v302
  %304 = vrot.lane.b32.xlu0 %v280, 3
  %v305 = vpop.permute.xlu0 %304
  %306 = vset.pattern.permute.xlu0 2
  %307 = vperm.xlu0 %306, %v281
  %v308 = vpop.permute.xlu0 %307
  %v310 = vmul.f32 %v305, %v308
  %v311 = vadd.f32 %v303, %v310
  %312 = vrot.lane.b32.xlu0 %v280, 1
  %v313 = vpop.permute.xlu0 %312
  %314 = vset.pattern.permute.xlu0 3
  %315 = vperm.xlu0 %314, %v281
  %v316 = vpop.permute.xlu0 %315
  %v318 = vmul.f32 %v313, %v316
  %v319 = vadd.f32 %v311, %v318
  %320 = vset.pattern.permute.xlu0 4
  %321 = vperm.xlu0 %320, %v281
  %v322 = vpop.permute.xlu0 %321
  %v324 = vmul.f32 %v280, %v322
  %v325 = vadd.f32 %v319, %v324
  %326 = vrot.lane.b32.xlu0 %v280, 127
  %v327 = vpop.permute.xlu0 %326
  %328 = vset.pattern.permute.xlu0 5
  %329 = vperm.xlu0 %328, %v281
  %v330 = vpop.permute.xlu0 %329
  %v332 = vmul.f32 %v327, %v330
  %v333 = vadd.f32 %v325, %v332
  %334 = vrot.lane.b32.xlu0 %v280, 125
  %v335 = vpop.permute.xlu0 %334
  %336 = vset.pattern.permute.xlu0 6
  %337 = vperm.xlu0 %336, %v281
  %v338 = vpop.permute.xlu0 %337
  %v340 = vmul.f32 %v335, %v338
  %v341 = vadd.f32 %v333, %v340
  %342 = vrot.lane.b32.xlu0 %v280, 124
  %v343 = vpop.permute.xlu0 %342
  %344 = vset.pattern.permute.xlu0 7
  %345 = vperm.xlu0 %344, %v281
  %v346 = vpop.permute.xlu0 %345
  %v348 = vmul.f32 %v343, %v346
  %v349 = vadd.f32 %v341, %v348
  %350 = vrot.lane.b32.xlu0 %v280, 123
  %v351 = vpop.permute.xlu0 %350
  %352 = vset.pattern.permute.xlu0 8
  %353 = vperm.xlu0 %352, %v281
  %v354 = vpop.permute.xlu0 %353
  %v356 = vmul.f32 %v351, %v354
  %v357 = vadd.f32 %v349, %v356
  %v358 = vmul.f32 %v357, %v151
  %359 = vadd.xlane.f32.xlu0 %v358
  %v360 = vpop.xlane.xlu0 %359
  %v361 = vmul.f32 %v360, 0.125
  %v362 = vsub.f32 %v357, %v361
  %v363 = vmul.f32 %v362, %v151
  %v364 = vmul.f32 %v363, %v363
  %365 = vadd.xlane.f32.xlu0 %v364
  %v366 = vpop.xlane.xlu0 %365
  %v367 = vmul.f32 %v366, 0.125
  %v368 = vadd.f32 %v367, 1e-05
  %v369 = vrsqrt.pop %v368
  %v370 = vmul.f32 %v362, %v369
  %372 = vset.pattern.permute.xlu0 0
  %373 = vperm.xlu0 %372, %v282
  %v374 = vpop.permute.xlu0 %373
  %v376 = vmul.f32 %v370, %v374
  %378 = vset.pattern.permute.xlu0 0
  %379 = vperm.xlu0 %378, %v283
  %v380 = vpop.permute.xlu0 %379
  %v382 = vadd.f32 %v376, %v380
  %v383 = vmax.f32 %v382, 0.0
  %v385 = vsel %vm179, %v284, 0
  %387 = vmatprep.subr.mxu0 0.0
  %388 = vmatpush1.msra.mxu0 0.0
  %389 = vmatprep.subr.mxu0 0.0
  %390 = vmatpush1.msra.mxu0 0.0
  %391 = vmatprep.subr.mxu0 0.0
  %392 = vmatpush1.msra.mxu0 0.0
  %393 = vmatprep.subr.mxu0 0.0
  %394 = vmatpush1.msra.mxu0 0.0
  %395 = vmatprep.subr.mxu0 0.0
  %396 = vmatpush1.msra.mxu0 0.0
  %397 = vmatprep.subr.mxu0 0.0
  %398 = vmatpush1.msra.mxu0 0.0
  %399 = vmatprep.subr.mxu0 0.0
  %400 = vmatpush1.msra.mxu0 0.0
  %401 = vmatprep.subr.mxu0 0.0
  %402 = vmatpush1.msra.mxu0 0.0
  %403 = vmatprep.subr.mxu0 0.0
  %404 = vmatpush1.msra.mxu0 0.0
  %405 = vmatprep.subr.mxu0 0.0
  %406 = vmatpush1.msra.mxu0 0.0
  %407 = vmatprep.subr.mxu0 0.0
  %408 = vmatpush1.msra.mxu0 0.0
  %409 = vmatprep.subr.mxu0 0.0
  %410 = vmatpush1.msra.mxu0 0.0
  %411 = vmatprep.subr.mxu0 0.0
  %412 = vmatpush1.msra.mxu0 0.0
  %413 = vmatprep.subr.mxu0 0.0
  %414 = vmatpush1.msra.mxu0 0.0
  %415 = vmatprep.subr.mxu0 0.0
  %416 = vmatpush1.msra.mxu0 0.0
  %417 = vmatprep.subr.mxu0 0.0
  %418 = vmatpush1.msra.mxu0 %v383
  %419 = vmatprep.subr.mxu0 0.0
  %420 = vmatpush2.msra.mxu0 0.0
  %421 = vmatprep.subr.mxu0 0.0
  %422 = vmatpush2.msra.mxu0 0.0
  %423 = vmatprep.subr.mxu0 0.0
  %424 = vmatpush2.msra.mxu0 0.0
  %425 = vmatprep.subr.mxu0 0.0
  %426 = vmatpush2.msra.mxu0 0.0
  %427 = vmatprep.subr.mxu0 0.0
  %428 = vmatpush2.msra.mxu0 0.0
  %429 = vmatprep.subr.mxu0 0.0
  %430 = vmatpush2.msra.mxu0 0.0
  %431 = vmatprep.subr.mxu0 0.0
  %432 = vmatpush2.msra.mxu0 0.0
  %433 = vmatprep.subr.mxu0 0.0
  %434 = vmatpush2.msra.mxu0 0.0
  %435 = vmatprep.subr.mxu0 0.0
  %436 = vmatpush2.msra.mxu0 0.0
  %437 = vmatprep.subr.mxu0 0.0
  %438 = vmatpush2.msra.mxu0 0.0
  %439 = vmatprep.subr.mxu0 0.0
  %440 = vmatpush2.msra.mxu0 0.0
  %441 = vmatprep.subr.mxu0 0.0
  %442 = vmatpush2.msra.mxu0 0.0
  %443 = vmatprep.subr.mxu0 0.0
  %444 = vmatpush2.msra.mxu0 0.0
  %445 = vmatprep.subr.mxu0 0.0
  %446 = vmatpush2.msra.mxu0 0.0
  %447 = vmatprep.subr.mxu0 0.0
  %448 = vmatpush2.msra.mxu0 0.0
  %449 = vmatprep.subr.mxu0 0.0
  %450 = vmatpush2.msra.mxu0 0.0
  %451 = vmatprep.mubr.f32.mxu0 0.0
  %452 = vmatmul.mubr.f32.gmra.mxu0 %v385
  %v453 = vpop.f32.mrf.mxu0
  %v454 = vadd.f32 0.0, %v453
  %v455 = vpop.f32.mrf.mxu0
  %456 = vdwg.mxu0
  %v457 = vmul.f32 %v454, %v151
  %458 = vadd.xlane.f32.xlu0 %v457
  %v459 = vpop.xlane.xlu0 %458
  %v460 = vmul.f32 %v459, 0.125
  %v461 = vsub.f32 %v454, %v460
  %v462 = vmul.f32 %v461, %v151
  %v463 = vmul.f32 %v462, %v462
  %464 = vadd.xlane.f32.xlu0 %v463
  %v465 = vpop.xlane.xlu0 %464
  %v466 = vmul.f32 %v465, 0.125
  %v467 = vadd.f32 %v466, 1e-05
  %v468 = vrsqrt.pop %v467
  %v469 = vmul.f32 %v461, %v468
  %471 = vset.pattern.permute.xlu0 0
  %472 = vperm.xlu0 %471, %v285
  %v473 = vpop.permute.xlu0 %472
  %v475 = vmul.f32 %v469, %v473
  %477 = vset.pattern.permute.xlu0 0
  %478 = vperm.xlu0 %477, %v286
  %v479 = vpop.permute.xlu0 %478
  %v481 = vadd.f32 %v475, %v479
  %v482 = vmax.f32 %v481, 0.0
  %v483 = vmul.f32 %v482, %v151
  %v484 = vld [vmem:[%s15] sm:$0xff]
  %v485 = vld [vmem:[%s15 + $0x8] sm:$0xff]
  %v486 = vld [vmem:[%s16] sm:$0xff]
  %v487 = vld [vmem:[%s16 + $0x8] sm:$0xff]
  %v488 = vld [vmem:[%s17] sm:$0xff]
  %v489 = vld [vmem:[%s17 + $0x8] sm:$0xff]
  %v490 = vld [vmem:[%s18] sm:$0xff]
  %491 = vrot.lane.b32.xlu0 %v279, 5
  %v492 = vpop.permute.xlu0 %491
  %494 = vset.pattern.permute.xlu0 0
  %495 = vperm.xlu0 %494, %v484
  %v496 = vpop.permute.xlu0 %495
  %v498 = vmul.f32 %v492, %v496
  %v499 = vadd.f32 %v498, 0.0
  %500 = vrot.lane.b32.xlu0 %v279, 4
  %v501 = vpop.permute.xlu0 %500
  %502 = vset.pattern.permute.xlu0 1
  %503 = vperm.xlu0 %502, %v484
  %v504 = vpop.permute.xlu0 %503
  %v506 = vmul.f32 %v501, %v504
  %v507 = vadd.f32 %v499, %v506
  %508 = vrot.lane.b32.xlu0 %v279, 3
  %v509 = vpop.permute.xlu0 %508
  %510 = vset.pattern.permute.xlu0 2
  %511 = vperm.xlu0 %510, %v484
  %v512 = vpop.permute.xlu0 %511
  %v514 = vmul.f32 %v509, %v512
  %v515 = vadd.f32 %v507, %v514
  %516 = vrot.lane.b32.xlu0 %v279, 1
  %v517 = vpop.permute.xlu0 %516
  %518 = vset.pattern.permute.xlu0 3
  %519 = vperm.xlu0 %518, %v484
  %v520 = vpop.permute.xlu0 %519
  %v522 = vmul.f32 %v517, %v520
  %v523 = vadd.f32 %v515, %v522
  %524 = vset.pattern.permute.xlu0 4
  %525 = vperm.xlu0 %524, %v484
  %v526 = vpop.permute.xlu0 %525
  %v528 = vmul.f32 %v279, %v526
  %v529 = vadd.f32 %v523, %v528
  %530 = vrot.lane.b32.xlu0 %v279, 127
  %v531 = vpop.permute.xlu0 %530
  %532 = vset.pattern.permute.xlu0 5
  %533 = vperm.xlu0 %532, %v484
  %v534 = vpop.permute.xlu0 %533
  %v536 = vmul.f32 %v531, %v534
  %v537 = vadd.f32 %v529, %v536
  %538 = vrot.lane.b32.xlu0 %v279, 125
  %v539 = vpop.permute.xlu0 %538
  %540 = vset.pattern.permute.xlu0 6
  %541 = vperm.xlu0 %540, %v484
  %v542 = vpop.permute.xlu0 %541
  %v544 = vmul.f32 %v539, %v542
  %v545 = vadd.f32 %v537, %v544
  %546 = vrot.lane.b32.xlu0 %v279, 124
  %v547 = vpop.permute.xlu0 %546
  %548 = vset.pattern.permute.xlu0 7
  %549 = vperm.xlu0 %548, %v484
  %v550 = vpop.permute.xlu0 %549
  %v552 = vmul.f32 %v547, %v550
  %v553 = vadd.f32 %v545, %v552
  %554 = vrot.lane.b32.xlu0 %v279, 123
  %v555 = vpop.permute.xlu0 %554
  %556 = vset.pattern.permute.xlu0 8
  %557 = vperm.xlu0 %556, %v484
  %v558 = vpop.permute.xlu0 %557
  %v560 = vmul.f32 %v555, %v558
  %v561 = vadd.f32 %v553, %v560
  %v562 = vmul.f32 %v561, %v151
  %563 = vadd.xlane.f32.xlu0 %v562
  %v564 = vpop.xlane.xlu0 %563
  %v565 = vmul.f32 %v564, 0.125
  %v566 = vsub.f32 %v561, %v565
  %v567 = vmul.f32 %v566, %v151
  %v568 = vmul.f32 %v567, %v567
  %569 = vadd.xlane.f32.xlu0 %v568
  %v570 = vpop.xlane.xlu0 %569
  %v571 = vmul.f32 %v570, 0.125
  %v572 = vadd.f32 %v571, 1e-05
  %v573 = vrsqrt.pop %v572
  %v574 = vmul.f32 %v566, %v573
  %576 = vset.pattern.permute.xlu0 0
  %577 = vperm.xlu0 %576, %v486
  %v578 = vpop.permute.xlu0 %577
  %v580 = vmul.f32 %v574, %v578
  %582 = vset.pattern.permute.xlu0 0
  %583 = vperm.xlu0 %582, %v488
  %v584 = vpop.permute.xlu0 %583
  %v586 = vadd.f32 %v580, %v584
  %v587 = vmax.f32 %v586, 0.0
  %588 = vrot.lane.b32.xlu0 %v483, 5
  %v589 = vpop.permute.xlu0 %588
  %591 = vset.pattern.permute.xlu0 0
  %592 = vperm.xlu0 %591, %v485
  %v593 = vpop.permute.xlu0 %592
  %v595 = vmul.f32 %v589, %v593
  %v596 = vadd.f32 %v595, 0.0
  %597 = vrot.lane.b32.xlu0 %v483, 4
  %v598 = vpop.permute.xlu0 %597
  %599 = vset.pattern.permute.xlu0 1
  %600 = vperm.xlu0 %599, %v485
  %v601 = vpop.permute.xlu0 %600
  %v603 = vmul.f32 %v598, %v601
  %v604 = vadd.f32 %v596, %v603
  %605 = vrot.lane.b32.xlu0 %v483, 3
  %v606 = vpop.permute.xlu0 %605
  %607 = vset.pattern.permute.xlu0 2
  %608 = vperm.xlu0 %607, %v485
  %v609 = vpop.permute.xlu0 %608
  %v611 = vmul.f32 %v606, %v609
  %v612 = vadd.f32 %v604, %v611
  %613 = vrot.lane.b32.xlu0 %v483, 1
  %v614 = vpop.permute.xlu0 %613
  %615 = vset.pattern.permute.xlu0 3
  %616 = vperm.xlu0 %615, %v485
  %v617 = vpop.permute.xlu0 %616
  %v619 = vmul.f32 %v614, %v617
  %v620 = vadd.f32 %v612, %v619
  %621 = vset.pattern.permute.xlu0 4
  %622 = vperm.xlu0 %621, %v485
  %v623 = vpop.permute.xlu0 %622
  %v625 = vmul.f32 %v483, %v623
  %v626 = vadd.f32 %v620, %v625
  %627 = vrot.lane.b32.xlu0 %v483, 127
  %v628 = vpop.permute.xlu0 %627
  %629 = vset.pattern.permute.xlu0 5
  %630 = vperm.xlu0 %629, %v485
  %v631 = vpop.permute.xlu0 %630
  %v633 = vmul.f32 %v628, %v631
  %v634 = vadd.f32 %v626, %v633
  %635 = vrot.lane.b32.xlu0 %v483, 125
  %v636 = vpop.permute.xlu0 %635
  %637 = vset.pattern.permute.xlu0 6
  %638 = vperm.xlu0 %637, %v485
  %v639 = vpop.permute.xlu0 %638
  %v641 = vmul.f32 %v636, %v639
  %v642 = vadd.f32 %v634, %v641
  %643 = vrot.lane.b32.xlu0 %v483, 124
  %v644 = vpop.permute.xlu0 %643
  %645 = vset.pattern.permute.xlu0 7
  %646 = vperm.xlu0 %645, %v485
  %v647 = vpop.permute.xlu0 %646
  %v649 = vmul.f32 %v644, %v647
  %v650 = vadd.f32 %v642, %v649
  %651 = vrot.lane.b32.xlu0 %v483, 123
  %v652 = vpop.permute.xlu0 %651
  %653 = vset.pattern.permute.xlu0 8
  %654 = vperm.xlu0 %653, %v485
  %v655 = vpop.permute.xlu0 %654
  %v657 = vmul.f32 %v652, %v655
  %v658 = vadd.f32 %v650, %v657
  %v659 = vmul.f32 %v658, %v151
  %660 = vadd.xlane.f32.xlu0 %v659
  %v661 = vpop.xlane.xlu0 %660
  %v662 = vmul.f32 %v661, 0.125
  %v663 = vsub.f32 %v658, %v662
  %v664 = vmul.f32 %v663, %v151
  %v665 = vmul.f32 %v664, %v664
  %666 = vadd.xlane.f32.xlu0 %v665
  %v667 = vpop.xlane.xlu0 %666
  %v668 = vmul.f32 %v667, 0.125
  %v669 = vadd.f32 %v668, 1e-05
  %v670 = vrsqrt.pop %v669
  %v671 = vmul.f32 %v663, %v670
  %673 = vset.pattern.permute.xlu0 0
  %674 = vperm.xlu0 %673, %v487
  %v675 = vpop.permute.xlu0 %674
  %v677 = vmul.f32 %v671, %v675
  %679 = vset.pattern.permute.xlu0 0
  %680 = vperm.xlu0 %679, %v489
  %v681 = vpop.permute.xlu0 %680
  %v683 = vadd.f32 %v677, %v681
  %v684 = vmax.f32 %v683, 0.0
  %686 = vrot.lane.b32.xlu0 %v490, 120
  %v687 = vpop.permute.xlu0 %686
  %v688 = vsel %vm179, %v687, 0
  %690 = vmatprep.subr.mxu0 0.0
  %691 = vmatpush1.msra.mxu0 0.0
  %692 = vmatprep.subr.mxu0 0.0
  %693 = vmatpush1.msra.mxu0 0.0
  %694 = vmatprep.subr.mxu0 0.0
  %695 = vmatpush1.msra.mxu0 0.0
  %696 = vmatprep.subr.mxu0 0.0
  %697 = vmatpush1.msra.mxu0 0.0
  %698 = vmatprep.subr.mxu0 0.0
  %699 = vmatpush1.msra.mxu0 0.0
  %700 = vmatprep.subr.mxu0 0.0
  %701 = vmatpush1.msra.mxu0 0.0
  %702 = vmatprep.subr.mxu0 0.0
  %703 = vmatpush1.msra.mxu0 0.0
  %704 = vmatprep.subr.mxu0 0.0
  %705 = vmatpush1.msra.mxu0 0.0
  %706 = vmatprep.subr.mxu0 0.0
  %707 = vmatpush1.msra.mxu0 0.0
  %708 = vmatprep.subr.mxu0 0.0
  %709 = vmatpush1.msra.mxu0 0.0
  %710 = vmatprep.subr.mxu0 0.0
  %711 = vmatpush1.msra.mxu0 0.0
  %712 = vmatprep.subr.mxu0 0.0
  %713 = vmatpush1.msra.mxu0 0.0
  %714 = vmatprep.subr.mxu0 0.0
  %715 = vmatpush1.msra.mxu0 0.0
  %716 = vmatprep.subr.mxu0 0.0
  %717 = vmatpush1.msra.mxu0 0.0
  %718 = vmatprep.subr.mxu0 0.0
  %719 = vmatpush1.msra.mxu0 0.0
  %720 = vmatprep.subr.mxu0 0.0
  %721 = vmatpush1.msra.mxu0 %v684
  %722 = vmatprep.subr.mxu0 0.0
  %723 = vmatpush2.msra.mxu0 0.0
  %724 = vmatprep.subr.mxu0 0.0
  %725 = vmatpush2.msra.mxu0 0.0
  %726 = vmatprep.subr.mxu0 0.0
  %727 = vmatpush2.msra.mxu0 0.0
  %728 = vmatprep.subr.mxu0 0.0
  %729 = vmatpush2.msra.mxu0 0.0
  %730 = vmatprep.subr.mxu0 0.0
  %731 = vmatpush2.msra.mxu0 0.0
  %732 = vmatprep.subr.mxu0 0.0
  %733 = vmatpush2.msra.mxu0 0.0
  %734 = vmatprep.subr.mxu0 0.0
  %735 = vmatpush2.msra.mxu0 0.0
  %736 = vmatprep.subr.mxu0 0.0
  %737 = vmatpush2.msra.mxu0 0.0
  %738 = vmatprep.subr.mxu0 0.0
  %739 = vmatpush2.msra.mxu0 0.0
  %740 = vmatprep.subr.mxu0 0.0
  %741 = vmatpush2.msra.mxu0 0.0
  %742 = vmatprep.subr.mxu0 0.0
  %743 = vmatpush2.msra.mxu0 0.0
  %744 = vmatprep.subr.mxu0 0.0
  %745 = vmatpush2.msra.mxu0 0.0
  %746 = vmatprep.subr.mxu0 0.0
  %747 = vmatpush2.msra.mxu0 0.0
  %748 = vmatprep.subr.mxu0 0.0
  %749 = vmatpush2.msra.mxu0 0.0
  %750 = vmatprep.subr.mxu0 0.0
  %751 = vmatpush2.msra.mxu0 0.0
  %752 = vmatprep.subr.mxu0 0.0
  %753 = vmatpush2.msra.mxu0 0.0
  %754 = vmatprep.mubr.f32.mxu0 0.0
  %755 = vmatmul.mubr.f32.gmra.mxu0 %v688
  %v756 = vpop.f32.mrf.mxu0
  %v757 = vadd.f32 0.0, %v756
  %v758 = vpop.f32.mrf.mxu0
  %759 = vdwg.mxu0
  %v760 = vsel %vm179, %v490, 0
  %762 = vmatprep.subr.mxu0 0.0
  %763 = vmatpush1.msra.mxu0 0.0
  %764 = vmatprep.subr.mxu0 0.0
  %765 = vmatpush1.msra.mxu0 0.0
  %766 = vmatprep.subr.mxu0 0.0
  %767 = vmatpush1.msra.mxu0 0.0
  %768 = vmatprep.subr.mxu0 0.0
  %769 = vmatpush1.msra.mxu0 0.0
  %770 = vmatprep.subr.mxu0 0.0
  %771 = vmatpush1.msra.mxu0 0.0
  %772 = vmatprep.subr.mxu0 0.0
  %773 = vmatpush1.msra.mxu0 0.0
  %774 = vmatprep.subr.mxu0 0.0
  %775 = vmatpush1.msra.mxu0 0.0
  %776 = vmatprep.subr.mxu0 0.0
  %777 = vmatpush1.msra.mxu0 0.0
  %778 = vmatprep.subr.mxu0 0.0
  %779 = vmatpush1.msra.mxu0 0.0
  %780 = vmatprep.subr.mxu0 0.0
  %781 = vmatpush1.msra.mxu0 0.0
  %782 = vmatprep.subr.mxu0 0.0
  %783 = vmatpush1.msra.mxu0 0.0
  %784 = vmatprep.subr.mxu0 0.0
  %785 = vmatpush1.msra.mxu0 0.0
  %786 = vmatprep.subr.mxu0 0.0
  %787 = vmatpush1.msra.mxu0 0.0
  %788 = vmatprep.subr.mxu0 0.0
  %789 = vmatpush1.msra.mxu0 0.0
  %790 = vmatprep.subr.mxu0 0.0
  %791 = vmatpush1.msra.mxu0 0.0
  %792 = vmatprep.subr.mxu0 0.0
  %793 = vmatpush1.msra.mxu0 %v587
  %794 = vmatprep.subr.mxu0 0.0
  %795 = vmatpush2.msra.mxu0 0.0
  %796 = vmatprep.subr.mxu0 0.0
  %797 = vmatpush2.msra.mxu0 0.0
  %798 = vmatprep.subr.mxu0 0.0
  %799 = vmatpush2.msra.mxu0 0.0
  %800 = vmatprep.subr.mxu0 0.0
  %801 = vmatpush2.msra.mxu0 0.0
  %802 = vmatprep.subr.mxu0 0.0
  %803 = vmatpush2.msra.mxu0 0.0
  %804 = vmatprep.subr.mxu0 0.0
  %805 = vmatpush2.msra.mxu0 0.0
  %806 = vmatprep.subr.mxu0 0.0
  %807 = vmatpush2.msra.mxu0 0.0
  %808 = vmatprep.subr.mxu0 0.0
  %809 = vmatpush2.msra.mxu0 0.0
  %810 = vmatprep.subr.mxu0 0.0
  %811 = vmatpush2.msra.mxu0 0.0
  %812 = vmatprep.subr.mxu0 0.0
  %813 = vmatpush2.msra.mxu0 0.0
  %814 = vmatprep.subr.mxu0 0.0
  %815 = vmatpush2.msra.mxu0 0.0
  %816 = vmatprep.subr.mxu0 0.0
  %817 = vmatpush2.msra.mxu0 0.0
  %818 = vmatprep.subr.mxu0 0.0
  %819 = vmatpush2.msra.mxu0 0.0
  %820 = vmatprep.subr.mxu0 0.0
  %821 = vmatpush2.msra.mxu0 0.0
  %822 = vmatprep.subr.mxu0 0.0
  %823 = vmatpush2.msra.mxu0 0.0
  %824 = vmatprep.subr.mxu0 0.0
  %825 = vmatpush2.msra.mxu0 0.0
  %826 = vmatprep.mubr.f32.mxu0 0.0
  %827 = vmatmul.mubr.f32.gmra.mxu0 %v760
  %v828 = vpop.f32.mrf.mxu0
  %v829 = vadd.f32 %v757, %v828
  %v830 = vpop.f32.mrf.mxu0
  %831 = vdwg.mxu0
  %v832 = vld [vmem:[%s19] sm:$0xff]
  %v833 = vld [vmem:[%s20] sm:$0xff]
  %v834 = vmul.f32 %v829, %v151
  %835 = vadd.xlane.f32.xlu0 %v834
  %v836 = vpop.xlane.xlu0 %835
  %v837 = vmul.f32 %v836, 0.125
  %v838 = vsub.f32 %v829, %v837
  %v839 = vmul.f32 %v838, %v151
  %v840 = vmul.f32 %v839, %v839
  %841 = vadd.xlane.f32.xlu0 %v840
  %v842 = vpop.xlane.xlu0 %841
  %v843 = vmul.f32 %v842, 0.125
  %v844 = vadd.f32 %v843, 1e-05
  %v845 = vrsqrt.pop %v844
  %v846 = vmul.f32 %v838, %v845
  %848 = vset.pattern.permute.xlu0 0
  %849 = vperm.xlu0 %848, %v832
  %v850 = vpop.permute.xlu0 %849
  %v852 = vmul.f32 %v846, %v850
  %854 = vset.pattern.permute.xlu0 0
  %855 = vperm.xlu0 %854, %v833
  %v856 = vpop.permute.xlu0 %855
  %v858 = vadd.f32 %v852, %v856
  %v859 = vmax.f32 %v858, 0.0
  %860 = vst [vmem:[%s21] sm:$0xff] %v859
  // Predicated region
  $region86: #{fdw_v2_forward.2} parent=0 // pred_check
    _
  $region87: #{fdw_v2_forward.2} parent=0 // pred_check_branch
    %862 = sbr.rel (0) target = $region89
  $region88: #{fdw_v2_forward.2} parent=0 // pred_region
    _
  $region89: #{fdw_v2_forward.2} parent=0 // pred_fallthru
    _
  // Predicated region
  $region90: #{fdw_v2_forward.2} parent=0 // pred_check
    _
  $region91: #{fdw_v2_forward.2} parent=0 // pred_check_branch
    %864 = sbr.rel (0) target = $region93
  $region92: #{fdw_v2_forward.2} parent=0 // pred_region
    _
  $region93: #{fdw_v2_forward.2} parent=0 // pred_fallthru
    _

// kernel: fdw_v2_forward.3
$region0: #{fdw_v2_forward.3}
  #allocation0 [shape = 'u32[]', space=smem, size = 0x4, offset = 0x4, fixed_abs, tag = 'smem constant byte address 0x4 - core index']
  #allocation1 [shape = 'u32[144,128]{1,0:T(1,128)}', space=vmem, size = 0x12000, scoped, tag = 'internal scratch']
  %s0 = inlined_call_operand.vmem [shape: f32[8,768], index: 0, kind: input, shape index: {}]
  %s1 = inlined_call_operand.vmem [shape: f32[8,768], index: 1, kind: input, shape index: {}]
  %s2 = inlined_call_operand.vmem [shape: f32[8,768], index: 2, kind: input, shape index: {}]
  %s3 = inlined_call_operand.vmem [shape: f32[8,768], index: 3, kind: input, shape index: {}]
  %s4 = inlined_call_operand.vmem [shape: f32[1,768], index: 4, kind: input, shape index: {}]
  %s5 = inlined_call_operand.vmem [shape: f32[8,9], index: 5, kind: input, shape index: {}]
  %s6 = inlined_call_operand.vmem [shape: f32[8,1], index: 6, kind: input, shape index: {}]
  %s7 = inlined_call_operand.vmem [shape: f32[8,1], index: 7, kind: input, shape index: {}]
  %s8 = inlined_call_operand.vmem [shape: f32[8,8], index: 8, kind: input, shape index: {}]
  %s9 = inlined_call_operand.vmem [shape: f32[8,1], index: 9, kind: input, shape index: {}]
  %s10 = inlined_call_operand.vmem [shape: f32[8,1], index: 10, kind: input, shape index: {}]
  %s11 = inlined_call_operand.vmem [shape: f32[8,9], index: 11, kind: input, shape index: {}]
  %s12 = inlined_call_operand.vmem [shape: f32[8,1], index: 12, kind: input, shape index: {}]
  %s13 = inlined_call_operand.vmem [shape: f32[8,1], index: 13, kind: input, shape index: {}]
  %s14 = inlined_call_operand.vmem [shape: f32[8,8], index: 14, kind: input, shape index: {}]
  %s15 = inlined_call_operand.vmem [shape: f32[8,1], index: 15, kind: input, shape index: {}]
  %s16 = inlined_call_operand.vmem [shape: f32[8,1], index: 16, kind: input, shape index: {}]
  %s17 = inlined_call_operand.vmem [shape: f32[8,9], index: 17, kind: input, shape index: {}]
  %s18 = inlined_call_operand.vmem [shape: f32[8,1], index: 18, kind: input, shape index: {}]
  %s19 = inlined_call_operand.vmem [shape: f32[8,1], index: 19, kind: input, shape index: {}]
  %s20 = inlined_call_operand.vmem [shape: f32[8,8], index: 20, kind: input, shape index: {}]
  %s21 = inlined_call_operand.vmem [shape: f32[8,1], index: 21, kind: input, shape index: {}]
  %s22 = inlined_call_operand.vmem [shape: f32[8,1], index: 22, kind: input, shape index: {}]
  %s23 = inlined_call_operand.vmem [shape: f32[8,768], index: 23, kind: output, shape index: {}]
  %s24 = sld [smem:[#allocation0]]
  $region102: #{fdw_v2_forward.3} parent=0
    _
  %s26 = ssub.s32 1, %s24
  %s27 = scalar_select 0, %s26, %s24
  // Predicated region
  $region2: #{fdw_v2_forward.3} parent=0 // pred_check
    _
  $region3: #{fdw_v2_forward.3} parent=0 // pred_check_branch
    %29 = sbr.rel (0) target = $region5
  $region4: #{fdw_v2_forward.3} parent=0 // pred_region
    _
  $region5: #{fdw_v2_forward.3} parent=0 // pred_fallthru
    _
  // Predicated region
  $region6: #{fdw_v2_forward.3} parent=0 // pred_check
    _
  $region7: #{fdw_v2_forward.3} parent=0 // pred_check_branch
    %31 = sbr.rel (0) target = $region9
  $region8: #{fdw_v2_forward.3} parent=0 // pred_region
    _
  $region9: #{fdw_v2_forward.3} parent=0 // pred_fallthru
    _
  // Predicated region
  $region10: #{fdw_v2_forward.3} parent=0 // pred_check
    _
  $region11: #{fdw_v2_forward.3} parent=0 // pred_check_branch
    %33 = sbr.rel (0) target = $region13
  $region12: #{fdw_v2_forward.3} parent=0 // pred_region
    _
  $region13: #{fdw_v2_forward.3} parent=0 // pred_fallthru
    _
  // Predicated region
  $region14: #{fdw_v2_forward.3} parent=0 // pred_check
    _
  $region15: #{fdw_v2_forward.3} parent=0 // pred_check_branch
    %35 = sbr.rel (0) target = $region17
  $region16: #{fdw_v2_forward.3} parent=0 // pred_region
    _
  $region17: #{fdw_v2_forward.3} parent=0 // pred_fallthru
    _
  // Predicated region
  $region18: #{fdw_v2_forward.3} parent=0 // pred_check
    _
  $region19: #{fdw_v2_forward.3} parent=0 // pred_check_branch
    %37 = sbr.rel (0) target = $region21
  $region20: #{fdw_v2_forward.3} parent=0 // pred_region
    _
  $region21: #{fdw_v2_forward.3} parent=0 // pred_fallthru
    _
  // Predicated region
  $region22: #{fdw_v2_forward.3} parent=0 // pred_check
    _
  $region23: #{fdw_v2_forward.3} parent=0 // pred_check_branch
    %39 = sbr.rel (0) target = $region25
  $region24: #{fdw_v2_forward.3} parent=0 // pred_region
    _
  $region25: #{fdw_v2_forward.3} parent=0 // pred_fallthru
    _
  // Predicated region
  $region26: #{fdw_v2_forward.3} parent=0 // pred_check
    _
  $region27: #{fdw_v2_forward.3} parent=0 // pred_check_branch
    %41 = sbr.rel (0) target = $region29
  $region28: #{fdw_v2_forward.3} parent=0 // pred_region
    _
  $region29: #{fdw_v2_forward.3} parent=0 // pred_fallthru
    _
  // Predicated region
  $region30: #{fdw_v2_forward.3} parent=0 // pred_check
    _
  $region31: #{fdw_v2_forward.3} parent=0 // pred_check_branch
    %43 = sbr.rel (0) target = $region33
  $region32: #{fdw_v2_forward.3} parent=0 // pred_region
    _
  $region33: #{fdw_v2_forward.3} parent=0 // pred_fallthru
    _
  // Predicated region
  $region34: #{fdw_v2_forward.3} parent=0 // pred_check
    _
  $region35: #{fdw_v2_forward.3} parent=0 // pred_check_branch
    %45 = sbr.rel (0) target = $region37
  $region36: #{fdw_v2_forward.3} parent=0 // pred_region
    _
  $region37: #{fdw_v2_forward.3} parent=0 // pred_fallthru
    _
  // Predicated region
  $region38: #{fdw_v2_forward.3} parent=0 // pred_check
    _
  $region39: #{fdw_v2_forward.3} parent=0 // pred_check_branch
    %47 = sbr.rel (0) target = $region41
  $region40: #{fdw_v2_forward.3} parent=0 // pred_region
    _
  $region41: #{fdw_v2_forward.3} parent=0 // pred_fallthru
    _
  // Predicated region
  $region42: #{fdw_v2_forward.3} parent=0 // pred_check
    _
  $region43: #{fdw_v2_forward.3} parent=0 // pred_check_branch
    %49 = sbr.rel (0) target = $region45
  $region44: #{fdw_v2_forward.3} parent=0 // pred_region
    _
  $region45: #{fdw_v2_forward.3} parent=0 // pred_fallthru
    _
  // Predicated region
  $region46: #{fdw_v2_forward.3} parent=0 // pred_check
    _
  $region47: #{fdw_v2_forward.3} parent=0 // pred_check_branch
    %51 = sbr.rel (0) target = $region49
  $region48: #{fdw_v2_forward.3} parent=0 // pred_region
    _
  $region49: #{fdw_v2_forward.3} parent=0 // pred_fallthru
    _
  // Predicated region
  $region50: #{fdw_v2_forward.3} parent=0 // pred_check
    _
  $region51: #{fdw_v2_forward.3} parent=0 // pred_check_branch
    %53 = sbr.rel (0) target = $region53
  $region52: #{fdw_v2_forward.3} parent=0 // pred_region
    _
  $region53: #{fdw_v2_forward.3} parent=0 // pred_fallthru
    _
  // Predicated region
  $region54: #{fdw_v2_forward.3} parent=0 // pred_check
    _
  $region55: #{fdw_v2_forward.3} parent=0 // pred_check_branch
    %55 = sbr.rel (0) target = $region57
  $region56: #{fdw_v2_forward.3} parent=0 // pred_region
    _
  $region57: #{fdw_v2_forward.3} parent=0 // pred_fallthru
    _
  // Predicated region
  $region58: #{fdw_v2_forward.3} parent=0 // pred_check
    _
  $region59: #{fdw_v2_forward.3} parent=0 // pred_check_branch
    %57 = sbr.rel (0) target = $region61
  $region60: #{fdw_v2_forward.3} parent=0 // pred_region
    _
  $region61: #{fdw_v2_forward.3} parent=0 // pred_fallthru
    _
  // Predicated region
  $region62: #{fdw_v2_forward.3} parent=0 // pred_check
    _
  $region63: #{fdw_v2_forward.3} parent=0 // pred_check_branch
    %59 = sbr.rel (0) target = $region65
  $region64: #{fdw_v2_forward.3} parent=0 // pred_region
    _
  $region65: #{fdw_v2_forward.3} parent=0 // pred_fallthru
    _
  // Predicated region
  $region66: #{fdw_v2_forward.3} parent=0 // pred_check
    _
  $region67: #{fdw_v2_forward.3} parent=0 // pred_check_branch
    %61 = sbr.rel (0) target = $region69
  $region68: #{fdw_v2_forward.3} parent=0 // pred_region
    _
  $region69: #{fdw_v2_forward.3} parent=0 // pred_fallthru
    _
  // Predicated region
  $region70: #{fdw_v2_forward.3} parent=0 // pred_check
    _
  $region71: #{fdw_v2_forward.3} parent=0 // pred_check_branch
    %63 = sbr.rel (0) target = $region73
  $region72: #{fdw_v2_forward.3} parent=0 // pred_region
    _
  $region73: #{fdw_v2_forward.3} parent=0 // pred_fallthru
    _
  // Predicated region
  $region74: #{fdw_v2_forward.3} parent=0 // pred_check
    _
  $region75: #{fdw_v2_forward.3} parent=0 // pred_check_branch
    %65 = sbr.rel (0) target = $region77
  $region76: #{fdw_v2_forward.3} parent=0 // pred_region
    _
  $region77: #{fdw_v2_forward.3} parent=0 // pred_fallthru
    _
  // Predicated region
  $region78: #{fdw_v2_forward.3} parent=0 // pred_check
    _
  $region79: #{fdw_v2_forward.3} parent=0 // pred_check_branch
    %67 = sbr.rel (0) target = $region81
  $region80: #{fdw_v2_forward.3} parent=0 // pred_region
    _
  $region81: #{fdw_v2_forward.3} parent=0 // pred_fallthru
    _
  // Predicated region
  $region82: #{fdw_v2_forward.3} parent=0 // pred_check
    _
  $region83: #{fdw_v2_forward.3} parent=0 // pred_check_branch
    %69 = sbr.rel (0) target = $region85
  $region84: #{fdw_v2_forward.3} parent=0 // pred_region
    _
  $region85: #{fdw_v2_forward.3} parent=0 // pred_fallthru
    _
  // Predicated region
  $region86: #{fdw_v2_forward.3} parent=0 // pred_check
    _
  $region87: #{fdw_v2_forward.3} parent=0 // pred_check_branch
    %71 = sbr.rel (0) target = $region89
  $region88: #{fdw_v2_forward.3} parent=0 // pred_region
    _
  $region89: #{fdw_v2_forward.3} parent=0 // pred_fallthru
    _
  // Predicated region
  $region90: #{fdw_v2_forward.3} parent=0 // pred_check
    _
  $region91: #{fdw_v2_forward.3} parent=0 // pred_check_branch
    %73 = sbr.rel (0) target = $region93
  $region92: #{fdw_v2_forward.3} parent=0 // pred_region
    _
  $region93: #{fdw_v2_forward.3} parent=0 // pred_fallthru
    _
  %v74 = vld [vmem:[%s4] sm:$0x3f]
  %v75 = vld [vmem:[%s0] sm:$0xff]
  %v76 = vld [vmem:[%s0 + $0x8] sm:$0xff]
  %v77 = vld [vmem:[%s0 + $0x10] sm:$0xff]
  %v78 = vld [vmem:[%s0 + $0x18] sm:$0xff]
  %v79 = vld [vmem:[%s0 + $0x20] sm:$0xff]
  %v80 = vld [vmem:[%s0 + $0x28] sm:$0xff]
  %v81 = vld [vmem:[%s5] sm:$0xff]
  %v82 = vld [vmem:[%s6] sm:$0xff]
  %v83 = vld [vmem:[%s7] sm:$0xff]
  %v84 = vld [vmem:[%s8] sm:$0xff]
  %v85 = vld [vmem:[%s9] sm:$0xff]
  %v86 = vld [vmem:[%s10] sm:$0xff]
  %87 = vrot.lane.b32.xlu0 %v75, 19
  %v88 = vpop.permute.xlu0 %87
  %89 = vrot.lane.b32.xlu0 %v76, 19
  %v90 = vpop.permute.xlu0 %89
  %91 = vrot.lane.b32.xlu0 %v77, 19
  %v92 = vpop.permute.xlu0 %91
  %93 = vrot.lane.b32.xlu0 %v78, 19
  %v94 = vpop.permute.xlu0 %93
  %95 = vrot.lane.b32.xlu0 %v79, 19
  %v96 = vpop.permute.xlu0 %95
  %97 = vrot.lane.b32.xlu0 %v80, 19
  %v98 = vpop.permute.xlu0 %97
  %v99 = vlaneseq
  %v100 = vand.u32 %v99, 127
  %vm101 = vcmp.lt.s32.totalorder %v100, 19
  %v102 = vsel %vm101, %v96, %v98
  %v103 = vsel %vm101, %v94, %v96
  %v104 = vsel %vm101, %v92, %v94
  %v105 = vsel %vm101, %v90, %v92
  %v106 = vsel %vm101, %v88, %v90
  %v107 = vsel %vm101, %v98, %v88
  %109 = vset.pattern.permute.xlu0 0
  %110 = vperm.xlu0 %109, %v81
  %v111 = vpop.permute.xlu0 %110
  %v113 = vmul.f32 %v107, %v111
  %v114 = vmul.f32 %v106, %v111
  %v115 = vmul.f32 %v105, %v111
  %v116 = vmul.f32 %v104, %v111
  %v117 = vmul.f32 %v103, %v111
  %v118 = vmul.f32 %v102, %v111
  %v119 = vadd.f32 %v113, 0.0
  %v120 = vadd.f32 %v114, 0.0
  %v121 = vadd.f32 %v115, 0.0
  %v122 = vadd.f32 %v116, 0.0
  %v123 = vadd.f32 %v117, 0.0
  %v124 = vadd.f32 %v118, 0.0
  %125 = vrot.lane.b32.xlu0 %v75, 18
  %v126 = vpop.permute.xlu0 %125
  %127 = vrot.lane.b32.xlu0 %v76, 18
  %v128 = vpop.permute.xlu0 %127
  %129 = vrot.lane.b32.xlu0 %v77, 18
  %v130 = vpop.permute.xlu0 %129
  %131 = vrot.lane.b32.xlu0 %v78, 18
  %v132 = vpop.permute.xlu0 %131
  %133 = vrot.lane.b32.xlu0 %v79, 18
  %v134 = vpop.permute.xlu0 %133
  %135 = vrot.lane.b32.xlu0 %v80, 18
  %v136 = vpop.permute.xlu0 %135
  %vm137 = vcmp.lt.s32.totalorder %v100, 18
  %v138 = vsel %vm137, %v134, %v136
  %v139 = vsel %vm137, %v132, %v134
  %v140 = vsel %vm137, %v130, %v132
  %v141 = vsel %vm137, %v128, %v130
  %v142 = vsel %vm137, %v126, %v128
  %v143 = vsel %vm137, %v136, %v126
  %144 = vset.pattern.permute.xlu0 1
  %145 = vperm.xlu0 %144, %v81
  %v146 = vpop.permute.xlu0 %145
  %v148 = vmul.f32 %v143, %v146
  %v149 = vmul.f32 %v142, %v146
  %v150 = vmul.f32 %v141, %v146
  %v151 = vmul.f32 %v140, %v146
  %v152 = vmul.f32 %v139, %v146
  %v153 = vmul.f32 %v138, %v146
  %v154 = vadd.f32 %v119, %v148
  %v155 = vadd.f32 %v120, %v149
  %v156 = vadd.f32 %v121, %v150
  %v157 = vadd.f32 %v122, %v151
  %v158 = vadd.f32 %v123, %v152
  %v159 = vadd.f32 %v124, %v153
  %160 = vrot.lane.b32.xlu0 %v75, 17
  %v161 = vpop.permute.xlu0 %160
  %162 = vrot.lane.b32.xlu0 %v76, 17
  %v163 = vpop.permute.xlu0 %162
  %164 = vrot.lane.b32.xlu0 %v77, 17
  %v165 = vpop.permute.xlu0 %164
  %166 = vrot.lane.b32.xlu0 %v78, 17
  %v167 = vpop.permute.xlu0 %166
  %168 = vrot.lane.b32.xlu0 %v79, 17
  %v169 = vpop.permute.xlu0 %168
  %170 = vrot.lane.b32.xlu0 %v80, 17
  %v171 = vpop.permute.xlu0 %170
  %vm172 = vcmp.lt.s32.totalorder %v100, 17
  %v173 = vsel %vm172, %v169, %v171
  %v174 = vsel %vm172, %v167, %v169
  %v175 = vsel %vm172, %v165, %v167
  %v176 = vsel %vm172, %v163, %v165
  %v177 = vsel %vm172, %v161, %v163
  %v178 = vsel %vm172, %v171, %v161
  %179 = vset.pattern.permute.xlu0 2
  %180 = vperm.xlu0 %179, %v81
  %v181 = vpop.permute.xlu0 %180
  %v183 = vmul.f32 %v178, %v181
  %v184 = vmul.f32 %v177, %v181
  %v185 = vmul.f32 %v176, %v181
  %v186 = vmul.f32 %v175, %v181
  %v187 = vmul.f32 %v174, %v181
  %v188 = vmul.f32 %v173, %v181
  %v189 = vadd.f32 %v154, %v183
  %v190 = vadd.f32 %v155, %v184
  %v191 = vadd.f32 %v156, %v185
  %v192 = vadd.f32 %v157, %v186
  %v193 = vadd.f32 %v158, %v187
  %v194 = vadd.f32 %v159, %v188
  %195 = vrot.lane.b32.xlu0 %v75, 1
  %v196 = vpop.permute.xlu0 %195
  %197 = vrot.lane.b32.xlu0 %v76, 1
  %v198 = vpop.permute.xlu0 %197
  %199 = vrot.lane.b32.xlu0 %v77, 1
  %v200 = vpop.permute.xlu0 %199
  %201 = vrot.lane.b32.xlu0 %v78, 1
  %v202 = vpop.permute.xlu0 %201
  %203 = vrot.lane.b32.xlu0 %v79, 1
  %v204 = vpop.permute.xlu0 %203
  %205 = vrot.lane.b32.xlu0 %v80, 1
  %v206 = vpop.permute.xlu0 %205
  %vm207 = vcmp.lt.s32.totalorder %v100, 1
  %v208 = vsel %vm207, %v204, %v206
  %v209 = vsel %vm207, %v202, %v204
  %v210 = vsel %vm207, %v200, %v202
  %v211 = vsel %vm207, %v198, %v200
  %v212 = vsel %vm207, %v196, %v198
  %v213 = vsel %vm207, %v206, %v196
  %214 = vset.pattern.permute.xlu0 3
  %215 = vperm.xlu0 %214, %v81
  %v216 = vpop.permute.xlu0 %215
  %v218 = vmul.f32 %v213, %v216
  %v219 = vmul.f32 %v212, %v216
  %v220 = vmul.f32 %v211, %v216
  %v221 = vmul.f32 %v210, %v216
  %v222 = vmul.f32 %v209, %v216
  %v223 = vmul.f32 %v208, %v216
  %v224 = vadd.f32 %v189, %v218
  %v225 = vadd.f32 %v190, %v219
  %v226 = vadd.f32 %v191, %v220
  %v227 = vadd.f32 %v192, %v221
  %v228 = vadd.f32 %v193, %v222
  %v229 = vadd.f32 %v194, %v223
  %230 = vset.pattern.permute.xlu0 4
  %231 = vperm.xlu0 %230, %v81
  %v232 = vpop.permute.xlu0 %231
  %v234 = vmul.f32 %v75, %v232
  %v235 = vmul.f32 %v76, %v232
  %v236 = vmul.f32 %v77, %v232
  %v237 = vmul.f32 %v78, %v232
  %v238 = vmul.f32 %v79, %v232
  %v239 = vmul.f32 %v80, %v232
  %v240 = vadd.f32 %v224, %v234
  %v241 = vadd.f32 %v225, %v235
  %v242 = vadd.f32 %v226, %v236
  %v243 = vadd.f32 %v227, %v237
  %v244 = vadd.f32 %v228, %v238
  %v245 = vadd.f32 %v229, %v239
  %246 = vrot.lane.b32.xlu0 %v75, 127
  %v247 = vpop.permute.xlu0 %246
  %248 = vrot.lane.b32.xlu0 %v76, 127
  %v249 = vpop.permute.xlu0 %248
  %250 = vrot.lane.b32.xlu0 %v77, 127
  %v251 = vpop.permute.xlu0 %250
  %252 = vrot.lane.b32.xlu0 %v78, 127
  %v253 = vpop.permute.xlu0 %252
  %254 = vrot.lane.b32.xlu0 %v79, 127
  %v255 = vpop.permute.xlu0 %254
  %256 = vrot.lane.b32.xlu0 %v80, 127
  %v257 = vpop.permute.xlu0 %256
  %vm258 = vcmp.lt.s32.totalorder %v100, 127
  %v259 = vsel %vm258, %v255, %v257
  %v260 = vsel %vm258, %v253, %v255
  %v261 = vsel %vm258, %v251, %v253
  %v262 = vsel %vm258, %v249, %v251
  %v263 = vsel %vm258, %v247, %v249
  %v264 = vsel %vm258, %v257, %v247
  %265 = vset.pattern.permute.xlu0 5
  %266 = vperm.xlu0 %265, %v81
  %v267 = vpop.permute.xlu0 %266
  %v269 = vmul.f32 %v263, %v267
  %v270 = vmul.f32 %v262, %v267
  %v271 = vmul.f32 %v261, %v267
  %v272 = vmul.f32 %v260, %v267
  %v273 = vmul.f32 %v259, %v267
  %v274 = vmul.f32 %v264, %v267
  %v275 = vadd.f32 %v240, %v269
  %v276 = vadd.f32 %v241, %v270
  %v277 = vadd.f32 %v242, %v271
  %v278 = vadd.f32 %v243, %v272
  %v279 = vadd.f32 %v244, %v273
  %v280 = vadd.f32 %v245, %v274
  %281 = vrot.lane.b32.xlu0 %v75, 111
  %v282 = vpop.permute.xlu0 %281
  %283 = vrot.lane.b32.xlu0 %v76, 111
  %v284 = vpop.permute.xlu0 %283
  %285 = vrot.lane.b32.xlu0 %v77, 111
  %v286 = vpop.permute.xlu0 %285
  %287 = vrot.lane.b32.xlu0 %v78, 111
  %v288 = vpop.permute.xlu0 %287
  %289 = vrot.lane.b32.xlu0 %v79, 111
  %v290 = vpop.permute.xlu0 %289
  %291 = vrot.lane.b32.xlu0 %v80, 111
  %v292 = vpop.permute.xlu0 %291
  %vm293 = vcmp.lt.s32.totalorder %v100, 111
  %v294 = vsel %vm293, %v290, %v292
  %v295 = vsel %vm293, %v288, %v290
  %v296 = vsel %vm293, %v286, %v288
  %v297 = vsel %vm293, %v284, %v286
  %v298 = vsel %vm293, %v282, %v284
  %v299 = vsel %vm293, %v292, %v282
  %300 = vset.pattern.permute.xlu0 6
  %301 = vperm.xlu0 %300, %v81
  %v302 = vpop.permute.xlu0 %301
  %v304 = vmul.f32 %v298, %v302
  %v305 = vmul.f32 %v297, %v302
  %v306 = vmul.f32 %v296, %v302
  %v307 = vmul.f32 %v295, %v302
  %v308 = vmul.f32 %v294, %v302
  %v309 = vmul.f32 %v299, %v302
  %v310 = vadd.f32 %v275, %v304
  %v311 = vadd.f32 %v276, %v305
  %v312 = vadd.f32 %v277, %v306
  %v313 = vadd.f32 %v278, %v307
  %v314 = vadd.f32 %v279, %v308
  %v315 = vadd.f32 %v280, %v309
  %316 = vrot.lane.b32.xlu0 %v75, 110
  %v317 = vpop.permute.xlu0 %316
  %318 = vrot.lane.b32.xlu0 %v76, 110
  %v319 = vpop.permute.xlu0 %318
  %320 = vrot.lane.b32.xlu0 %v77, 110
  %v321 = vpop.permute.xlu0 %320
  %322 = vrot.lane.b32.xlu0 %v78, 110
  %v323 = vpop.permute.xlu0 %322
  %324 = vrot.lane.b32.xlu0 %v79, 110
  %v325 = vpop.permute.xlu0 %324
  %326 = vrot.lane.b32.xlu0 %v80, 110
  %v327 = vpop.permute.xlu0 %326
  %vm328 = vcmp.lt.s32.totalorder %v100, 110
  %v329 = vsel %vm328, %v325, %v327
  %v330 = vsel %vm328, %v323, %v325
  %v331 = vsel %vm328, %v321, %v323
  %v332 = vsel %vm328, %v319, %v321
  %v333 = vsel %vm328, %v317, %v319
  %v334 = vsel %vm328, %v327, %v317
  %335 = vset.pattern.permute.xlu0 7
  %336 = vperm.xlu0 %335, %v81
  %v337 = vpop.permute.xlu0 %336
  %v339 = vmul.f32 %v333, %v337
  %v340 = vmul.f32 %v332, %v337
  %v341 = vmul.f32 %v331, %v337
  %v342 = vmul.f32 %v330, %v337
  %v343 = vmul.f32 %v329, %v337
  %v344 = vmul.f32 %v334, %v337
  %v345 = vadd.f32 %v310, %v339
  %v346 = vadd.f32 %v311, %v340
  %v347 = vadd.f32 %v312, %v341
  %v348 = vadd.f32 %v313, %v342
  %v349 = vadd.f32 %v314, %v343
  %v350 = vadd.f32 %v315, %v344
  %351 = vrot.lane.b32.xlu0 %v75, 109
  %v352 = vpop.permute.xlu0 %351
  %353 = vrot.lane.b32.xlu0 %v76, 109
  %v354 = vpop.permute.xlu0 %353
  %355 = vrot.lane.b32.xlu0 %v77, 109
  %v356 = vpop.permute.xlu0 %355
  %357 = vrot.lane.b32.xlu0 %v78, 109
  %v358 = vpop.permute.xlu0 %357
  %359 = vrot.lane.b32.xlu0 %v79, 109
  %v360 = vpop.permute.xlu0 %359
  %361 = vrot.lane.b32.xlu0 %v80, 109
  %v362 = vpop.permute.xlu0 %361
  %vm363 = vcmp.lt.s32.totalorder %v100, 109
  %v364 = vsel %vm363, %v360, %v362
  %v365 = vsel %vm363, %v358, %v360
  %v366 = vsel %vm363, %v356, %v358
  %v367 = vsel %vm363, %v354, %v356
  %v368 = vsel %vm363, %v352, %v354
  %v369 = vsel %vm363, %v362, %v352
  %370 = vset.pattern.permute.xlu0 8
  %371 = vperm.xlu0 %370, %v81
  %v372 = vpop.permute.xlu0 %371
  %v374 = vmul.f32 %v368, %v372
  %v375 = vmul.f32 %v367, %v372
  %v376 = vmul.f32 %v366, %v372
  %v377 = vmul.f32 %v365, %v372
  %v378 = vmul.f32 %v364, %v372
  %v379 = vmul.f32 %v369, %v372
  %v380 = vadd.f32 %v345, %v374
  %v381 = vadd.f32 %v346, %v375
  %v382 = vadd.f32 %v347, %v376
  %v383 = vadd.f32 %v348, %v377
  %v384 = vadd.f32 %v349, %v378
  %v385 = vadd.f32 %v350, %v379
  %v387 = vlaneseq
  %v388 = vshrl.u32 %v387, 7
  %v389 = vsub.s32 0, %v388
  %v390 = vrot.slane %v74, %v389
  %v391 = vlaneseq
  %v392 = vshrl.u32 %v391, 7
  %v393 = vsub.s32 1, %v392
  %v394 = vrot.slane %v74, %v393
  %v395 = vlaneseq
  %v396 = vshrl.u32 %v395, 7
  %v397 = vsub.s32 2, %v396
  %v398 = vrot.slane %v74, %v397
  %v399 = vlaneseq
  %v400 = vshrl.u32 %v399, 7
  %v401 = vsub.s32 3, %v400
  %v402 = vrot.slane %v74, %v401
  %v403 = vlaneseq
  %v404 = vshrl.u32 %v403, 7
  %v405 = vsub.s32 4, %v404
  %v406 = vrot.slane %v74, %v405
  %v407 = vlaneseq
  %v408 = vshrl.u32 %v407, 7
  %v409 = vsub.s32 5, %v408
  %v410 = vrot.slane %v74, %v409
  %v417 = vmul.f32 %v380, %v390
  %v418 = vmul.f32 %v381, %v394
  %v419 = vmul.f32 %v382, %v398
  %v420 = vmul.f32 %v383, %v402
  %v421 = vmul.f32 %v384, %v406
  %v422 = vmul.f32 %v385, %v410
  %v423 = vadd.f32 %v417, %v418
  %v424 = vadd.f32 %v423, %v419
  %v425 = vadd.f32 %v424, %v420
  %v426 = vadd.f32 %v425, %v421
  %v427 = vadd.f32 %v426, %v422
  %428 = vadd.xlane.f32.xlu0 %v427
  %v429 = vpop.xlane.xlu0 %428
  %v430 = vmul.f32 %v429, 0.001953125
  %v431 = vsub.f32 %v380, %v430
  %v432 = vsub.f32 %v381, %v430
  %v433 = vsub.f32 %v382, %v430
  %v434 = vsub.f32 %v383, %v430
  %v435 = vsub.f32 %v384, %v430
  %v436 = vsub.f32 %v385, %v430
  %v437 = vmul.f32 %v431, %v390
  %v438 = vmul.f32 %v432, %v394
  %v439 = vmul.f32 %v433, %v398
  %v440 = vmul.f32 %v434, %v402
  %v441 = vmul.f32 %v435, %v406
  %v442 = vmul.f32 %v436, %v410
  %v443 = vmul.f32 %v437, %v437
  %v444 = vmul.f32 %v438, %v438
  %v445 = vmul.f32 %v439, %v439
  %v446 = vmul.f32 %v440, %v440
  %v447 = vmul.f32 %v441, %v441
  %v448 = vmul.f32 %v442, %v442
  %v449 = vadd.f32 %v443, %v444
  %v450 = vadd.f32 %v449, %v445
  %v451 = vadd.f32 %v450, %v446
  %v452 = vadd.f32 %v451, %v447
  %v453 = vadd.f32 %v452, %v448
  %454 = vadd.xlane.f32.xlu0 %v453
  %v455 = vpop.xlane.xlu0 %454
  %v456 = vmul.f32 %v455, 0.001953125
  %v457 = vadd.f32 %v456, 1e-05
  %v458 = vrsqrt.pop %v457
  %v459 = vmul.f32 %v431, %v458
  %v460 = vmul.f32 %v432, %v458
  %v461 = vmul.f32 %v433, %v458
  %v462 = vmul.f32 %v434, %v458
  %v463 = vmul.f32 %v435, %v458
  %v464 = vmul.f32 %v436, %v458
  %466 = vset.pattern.permute.xlu0 0
  %467 = vperm.xlu0 %466, %v82
  %v468 = vpop.permute.xlu0 %467
  %v470 = vmul.f32 %v459, %v468
  %v471 = vmul.f32 %v460, %v468
  %v472 = vmul.f32 %v461, %v468
  %v473 = vmul.f32 %v462, %v468
  %v474 = vmul.f32 %v463, %v468
  %v475 = vmul.f32 %v464, %v468
  %477 = vset.pattern.permute.xlu0 0
  %478 = vperm.xlu0 %477, %v83
  %v479 = vpop.permute.xlu0 %478
  %v481 = vadd.f32 %v470, %v479
  %v482 = vadd.f32 %v471, %v479
  %v483 = vadd.f32 %v472, %v479
  %v484 = vadd.f32 %v473, %v479
  %v485 = vadd.f32 %v474, %v479
  %v486 = vadd.f32 %v475, %v479
  %v487 = vmax.f32 %v481, 0.0
  %v488 = vmax.f32 %v482, 0.0
  %v489 = vmax.f32 %v483, 0.0
  %v490 = vmax.f32 %v484, 0.0
  %v491 = vmax.f32 %v485, 0.0
  %v492 = vmax.f32 %v486, 0.0
  %vm493 = vcmask 64512
  %v495 = vsel %vm493, %v84, 0
  %497 = vmatprep.subr.mxu0 0.0
  %498 = vmatpush1.msra.mxu0 0.0
  %499 = vmatprep.subr.mxu0 0.0
  %500 = vmatpush1.msra.mxu0 0.0
  %501 = vmatprep.subr.mxu0 0.0
  %502 = vmatpush1.msra.mxu0 0.0
  %503 = vmatprep.subr.mxu0 0.0
  %504 = vmatpush1.msra.mxu0 0.0
  %505 = vmatprep.subr.mxu0 0.0
  %506 = vmatpush1.msra.mxu0 0.0
  %507 = vmatprep.subr.mxu0 0.0
  %508 = vmatpush1.msra.mxu0 0.0
  %509 = vmatprep.subr.mxu0 0.0
  %510 = vmatpush1.msra.mxu0 0.0
  %511 = vmatprep.subr.mxu0 0.0
  %512 = vmatpush1.msra.mxu0 0.0
  %513 = vmatprep.subr.mxu0 0.0
  %514 = vmatpush1.msra.mxu0 0.0
  %515 = vmatprep.subr.mxu0 0.0
  %516 = vmatpush1.msra.mxu0 0.0
  %517 = vmatprep.subr.mxu0 0.0
  %518 = vmatpush1.msra.mxu0 0.0
  %519 = vmatprep.subr.mxu0 0.0
  %520 = vmatpush1.msra.mxu0 0.0
  %521 = vmatprep.subr.mxu0 0.0
  %522 = vmatpush1.msra.mxu0 0.0
  %523 = vmatprep.subr.mxu0 0.0
  %524 = vmatpush1.msra.mxu0 0.0
  %525 = vmatprep.subr.mxu0 0.0
  %526 = vmatpush1.msra.mxu0 0.0
  %527 = vmatprep.subr.mxu0 %v488
  %528 = vmatpush1.msra.mxu0 %v487
  %529 = vmatprep.subr.mxu0 0.0
  %530 = vmatpush2.msra.mxu0 0.0
  %531 = vmatprep.subr.mxu0 0.0
  %532 = vmatpush2.msra.mxu0 0.0
  %533 = vmatprep.subr.mxu0 0.0
  %534 = vmatpush2.msra.mxu0 0.0
  %535 = vmatprep.subr.mxu0 0.0
  %536 = vmatpush2.msra.mxu0 0.0
  %537 = vmatprep.subr.mxu0 0.0
  %538 = vmatpush2.msra.mxu0 0.0
  %539 = vmatprep.subr.mxu0 0.0
  %540 = vmatpush2.msra.mxu0 0.0
  %541 = vmatprep.subr.mxu0 0.0
  %542 = vmatpush2.msra.mxu0 0.0
  %543 = vmatprep.subr.mxu0 0.0
  %544 = vmatpush2.msra.mxu0 0.0
  %545 = vmatprep.subr.mxu0 0.0
  %546 = vmatpush2.msra.mxu0 0.0
  %547 = vmatprep.subr.mxu0 0.0
  %548 = vmatpush2.msra.mxu0 0.0
  %549 = vmatprep.subr.mxu0 0.0
  %550 = vmatpush2.msra.mxu0 0.0
  %551 = vmatprep.subr.mxu0 0.0
  %552 = vmatpush2.msra.mxu0 0.0
  %553 = vmatprep.subr.mxu0 0.0
  %554 = vmatpush2.msra.mxu0 0.0
  %555 = vmatprep.subr.mxu0 0.0
  %556 = vmatpush2.msra.mxu0 0.0
  %557 = vmatprep.subr.mxu0 0.0
  %558 = vmatpush2.msra.mxu0 0.0
  %559 = vmatprep.subr.mxu0 0.0
  %560 = vmatpush2.msra.mxu0 0.0
  %561 = vmatprep.mubr.f32.mxu0 0.0
  %562 = vmatmul.mubr.f32.gmra.mxu0 %v495
  %v563 = vpop.f32.mrf.mxu0
  %v564 = vadd.f32 0.0, %v563
  %v565 = vpop.f32.mrf.mxu0
  %v566 = vadd.f32 0.0, %v565
  %567 = vdwg.mxu0
  %568 = vmatprep.subr.mxu0 0.0
  %569 = vmatpush1.msra.mxu0 0.0
  %570 = vmatprep.subr.mxu0 0.0
  %571 = vmatpush1.msra.mxu0 0.0
  %572 = vmatprep.subr.mxu0 0.0
  %573 = vmatpush1.msra.mxu0 0.0
  %574 = vmatprep.subr.mxu0 0.0
  %575 = vmatpush1.msra.mxu0 0.0
  %576 = vmatprep.subr.mxu0 0.0
  %577 = vmatpush1.msra.mxu0 0.0
  %578 = vmatprep.subr.mxu0 0.0
  %579 = vmatpush1.msra.mxu0 0.0
  %580 = vmatprep.subr.mxu0 0.0
  %581 = vmatpush1.msra.mxu0 0.0
  %582 = vmatprep.subr.mxu0 0.0
  %583 = vmatpush1.msra.mxu0 0.0
  %584 = vmatprep.subr.mxu0 0.0
  %585 = vmatpush1.msra.mxu0 0.0
  %586 = vmatprep.subr.mxu0 0.0
  %587 = vmatpush1.msra.mxu0 0.0
  %588 = vmatprep.subr.mxu0 0.0
  %589 = vmatpush1.msra.mxu0 0.0
  %590 = vmatprep.subr.mxu0 0.0
  %591 = vmatpush1.msra.mxu0 0.0
  %592 = vmatprep.subr.mxu0 0.0
  %593 = vmatpush1.msra.mxu0 0.0
  %594 = vmatprep.subr.mxu0 0.0
  %595 = vmatpush1.msra.mxu0 0.0
  %596 = vmatprep.subr.mxu0 0.0
  %597 = vmatpush1.msra.mxu0 0.0
  %598 = vmatprep.subr.mxu0 %v490
  %599 = vmatpush1.msra.mxu0 %v489
  %600 = vmatprep.subr.mxu0 0.0
  %601 = vmatpush2.msra.mxu0 0.0
  %602 = vmatprep.subr.mxu0 0.0
  %603 = vmatpush2.msra.mxu0 0.0
  %604 = vmatprep.subr.mxu0 0.0
  %605 = vmatpush2.msra.mxu0 0.0
  %606 = vmatprep.subr.mxu0 0.0
  %607 = vmatpush2.msra.mxu0 0.0
  %608 = vmatprep.subr.mxu0 0.0
  %609 = vmatpush2.msra.mxu0 0.0
  %610 = vmatprep.subr.mxu0 0.0
  %611 = vmatpush2.msra.mxu0 0.0
  %612 = vmatprep.subr.mxu0 0.0
  %613 = vmatpush2.msra.mxu0 0.0
  %614 = vmatprep.subr.mxu0 0.0
  %615 = vmatpush2.msra.mxu0 0.0
  %616 = vmatprep.subr.mxu0 0.0
  %617 = vmatpush2.msra.mxu0 0.0
  %618 = vmatprep.subr.mxu0 0.0
  %619 = vmatpush2.msra.mxu0 0.0
  %620 = vmatprep.subr.mxu0 0.0
  %621 = vmatpush2.msra.mxu0 0.0
  %622 = vmatprep.subr.mxu0 0.0
  %623 = vmatpush2.msra.mxu0 0.0
  %624 = vmatprep.subr.mxu0 0.0
  %625 = vmatpush2.msra.mxu0 0.0
  %626 = vmatprep.subr.mxu0 0.0
  %627 = vmatpush2.msra.mxu0 0.0
  %628 = vmatprep.subr.mxu0 0.0
  %629 = vmatpush2.msra.mxu0 0.0
  %630 = vmatprep.subr.mxu0 0.0
  %631 = vmatpush2.msra.mxu0 0.0
  %632 = vmatprep.mubr.f32.mxu0 0.0
  %633 = vmatmul.mubr.f32.gmra.mxu0 %v495
  %v634 = vpop.f32.mrf.mxu0
  %v635 = vadd.f32 0.0, %v634
  %v636 = vpop.f32.mrf.mxu0
  %v637 = vadd.f32 0.0, %v636
  %638 = vdwg.mxu0
  %639 = vmatprep.subr.mxu0 0.0
  %640 = vmatpush1.msra.mxu0 0.0
  %641 = vmatprep.subr.mxu0 0.0
  %642 = vmatpush1.msra.mxu0 0.0
  %643 = vmatprep.subr.mxu0 0.0
  %644 = vmatpush1.msra.mxu0 0.0
  %645 = vmatprep.subr.mxu0 0.0
  %646 = vmatpush1.msra.mxu0 0.0
  %647 = vmatprep.subr.mxu0 0.0
  %648 = vmatpush1.msra.mxu0 0.0
  %649 = vmatprep.subr.mxu0 0.0
  %650 = vmatpush1.msra.mxu0 0.0
  %651 = vmatprep.subr.mxu0 0.0
  %652 = vmatpush1.msra.mxu0 0.0
  %653 = vmatprep.subr.mxu0 0.0
  %654 = vmatpush1.msra.mxu0 0.0
  %655 = vmatprep.subr.mxu0 0.0
  %656 = vmatpush1.msra.mxu0 0.0
  %657 = vmatprep.subr.mxu0 0.0
  %658 = vmatpush1.msra.mxu0 0.0
  %659 = vmatprep.subr.mxu0 0.0
  %660 = vmatpush1.msra.mxu0 0.0
  %661 = vmatprep.subr.mxu0 0.0
  %662 = vmatpush1.msra.mxu0 0.0
  %663 = vmatprep.subr.mxu0 0.0
  %664 = vmatpush1.msra.mxu0 0.0
  %665 = vmatprep.subr.mxu0 0.0
  %666 = vmatpush1.msra.mxu0 0.0
  %667 = vmatprep.subr.mxu0 0.0
  %668 = vmatpush1.msra.mxu0 0.0
  %669 = vmatprep.subr.mxu0 %v492
  %670 = vmatpush1.msra.mxu0 %v491
  %671 = vmatprep.subr.mxu0 0.0
  %672 = vmatpush2.msra.mxu0 0.0
  %673 = vmatprep.subr.mxu0 0.0
  %674 = vmatpush2.msra.mxu0 0.0
  %675 = vmatprep.subr.mxu0 0.0
  %676 = vmatpush2.msra.mxu0 0.0
  %677 = vmatprep.subr.mxu0 0.0
  %678 = vmatpush2.msra.mxu0 0.0
  %679 = vmatprep.subr.mxu0 0.0
  %680 = vmatpush2.msra.mxu0 0.0
  %681 = vmatprep.subr.mxu0 0.0
  %682 = vmatpush2.msra.mxu0 0.0
  %683 = vmatprep.subr.mxu0 0.0
  %684 = vmatpush2.msra.mxu0 0.0
  %685 = vmatprep.subr.mxu0 0.0
  %686 = vmatpush2.msra.mxu0 0.0
  %687 = vmatprep.subr.mxu0 0.0
  %688 = vmatpush2.msra.mxu0 0.0
  %689 = vmatprep.subr.mxu0 0.0
  %690 = vmatpush2.msra.mxu0 0.0
  %691 = vmatprep.subr.mxu0 0.0
  %692 = vmatpush2.msra.mxu0 0.0
  %693 = vmatprep.subr.mxu0 0.0
  %694 = vmatpush2.msra.mxu0 0.0
  %695 = vmatprep.subr.mxu0 0.0
  %696 = vmatpush2.msra.mxu0 0.0
  %697 = vmatprep.subr.mxu0 0.0
  %698 = vmatpush2.msra.mxu0 0.0
  %699 = vmatprep.subr.mxu0 0.0
  %700 = vmatpush2.msra.mxu0 0.0
  %701 = vmatprep.subr.mxu0 0.0
  %702 = vmatpush2.msra.mxu0 0.0
  %703 = vmatprep.mubr.f32.mxu0 0.0
  %704 = vmatmul.mubr.f32.gmra.mxu0 %v495
  %v705 = vpop.f32.mrf.mxu0
  %v706 = vadd.f32 0.0, %v705
  %v707 = vpop.f32.mrf.mxu0
  %v708 = vadd.f32 0.0, %v707
  %709 = vdwg.mxu0
  %v710 = vmul.f32 %v564, %v390
  %v711 = vmul.f32 %v566, %v394
  %v712 = vmul.f32 %v635, %v398
  %v713 = vmul.f32 %v637, %v402
  %v714 = vmul.f32 %v706, %v406
  %v715 = vmul.f32 %v708, %v410
  %v716 = vadd.f32 %v710, %v711
  %v717 = vadd.f32 %v716, %v712
  %v718 = vadd.f32 %v717, %v713
  %v719 = vadd.f32 %v718, %v714
  %v720 = vadd.f32 %v719, %v715
  %721 = vadd.xlane.f32.xlu0 %v720
  %v722 = vpop.xlane.xlu0 %721
  %v723 = vmul.f32 %v722, 0.001953125
  %v724 = vsub.f32 %v564, %v723
  %v725 = vsub.f32 %v566, %v723
  %v726 = vsub.f32 %v635, %v723
  %v727 = vsub.f32 %v637, %v723
  %v728 = vsub.f32 %v706, %v723
  %v729 = vsub.f32 %v708, %v723
  %v730 = vmul.f32 %v724, %v390
  %v731 = vmul.f32 %v725, %v394
  %v732 = vmul.f32 %v726, %v398
  %v733 = vmul.f32 %v727, %v402
  %v734 = vmul.f32 %v728, %v406
  %v735 = vmul.f32 %v729, %v410
  %v736 = vmul.f32 %v730, %v730
  %v737 = vmul.f32 %v731, %v731
  %v738 = vmul.f32 %v732, %v732
  %v739 = vmul.f32 %v733, %v733
  %v740 = vmul.f32 %v734, %v734
  %v741 = vmul.f32 %v735, %v735
  %v742 = vadd.f32 %v736, %v737
  %v743 = vadd.f32 %v742, %v738
  %v744 = vadd.f32 %v743, %v739
  %v745 = vadd.f32 %v744, %v740
  %v746 = vadd.f32 %v745, %v741
  %747 = vadd.xlane.f32.xlu0 %v746
  %v748 = vpop.xlane.xlu0 %747
  %v749 = vmul.f32 %v748, 0.001953125
  %v750 = vadd.f32 %v749, 1e-05
  %v751 = vrsqrt.pop %v750
  %v752 = vmul.f32 %v724, %v751
  %v753 = vmul.f32 %v725, %v751
  %v754 = vmul.f32 %v726, %v751
  %v755 = vmul.f32 %v727, %v751
  %v756 = vmul.f32 %v728, %v751
  %v757 = vmul.f32 %v729, %v751
  %759 = vset.pattern.permute.xlu0 0
  %760 = vperm.xlu0 %759, %v85
  %v761 = vpop.permute.xlu0 %760
  %v763 = vmul.f32 %v752, %v761
  %v764 = vmul.f32 %v753, %v761
  %v765 = vmul.f32 %v754, %v761
  %v766 = vmul.f32 %v755, %v761
  %v767 = vmul.f32 %v756, %v761
  %v768 = vmul.f32 %v757, %v761
  %770 = vset.pattern.permute.xlu0 0
  %771 = vperm.xlu0 %770, %v86
  %v772 = vpop.permute.xlu0 %771
  %v774 = vadd.f32 %v763, %v772
  %v775 = vadd.f32 %v764, %v772
  %v776 = vadd.f32 %v765, %v772
  %v777 = vadd.f32 %v766, %v772
  %v778 = vadd.f32 %v767, %v772
  %v779 = vadd.f32 %v768, %v772
  %v780 = vmax.f32 %v774, 0.0
  %v781 = vmax.f32 %v775, 0.0
  %v782 = vmax.f32 %v776, 0.0
  %v783 = vmax.f32 %v777, 0.0
  %v784 = vmax.f32 %v778, 0.0
  %v785 = vmax.f32 %v779, 0.0
  %v786 = vld [vmem:[%s1] sm:$0xff]
  %v787 = vld [vmem:[%s1 + $0x8] sm:$0xff]
  %v788 = vld [vmem:[%s1 + $0x10] sm:$0xff]
  %v789 = vld [vmem:[%s1 + $0x18] sm:$0xff]
  %v790 = vld [vmem:[%s1 + $0x20] sm:$0xff]
  %v791 = vld [vmem:[%s1 + $0x28] sm:$0xff]
  %v792 = vld [vmem:[%s11] sm:$0xff]
  %v793 = vld [vmem:[%s12] sm:$0xff]
  %v794 = vld [vmem:[%s13] sm:$0xff]
  %v795 = vld [vmem:[%s14] sm:$0xff]
  %v796 = vld [vmem:[%s15] sm:$0xff]
  %v797 = vld [vmem:[%s16] sm:$0xff]
  %798 = vrot.lane.b32.xlu0 %v786, 19
  %v799 = vpop.permute.xlu0 %798
  %800 = vrot.lane.b32.xlu0 %v787, 19
  %v801 = vpop.permute.xlu0 %800
  %802 = vrot.lane.b32.xlu0 %v788, 19
  %v803 = vpop.permute.xlu0 %802
  %804 = vrot.lane.b32.xlu0 %v789, 19
  %v805 = vpop.permute.xlu0 %804
  %806 = vrot.lane.b32.xlu0 %v790, 19
  %v807 = vpop.permute.xlu0 %806
  %808 = vrot.lane.b32.xlu0 %v791, 19
  %v809 = vpop.permute.xlu0 %808
  %v810 = vsel %vm101, %v807, %v809
  %v811 = vsel %vm101, %v805, %v807
  %v812 = vsel %vm101, %v803, %v805
  %v813 = vsel %vm101, %v801, %v803
  %v814 = vsel %vm101, %v799, %v801
  %v815 = vsel %vm101, %v809, %v799
  %817 = vset.pattern.permute.xlu0 0
  %818 = vperm.xlu0 %817, %v792
  %v819 = vpop.permute.xlu0 %818
  %v821 = vmul.f32 %v815, %v819
  %v822 = vmul.f32 %v814, %v819
  %v823 = vmul.f32 %v813, %v819
  %v824 = vmul.f32 %v812, %v819
  %v825 = vmul.f32 %v811, %v819
  %v826 = vmul.f32 %v810, %v819
  %v827 = vadd.f32 %v821, 0.0
  %v828 = vadd.f32 %v822, 0.0
  %v829 = vadd.f32 %v823, 0.0
  %v830 = vadd.f32 %v824, 0.0
  %v831 = vadd.f32 %v825, 0.0
  %v832 = vadd.f32 %v826, 0.0
  %833 = vrot.lane.b32.xlu0 %v786, 18
  %v834 = vpop.permute.xlu0 %833
  %835 = vrot.lane.b32.xlu0 %v787, 18
  %v836 = vpop.permute.xlu0 %835
  %837 = vrot.lane.b32.xlu0 %v788, 18
  %v838 = vpop.permute.xlu0 %837
  %839 = vrot.lane.b32.xlu0 %v789, 18
  %v840 = vpop.permute.xlu0 %839
  %841 = vrot.lane.b32.xlu0 %v790, 18
  %v842 = vpop.permute.xlu0 %841
  %843 = vrot.lane.b32.xlu0 %v791, 18
  %v844 = vpop.permute.xlu0 %843
  %v845 = vsel %vm137, %v842, %v844
  %v846 = vsel %vm137, %v840, %v842
  %v847 = vsel %vm137, %v838, %v840
  %v848 = vsel %vm137, %v836, %v838
  %v849 = vsel %vm137, %v834, %v836
  %v850 = vsel %vm137, %v844, %v834
  %851 = vset.pattern.permute.xlu0 1
  %852 = vperm.xlu0 %851, %v792
  %v853 = vpop.permute.xlu0 %852
  %v855 = vmul.f32 %v850, %v853
  %v856 = vmul.f32 %v849, %v853
  %v857 = vmul.f32 %v848, %v853
  %v858 = vmul.f32 %v847, %v853
  %v859 = vmul.f32 %v846, %v853
  %v860 = vmul.f32 %v845, %v853
  %v861 = vadd.f32 %v827, %v855
  %v862 = vadd.f32 %v828, %v856
  %v863 = vadd.f32 %v829, %v857
  %v864 = vadd.f32 %v830, %v858
  %v865 = vadd.f32 %v831, %v859
  %v866 = vadd.f32 %v832, %v860
  %867 = vrot.lane.b32.xlu0 %v786, 17
  %v868 = vpop.permute.xlu0 %867
  %869 = vrot.lane.b32.xlu0 %v787, 17
  %v870 = vpop.permute.xlu0 %869
  %871 = vrot.lane.b32.xlu0 %v788, 17
  %v872 = vpop.permute.xlu0 %871
  %873 = vrot.lane.b32.xlu0 %v789, 17
  %v874 = vpop.permute.xlu0 %873
  %875 = vrot.lane.b32.xlu0 %v790, 17
  %v876 = vpop.permute.xlu0 %875
  %877 = vrot.lane.b32.xlu0 %v791, 17
  %v878 = vpop.permute.xlu0 %877
  %v879 = vsel %vm172, %v876, %v878
  %v880 = vsel %vm172, %v874, %v876
  %v881 = vsel %vm172, %v872, %v874
  %v882 = vsel %vm172, %v870, %v872
  %v883 = vsel %vm172, %v868, %v870
  %v884 = vsel %vm172, %v878, %v868
  %885 = vset.pattern.permute.xlu0 2
  %886 = vperm.xlu0 %885, %v792
  %v887 = vpop.permute.xlu0 %886
  %v889 = vmul.f32 %v884, %v887
  %v890 = vmul.f32 %v883, %v887
  %v891 = vmul.f32 %v882, %v887
  %v892 = vmul.f32 %v881, %v887
  %v893 = vmul.f32 %v880, %v887
  %v894 = vmul.f32 %v879, %v887
  %v895 = vadd.f32 %v861, %v889
  %v896 = vadd.f32 %v862, %v890
  %v897 = vadd.f32 %v863, %v891
  %v898 = vadd.f32 %v864, %v892
  %v899 = vadd.f32 %v865, %v893
  %v900 = vadd.f32 %v866, %v894
  %901 = vrot.lane.b32.xlu0 %v786, 1
  %v902 = vpop.permute.xlu0 %901
  %903 = vrot.lane.b32.xlu0 %v787, 1
  %v904 = vpop.permute.xlu0 %903
  %905 = vrot.lane.b32.xlu0 %v788, 1
  %v906 = vpop.permute.xlu0 %905
  %907 = vrot.lane.b32.xlu0 %v789, 1
  %v908 = vpop.permute.xlu0 %907
  %909 = vrot.lane.b32.xlu0 %v790, 1
  %v910 = vpop.permute.xlu0 %909
  %911 = vrot.lane.b32.xlu0 %v791, 1
  %v912 = vpop.permute.xlu0 %911
  %v913 = vsel %vm207, %v910, %v912
  %v914 = vsel %vm207, %v908, %v910
  %v915 = vsel %vm207, %v906, %v908
  %v916 = vsel %vm207, %v904, %v906
  %v917 = vsel %vm207, %v902, %v904
  %v918 = vsel %vm207, %v912, %v902
  %919 = vset.pattern.permute.xlu0 3
  %920 = vperm.xlu0 %919, %v792
  %v921 = vpop.permute.xlu0 %920
  %v923 = vmul.f32 %v918, %v921
  %v924 = vmul.f32 %v917, %v921
  %v925 = vmul.f32 %v916, %v921
  %v926 = vmul.f32 %v915, %v921
  %v927 = vmul.f32 %v914, %v921
  %v928 = vmul.f32 %v913, %v921
  %v929 = vadd.f32 %v895, %v923
  %v930 = vadd.f32 %v896, %v924
  %v931 = vadd.f32 %v897, %v925
  %v932 = vadd.f32 %v898, %v926
  %v933 = vadd.f32 %v899, %v927
  %v934 = vadd.f32 %v900, %v928
  %935 = vset.pattern.permute.xlu0 4
  %936 = vperm.xlu0 %935, %v792
  %v937 = vpop.permute.xlu0 %936
  %v939 = vmul.f32 %v786, %v937
  %v940 = vmul.f32 %v787, %v937
  %v941 = vmul.f32 %v788, %v937
  %v942 = vmul.f32 %v789, %v937
  %v943 = vmul.f32 %v790, %v937
  %v944 = vmul.f32 %v791, %v937
  %v945 = vadd.f32 %v929, %v939
  %v946 = vadd.f32 %v930, %v940
  %v947 = vadd.f32 %v931, %v941
  %v948 = vadd.f32 %v932, %v942
  %v949 = vadd.f32 %v933, %v943
  %v950 = vadd.f32 %v934, %v944
  %951 = vrot.lane.b32.xlu0 %v786, 127
  %v952 = vpop.permute.xlu0 %951
  %953 = vrot.lane.b32.xlu0 %v787, 127
  %v954 = vpop.permute.xlu0 %953
  %955 = vrot.lane.b32.xlu0 %v788, 127
  %v956 = vpop.permute.xlu0 %955
  %957 = vrot.lane.b32.xlu0 %v789, 127
  %v958 = vpop.permute.xlu0 %957
  %959 = vrot.lane.b32.xlu0 %v790, 127
  %v960 = vpop.permute.xlu0 %959
  %961 = vrot.lane.b32.xlu0 %v791, 127
  %v962 = vpop.permute.xlu0 %961
  %v963 = vsel %vm258, %v960, %v962
  %v964 = vsel %vm258, %v958, %v960
  %v965 = vsel %vm258, %v956, %v958
  %v966 = vsel %vm258, %v954, %v956
  %v967 = vsel %vm258, %v952, %v954
  %v968 = vsel %vm258, %v962, %v952
  %969 = vset.pattern.permute.xlu0 5
  %970 = vperm.xlu0 %969, %v792
  %v971 = vpop.permute.xlu0 %970
  %v973 = vmul.f32 %v967, %v971
  %v974 = vmul.f32 %v966, %v971
  %v975 = vmul.f32 %v965, %v971
  %v976 = vmul.f32 %v964, %v971
  %v977 = vmul.f32 %v963, %v971
  %v978 = vmul.f32 %v968, %v971
  %v979 = vadd.f32 %v945, %v973
  %v980 = vadd.f32 %v946, %v974
  %v981 = vadd.f32 %v947, %v975
  %v982 = vadd.f32 %v948, %v976
  %v983 = vadd.f32 %v949, %v977
  %v984 = vadd.f32 %v950, %v978
  %985 = vrot.lane.b32.xlu0 %v786, 111
  %v986 = vpop.permute.xlu0 %985
  %987 = vrot.lane.b32.xlu0 %v787, 111
  %v988 = vpop.permute.xlu0 %987
  %989 = vrot.lane.b32.xlu0 %v788, 111
  %v990 = vpop.permute.xlu0 %989
  %991 = vrot.lane.b32.xlu0 %v789, 111
  %v992 = vpop.permute.xlu0 %991
  %993 = vrot.lane.b32.xlu0 %v790, 111
  %v994 = vpop.permute.xlu0 %993
  %995 = vrot.lane.b32.xlu0 %v791, 111
  %v996 = vpop.permute.xlu0 %995
  %v997 = vsel %vm293, %v994, %v996
  %v998 = vsel %vm293, %v992, %v994
  %v999 = vsel %vm293, %v990, %v992
  %v1000 = vsel %vm293, %v988, %v990
  %v1001 = vsel %vm293, %v986, %v988
  %v1002 = vsel %vm293, %v996, %v986
  %1003 = vset.pattern.permute.xlu0 6
  %1004 = vperm.xlu0 %1003, %v792
  %v1005 = vpop.permute.xlu0 %1004
  %v1007 = vmul.f32 %v1001, %v1005
  %v1008 = vmul.f32 %v1000, %v1005
  %v1009 = vmul.f32 %v999, %v1005
  %v1010 = vmul.f32 %v998, %v1005
  %v1011 = vmul.f32 %v997, %v1005
  %v1012 = vmul.f32 %v1002, %v1005
  %v1013 = vadd.f32 %v979, %v1007
  %v1014 = vadd.f32 %v980, %v1008
  %v1015 = vadd.f32 %v981, %v1009
  %v1016 = vadd.f32 %v982, %v1010
  %v1017 = vadd.f32 %v983, %v1011
  %v1018 = vadd.f32 %v984, %v1012
  %1019 = vrot.lane.b32.xlu0 %v786, 110
  %v1020 = vpop.permute.xlu0 %1019
  %1021 = vrot.lane.b32.xlu0 %v787, 110
  %v1022 = vpop.permute.xlu0 %1021
  %1023 = vrot.lane.b32.xlu0 %v788, 110
  %v1024 = vpop.permute.xlu0 %1023
  %1025 = vrot.lane.b32.xlu0 %v789, 110
  %v1026 = vpop.permute.xlu0 %1025
  %1027 = vrot.lane.b32.xlu0 %v790, 110
  %v1028 = vpop.permute.xlu0 %1027
  %1029 = vrot.lane.b32.xlu0 %v791, 110
  %v1030 = vpop.permute.xlu0 %1029
  %v1031 = vsel %vm328, %v1028, %v1030
  %v1032 = vsel %vm328, %v1026, %v1028
  %v1033 = vsel %vm328, %v1024, %v1026
  %v1034 = vsel %vm328, %v1022, %v1024
  %v1035 = vsel %vm328, %v1020, %v1022
  %v1036 = vsel %vm328, %v1030, %v1020
  %1037 = vset.pattern.permute.xlu0 7
  %1038 = vperm.xlu0 %1037, %v792
  %v1039 = vpop.permute.xlu0 %1038
  %v1041 = vmul.f32 %v1035, %v1039
  %v1042 = vmul.f32 %v1034, %v1039
  %v1043 = vmul.f32 %v1033, %v1039
  %v1044 = vmul.f32 %v1032, %v1039
  %v1045 = vmul.f32 %v1031, %v1039
  %v1046 = vmul.f32 %v1036, %v1039
  %v1047 = vadd.f32 %v1013, %v1041
  %v1048 = vadd.f32 %v1014, %v1042
  %v1049 = vadd.f32 %v1015, %v1043
  %v1050 = vadd.f32 %v1016, %v1044
  %v1051 = vadd.f32 %v1017, %v1045
  %v1052 = vadd.f32 %v1018, %v1046
  %1053 = vrot.lane.b32.xlu0 %v786, 109
  %v1054 = vpop.permute.xlu0 %1053
  %1055 = vrot.lane.b32.xlu0 %v787, 109
  %v1056 = vpop.permute.xlu0 %1055
  %1057 = vrot.lane.b32.xlu0 %v788, 109
  %v1058 = vpop.permute.xlu0 %1057
  %1059 = vrot.lane.b32.xlu0 %v789, 109
  %v1060 = vpop.permute.xlu0 %1059
  %1061 = vrot.lane.b32.xlu0 %v790, 109
  %v1062 = vpop.permute.xlu0 %1061
  %1063 = vrot.lane.b32.xlu0 %v791, 109
  %v1064 = vpop.permute.xlu0 %1063
  %v1065 = vsel %vm363, %v1062, %v1064
  %v1066 = vsel %vm363, %v1060, %v1062
  %v1067 = vsel %vm363, %v1058, %v1060
  %v1068 = vsel %vm363, %v1056, %v1058
  %v1069 = vsel %vm363, %v1054, %v1056
  %v1070 = vsel %vm363, %v1064, %v1054
  %1071 = vset.pattern.permute.xlu0 8
  %1072 = vperm.xlu0 %1071, %v792
  %v1073 = vpop.permute.xlu0 %1072
  %v1075 = vmul.f32 %v1069, %v1073
  %v1076 = vmul.f32 %v1068, %v1073
  %v1077 = vmul.f32 %v1067, %v1073
  %v1078 = vmul.f32 %v1066, %v1073
  %v1079 = vmul.f32 %v1065, %v1073
  %v1080 = vmul.f32 %v1070, %v1073
  %v1081 = vadd.f32 %v1047, %v1075
  %v1082 = vadd.f32 %v1048, %v1076
  %v1083 = vadd.f32 %v1049, %v1077
  %v1084 = vadd.f32 %v1050, %v1078
  %v1085 = vadd.f32 %v1051, %v1079
  %v1086 = vadd.f32 %v1052, %v1080
  %v1087 = vmul.f32 %v1081, %v390
  %v1088 = vmul.f32 %v1082, %v394
  %v1089 = vmul.f32 %v1083, %v398
  %v1090 = vmul.f32 %v1084, %v402
  %v1091 = vmul.f32 %v1085, %v406
  %v1092 = vmul.f32 %v1086, %v410
  %v1093 = vadd.f32 %v1087, %v1088
  %v1094 = vadd.f32 %v1093, %v1089
  %v1095 = vadd.f32 %v1094, %v1090
  %v1096 = vadd.f32 %v1095, %v1091
  %v1097 = vadd.f32 %v1096, %v1092
  %1098 = vadd.xlane.f32.xlu0 %v1097
  %v1099 = vpop.xlane.xlu0 %1098
  %v1100 = vmul.f32 %v1099, 0.001953125
  %v1101 = vsub.f32 %v1081, %v1100
  %v1102 = vsub.f32 %v1082, %v1100
  %v1103 = vsub.f32 %v1083, %v1100
  %v1104 = vsub.f32 %v1084, %v1100
  %v1105 = vsub.f32 %v1085, %v1100
  %v1106 = vsub.f32 %v1086, %v1100
  %v1107 = vmul.f32 %v1101, %v390
  %v1108 = vmul.f32 %v1102, %v394
  %v1109 = vmul.f32 %v1103, %v398
  %v1110 = vmul.f32 %v1104, %v402
  %v1111 = vmul.f32 %v1105, %v406
  %v1112 = vmul.f32 %v1106, %v410
  %v1113 = vmul.f32 %v1107, %v1107
  %v1114 = vmul.f32 %v1108, %v1108
  %v1115 = vmul.f32 %v1109, %v1109
  %v1116 = vmul.f32 %v1110, %v1110
  %v1117 = vmul.f32 %v1111, %v1111
  %v1118 = vmul.f32 %v1112, %v1112
  %v1119 = vadd.f32 %v1113, %v1114
  %v1120 = vadd.f32 %v1119, %v1115
  %v1121 = vadd.f32 %v1120, %v1116
  %v1122 = vadd.f32 %v1121, %v1117
  %v1123 = vadd.f32 %v1122, %v1118
  %1124 = vadd.xlane.f32.xlu0 %v1123
  %v1125 = vpop.xlane.xlu0 %1124
  %v1126 = vmul.f32 %v1125, 0.001953125
  %v1127 = vadd.f32 %v1126, 1e-05
  %v1128 = vrsqrt.pop %v1127
  %v1129 = vmul.f32 %v1101, %v1128
  %v1130 = vmul.f32 %v1102, %v1128
  %v1131 = vmul.f32 %v1103, %v1128
  %v1132 = vmul.f32 %v1104, %v1128
  %v1133 = vmul.f32 %v1105, %v1128
  %v1134 = vmul.f32 %v1106, %v1128
  %1136 = vset.pattern.permute.xlu0 0
  %1137 = vperm.xlu0 %1136, %v793
  %v1138 = vpop.permute.xlu0 %1137
  %v1140 = vmul.f32 %v1129, %v1138
  %v1141 = vmul.f32 %v1130, %v1138
  %v1142 = vmul.f32 %v1131, %v1138
  %v1143 = vmul.f32 %v1132, %v1138
  %v1144 = vmul.f32 %v1133, %v1138
  %v1145 = vmul.f32 %v1134, %v1138
  %1147 = vset.pattern.permute.xlu0 0
  %1148 = vperm.xlu0 %1147, %v794
  %v1149 = vpop.permute.xlu0 %1148
  %v1151 = vadd.f32 %v1140, %v1149
  %v1152 = vadd.f32 %v1141, %v1149
  %v1153 = vadd.f32 %v1142, %v1149
  %v1154 = vadd.f32 %v1143, %v1149
  %v1155 = vadd.f32 %v1144, %v1149
  %v1156 = vadd.f32 %v1145, %v1149
  %v1157 = vmax.f32 %v1151, 0.0
  %v1158 = vmax.f32 %v1152, 0.0
  %v1159 = vmax.f32 %v1153, 0.0
  %v1160 = vmax.f32 %v1154, 0.0
  %v1161 = vmax.f32 %v1155, 0.0
  %v1162 = vmax.f32 %v1156, 0.0
  %v1164 = vsel %vm493, %v795, 0
  %1166 = vmatprep.subr.mxu0 0.0
  %1167 = vmatpush1.msra.mxu0 0.0
  %1168 = vmatprep.subr.mxu0 0.0
  %1169 = vmatpush1.msra.mxu0 0.0
  %1170 = vmatprep.subr.mxu0 0.0
  %1171 = vmatpush1.msra.mxu0 0.0
  %1172 = vmatprep.subr.mxu0 0.0
  %1173 = vmatpush1.msra.mxu0 0.0
  %1174 = vmatprep.subr.mxu0 0.0
  %1175 = vmatpush1.msra.mxu0 0.0
  %1176 = vmatprep.subr.mxu0 0.0
  %1177 = vmatpush1.msra.mxu0 0.0
  %1178 = vmatprep.subr.mxu0 0.0
  %1179 = vmatpush1.msra.mxu0 0.0
  %1180 = vmatprep.subr.mxu0 0.0
  %1181 = vmatpush1.msra.mxu0 0.0
  %1182 = vmatprep.subr.mxu0 0.0
  %1183 = vmatpush1.msra.mxu0 0.0
  %1184 = vmatprep.subr.mxu0 0.0
  %1185 = vmatpush1.msra.mxu0 0.0
  %1186 = vmatprep.subr.mxu0 0.0
  %1187 = vmatpush1.msra.mxu0 0.0
  %1188 = vmatprep.subr.mxu0 0.0
  %1189 = vmatpush1.msra.mxu0 0.0
  %1190 = vmatprep.subr.mxu0 0.0
  %1191 = vmatpush1.msra.mxu0 0.0
  %1192 = vmatprep.subr.mxu0 0.0
  %1193 = vmatpush1.msra.mxu0 0.0
  %1194 = vmatprep.subr.mxu0 0.0
  %1195 = vmatpush1.msra.mxu0 0.0
  %1196 = vmatprep.subr.mxu0 %v1158
  %1197 = vmatpush1.msra.mxu0 %v1157
  %1198 = vmatprep.subr.mxu0 0.0
  %1199 = vmatpush2.msra.mxu0 0.0
  %1200 = vmatprep.subr.mxu0 0.0
  %1201 = vmatpush2.msra.mxu0 0.0
  %1202 = vmatprep.subr.mxu0 0.0
  %1203 = vmatpush2.msra.mxu0 0.0
  %1204 = vmatprep.subr.mxu0 0.0
  %1205 = vmatpush2.msra.mxu0 0.0
  %1206 = vmatprep.subr.mxu0 0.0
  %1207 = vmatpush2.msra.mxu0 0.0
  %1208 = vmatprep.subr.mxu0 0.0
  %1209 = vmatpush2.msra.mxu0 0.0
  %1210 = vmatprep.subr.mxu0 0.0
  %1211 = vmatpush2.msra.mxu0 0.0
  %1212 = vmatprep.subr.mxu0 0.0
  %1213 = vmatpush2.msra.mxu0 0.0
  %1214 = vmatprep.subr.mxu0 0.0
  %1215 = vmatpush2.msra.mxu0 0.0
  %1216 = vmatprep.subr.mxu0 0.0
  %1217 = vmatpush2.msra.mxu0 0.0
  %1218 = vmatprep.subr.mxu0 0.0
  %1219 = vmatpush2.msra.mxu0 0.0
  %1220 = vmatprep.subr.mxu0 0.0
  %1221 = vmatpush2.msra.mxu0 0.0
  %1222 = vmatprep.subr.mxu0 0.0
  %1223 = vmatpush2.msra.mxu0 0.0
  %1224 = vmatprep.subr.mxu0 0.0
  %1225 = vmatpush2.msra.mxu0 0.0
  %1226 = vmatprep.subr.mxu0 0.0
  %1227 = vmatpush2.msra.mxu0 0.0
  %1228 = vmatprep.subr.mxu0 0.0
  %1229 = vmatpush2.msra.mxu0 0.0
  %1230 = vmatprep.mubr.f32.mxu0 0.0
  %1231 = vmatmul.mubr.f32.gmra.mxu0 %v1164
  %v1232 = vpop.f32.mrf.mxu0
  %v1233 = vadd.f32 0.0, %v1232
  %v1234 = vpop.f32.mrf.mxu0
  %v1235 = vadd.f32 0.0, %v1234
  %1236 = vdwg.mxu0
  %1237 = vmatprep.subr.mxu0 0.0
  %1238 = vmatpush1.msra.mxu0 0.0
  %1239 = vmatprep.subr.mxu0 0.0
  %1240 = vmatpush1.msra.mxu0 0.0
  %1241 = vmatprep.subr.mxu0 0.0
  %1242 = vmatpush1.msra.mxu0 0.0
  %1243 = vmatprep.subr.mxu0 0.0
  %1244 = vmatpush1.msra.mxu0 0.0
  %1245 = vmatprep.subr.mxu0 0.0
  %1246 = vmatpush1.msra.mxu0 0.0
  %1247 = vmatprep.subr.mxu0 0.0
  %1248 = vmatpush1.msra.mxu0 0.0
  %1249 = vmatprep.subr.mxu0 0.0
  %1250 = vmatpush1.msra.mxu0 0.0
  %1251 = vmatprep.subr.mxu0 0.0
  %1252 = vmatpush1.msra.mxu0 0.0
  %1253 = vmatprep.subr.mxu0 0.0
  %1254 = vmatpush1.msra.mxu0 0.0
  %1255 = vmatprep.subr.mxu0 0.0
  %1256 = vmatpush1.msra.mxu0 0.0
  %1257 = vmatprep.subr.mxu0 0.0
  %1258 = vmatpush1.msra.mxu0 0.0
  %1259 = vmatprep.subr.mxu0 0.0
  %1260 = vmatpush1.msra.mxu0 0.0
  %1261 = vmatprep.subr.mxu0 0.0
  %1262 = vmatpush1.msra.mxu0 0.0
  %1263 = vmatprep.subr.mxu0 0.0
  %1264 = vmatpush1.msra.mxu0 0.0
  %1265 = vmatprep.subr.mxu0 0.0
  %1266 = vmatpush1.msra.mxu0 0.0
  %1267 = vmatprep.subr.mxu0 %v1160
  %1268 = vmatpush1.msra.mxu0 %v1159
  %1269 = vmatprep.subr.mxu0 0.0
  %1270 = vmatpush2.msra.mxu0 0.0
  %1271 = vmatprep.subr.mxu0 0.0
  %1272 = vmatpush2.msra.mxu0 0.0
  %1273 = vmatprep.subr.mxu0 0.0
  %1274 = vmatpush2.msra.mxu0 0.0
  %1275 = vmatprep.subr.mxu0 0.0
  %1276 = vmatpush2.msra.mxu0 0.0
  %1277 = vmatprep.subr.mxu0 0.0
  %1278 = vmatpush2.msra.mxu0 0.0
  %1279 = vmatprep.subr.mxu0 0.0
  %1280 = vmatpush2.msra.mxu0 0.0
  %1281 = vmatprep.subr.mxu0 0.0
  %1282 = vmatpush2.msra.mxu0 0.0
  %1283 = vmatprep.subr.mxu0 0.0
  %1284 = vmatpush2.msra.mxu0 0.0
  %1285 = vmatprep.subr.mxu0 0.0
  %1286 = vmatpush2.msra.mxu0 0.0
  %1287 = vmatprep.subr.mxu0 0.0
  %1288 = vmatpush2.msra.mxu0 0.0
  %1289 = vmatprep.subr.mxu0 0.0
  %1290 = vmatpush2.msra.mxu0 0.0
  %1291 = vmatprep.subr.mxu0 0.0
  %1292 = vmatpush2.msra.mxu0 0.0
  %1293 = vmatprep.subr.mxu0 0.0
  %1294 = vmatpush2.msra.mxu0 0.0
  %1295 = vmatprep.subr.mxu0 0.0
  %1296 = vmatpush2.msra.mxu0 0.0
  %1297 = vmatprep.subr.mxu0 0.0
  %1298 = vmatpush2.msra.mxu0 0.0
  %1299 = vmatprep.subr.mxu0 0.0
  %1300 = vmatpush2.msra.mxu0 0.0
  %1301 = vmatprep.mubr.f32.mxu0 0.0
  %1302 = vmatmul.mubr.f32.gmra.mxu0 %v1164
  %v1303 = vpop.f32.mrf.mxu0
  %v1304 = vadd.f32 0.0, %v1303
  %v1305 = vpop.f32.mrf.mxu0
  %v1306 = vadd.f32 0.0, %v1305
  %1307 = vdwg.mxu0
  %1308 = vmatprep.subr.mxu0 0.0
  %1309 = vmatpush1.msra.mxu0 0.0
  %1310 = vmatprep.subr.mxu0 0.0
  %1311 = vmatpush1.msra.mxu0 0.0
  %1312 = vmatprep.subr.mxu0 0.0
  %1313 = vmatpush1.msra.mxu0 0.0
  %1314 = vmatprep.subr.mxu0 0.0
  %1315 = vmatpush1.msra.mxu0 0.0
  %1316 = vmatprep.subr.mxu0 0.0
  %1317 = vmatpush1.msra.mxu0 0.0
  %1318 = vmatprep.subr.mxu0 0.0
  %1319 = vmatpush1.msra.mxu0 0.0
  %1320 = vmatprep.subr.mxu0 0.0
  %1321 = vmatpush1.msra.mxu0 0.0
  %1322 = vmatprep.subr.mxu0 0.0
  %1323 = vmatpush1.msra.mxu0 0.0
  %1324 = vmatprep.subr.mxu0 0.0
  %1325 = vmatpush1.msra.mxu0 0.0
  %1326 = vmatprep.subr.mxu0 0.0
  %1327 = vmatpush1.msra.mxu0 0.0
  %1328 = vmatprep.subr.mxu0 0.0
  %1329 = vmatpush1.msra.mxu0 0.0
  %1330 = vmatprep.subr.mxu0 0.0
  %1331 = vmatpush1.msra.mxu0 0.0
  %1332 = vmatprep.subr.mxu0 0.0
  %1333 = vmatpush1.msra.mxu0 0.0
  %1334 = vmatprep.subr.mxu0 0.0
  %1335 = vmatpush1.msra.mxu0 0.0
  %1336 = vmatprep.subr.mxu0 0.0
  %1337 = vmatpush1.msra.mxu0 0.0
  %1338 = vmatprep.subr.mxu0 %v1162
  %1339 = vmatpush1.msra.mxu0 %v1161
  %1340 = vmatprep.subr.mxu0 0.0
  %1341 = vmatpush2.msra.mxu0 0.0
  %1342 = vmatprep.subr.mxu0 0.0
  %1343 = vmatpush2.msra.mxu0 0.0
  %1344 = vmatprep.subr.mxu0 0.0
  %1345 = vmatpush2.msra.mxu0 0.0
  %1346 = vmatprep.subr.mxu0 0.0
  %1347 = vmatpush2.msra.mxu0 0.0
  %1348 = vmatprep.subr.mxu0 0.0
  %1349 = vmatpush2.msra.mxu0 0.0
  %1350 = vmatprep.subr.mxu0 0.0
  %1351 = vmatpush2.msra.mxu0 0.0
  %1352 = vmatprep.subr.mxu0 0.0
  %1353 = vmatpush2.msra.mxu0 0.0
  %1354 = vmatprep.subr.mxu0 0.0
  %1355 = vmatpush2.msra.mxu0 0.0
  %1356 = vmatprep.subr.mxu0 0.0
  %1357 = vmatpush2.msra.mxu0 0.0
  %1358 = vmatprep.subr.mxu0 0.0
  %1359 = vmatpush2.msra.mxu0 0.0
  %1360 = vmatprep.subr.mxu0 0.0
  %1361 = vmatpush2.msra.mxu0 0.0
  %1362 = vmatprep.subr.mxu0 0.0
  %1363 = vmatpush2.msra.mxu0 0.0
  %1364 = vmatprep.subr.mxu0 0.0
  %1365 = vmatpush2.msra.mxu0 0.0
  %1366 = vmatprep.subr.mxu0 0.0
  %1367 = vmatpush2.msra.mxu0 0.0
  %1368 = vmatprep.subr.mxu0 0.0
  %1369 = vmatpush2.msra.mxu0 0.0
  %1370 = vmatprep.subr.mxu0 0.0
  %1371 = vmatpush2.msra.mxu0 0.0
  %1372 = vmatprep.mubr.f32.mxu0 0.0
  %1373 = vmatmul.mubr.f32.gmra.mxu0 %v1164
  %v1374 = vpop.f32.mrf.mxu0
  %v1375 = vadd.f32 0.0, %v1374
  %v1376 = vpop.f32.mrf.mxu0
  %v1377 = vadd.f32 0.0, %v1376
  %1378 = vdwg.mxu0
  %v1379 = vmul.f32 %v1233, %v390
  %v1380 = vmul.f32 %v1235, %v394
  %v1381 = vmul.f32 %v1304, %v398
  %v1382 = vmul.f32 %v1306, %v402
  %v1383 = vmul.f32 %v1375, %v406
  %v1384 = vmul.f32 %v1377, %v410
  %v1385 = vadd.f32 %v1379, %v1380
  %v1386 = vadd.f32 %v1385, %v1381
  %v1387 = vadd.f32 %v1386, %v1382
  %v1388 = vadd.f32 %v1387, %v1383
  %v1389 = vadd.f32 %v1388, %v1384
  %1390 = vadd.xlane.f32.xlu0 %v1389
  %v1391 = vpop.xlane.xlu0 %1390
  %v1392 = vmul.f32 %v1391, 0.001953125
  %v1393 = vsub.f32 %v1233, %v1392
  %v1394 = vsub.f32 %v1235, %v1392
  %v1395 = vsub.f32 %v1304, %v1392
  %v1396 = vsub.f32 %v1306, %v1392
  %v1397 = vsub.f32 %v1375, %v1392
  %v1398 = vsub.f32 %v1377, %v1392
  %v1399 = vmul.f32 %v1393, %v390
  %v1400 = vmul.f32 %v1394, %v394
  %v1401 = vmul.f32 %v1395, %v398
  %v1402 = vmul.f32 %v1396, %v402
  %v1403 = vmul.f32 %v1397, %v406
  %v1404 = vmul.f32 %v1398, %v410
  %v1405 = vmul.f32 %v1399, %v1399
  %v1406 = vmul.f32 %v1400, %v1400
  %v1407 = vmul.f32 %v1401, %v1401
  %v1408 = vmul.f32 %v1402, %v1402
  %v1409 = vmul.f32 %v1403, %v1403
  %v1410 = vmul.f32 %v1404, %v1404
  %v1411 = vadd.f32 %v1405, %v1406
  %v1412 = vadd.f32 %v1411, %v1407
  %v1413 = vadd.f32 %v1412, %v1408
  %v1414 = vadd.f32 %v1413, %v1409
  %v1415 = vadd.f32 %v1414, %v1410
  %1416 = vadd.xlane.f32.xlu0 %v1415
  %v1417 = vpop.xlane.xlu0 %1416
  %v1418 = vmul.f32 %v1417, 0.001953125
  %v1419 = vadd.f32 %v1418, 1e-05
  %v1420 = vrsqrt.pop %v1419
  %v1421 = vmul.f32 %v1393, %v1420
  %v1422 = vmul.f32 %v1394, %v1420
  %v1423 = vmul.f32 %v1395, %v1420
  %v1424 = vmul.f32 %v1396, %v1420
  %v1425 = vmul.f32 %v1397, %v1420
  %v1426 = vmul.f32 %v1398, %v1420
  %1428 = vset.pattern.permute.xlu0 0
  %1429 = vperm.xlu0 %1428, %v796
  %v1430 = vpop.permute.xlu0 %1429
  %v1432 = vmul.f32 %v1421, %v1430
  %v1433 = vmul.f32 %v1422, %v1430
  %v1434 = vmul.f32 %v1423, %v1430
  %v1435 = vmul.f32 %v1424, %v1430
  %v1436 = vmul.f32 %v1425, %v1430
  %v1437 = vmul.f32 %v1426, %v1430
  %1439 = vset.pattern.permute.xlu0 0
  %1440 = vperm.xlu0 %1439, %v797
  %v1441 = vpop.permute.xlu0 %1440
  %v1443 = vadd.f32 %v1432, %v1441
  %v1444 = vadd.f32 %v1433, %v1441
  %v1445 = vadd.f32 %v1434, %v1441
  %v1446 = vadd.f32 %v1435, %v1441
  %v1447 = vadd.f32 %v1436, %v1441
  %v1448 = vadd.f32 %v1437, %v1441
  %v1449 = vmax.f32 %v1443, 0.0
  %v1450 = vmax.f32 %v1444, 0.0
  %v1451 = vmax.f32 %v1445, 0.0
  %v1452 = vmax.f32 %v1446, 0.0
  %v1453 = vmax.f32 %v1447, 0.0
  %v1454 = vmax.f32 %v1448, 0.0
  %v1455 = vld [vmem:[%s2] sm:$0xff]
  %v1456 = vld [vmem:[%s2 + $0x8] sm:$0xff]
  %v1457 = vld [vmem:[%s2 + $0x10] sm:$0xff]
  %v1458 = vld [vmem:[%s2 + $0x18] sm:$0xff]
  %v1459 = vld [vmem:[%s2 + $0x20] sm:$0xff]
  %v1460 = vld [vmem:[%s2 + $0x28] sm:$0xff]
  %v1461 = vmul.f32 %v780, %v1455
  %v1462 = vmul.f32 %v781, %v1456
  %v1463 = vmul.f32 %v782, %v1457
  %v1464 = vmul.f32 %v783, %v1458
  %v1465 = vmul.f32 %v784, %v1459
  %v1466 = vmul.f32 %v785, %v1460
  %v1467 = vld [vmem:[%s3] sm:$0xff]
  %v1468 = vld [vmem:[%s3 + $0x8] sm:$0xff]
  %v1469 = vld [vmem:[%s3 + $0x10] sm:$0xff]
  %v1470 = vld [vmem:[%s3 + $0x18] sm:$0xff]
  %v1471 = vld [vmem:[%s3 + $0x20] sm:$0xff]
  %v1472 = vld [vmem:[%s3 + $0x28] sm:$0xff]
  %v1473 = vmul.f32 %v1449, %v1467
  %v1474 = vmul.f32 %v1450, %v1468
  %v1475 = vmul.f32 %v1451, %v1469
  %v1476 = vmul.f32 %v1452, %v1470
  %v1477 = vmul.f32 %v1453, %v1471
  %v1478 = vmul.f32 %v1454, %v1472
  %v1479 = vadd.f32 %v1461, %v1473
  %v1480 = vadd.f32 %v1462, %v1474
  %v1481 = vadd.f32 %v1463, %v1475
  %v1482 = vadd.f32 %v1464, %v1476
  %v1483 = vadd.f32 %v1465, %v1477
  %v1484 = vadd.f32 %v1466, %v1478
  %v1485 = vld [vmem:[%s17] sm:$0xff]
  %v1486 = vld [vmem:[%s18] sm:$0xff]
  %v1487 = vld [vmem:[%s19] sm:$0xff]
  %v1488 = vld [vmem:[%s20] sm:$0xff]
  %v1489 = vld [vmem:[%s21] sm:$0xff]
  %v1490 = vld [vmem:[%s22] sm:$0xff]
  %1491 = vrot.lane.b32.xlu0 %v1479, 19
  %v1492 = vpop.permute.xlu0 %1491
  %1493 = vrot.lane.b32.xlu0 %v1480, 19
  %v1494 = vpop.permute.xlu0 %1493
  %1495 = vrot.lane.b32.xlu0 %v1481, 19
  %v1496 = vpop.permute.xlu0 %1495
  %1497 = vrot.lane.b32.xlu0 %v1482, 19
  %v1498 = vpop.permute.xlu0 %1497
  %1499 = vrot.lane.b32.xlu0 %v1483, 19
  %v1500 = vpop.permute.xlu0 %1499
  %1501 = vrot.lane.b32.xlu0 %v1484, 19
  %v1502 = vpop.permute.xlu0 %1501
  %v1503 = vsel %vm101, %v1500, %v1502
  %v1504 = vsel %vm101, %v1498, %v1500
  %v1505 = vsel %vm101, %v1496, %v1498
  %v1506 = vsel %vm101, %v1494, %v1496
  %v1507 = vsel %vm101, %v1492, %v1494
  %v1508 = vsel %vm101, %v1502, %v1492
  %1510 = vset.pattern.permute.xlu0 0
  %1511 = vperm.xlu0 %1510, %v1485
  %v1512 = vpop.permute.xlu0 %1511
  %v1514 = vmul.f32 %v1508, %v1512
  %v1515 = vmul.f32 %v1507, %v1512
  %v1516 = vmul.f32 %v1506, %v1512
  %v1517 = vmul.f32 %v1505, %v1512
  %v1518 = vmul.f32 %v1504, %v1512
  %v1519 = vmul.f32 %v1503, %v1512
  %v1520 = vadd.f32 %v1514, 0.0
  %v1521 = vadd.f32 %v1515, 0.0
  %v1522 = vadd.f32 %v1516, 0.0
  %v1523 = vadd.f32 %v1517, 0.0
  %v1524 = vadd.f32 %v1518, 0.0
  %v1525 = vadd.f32 %v1519, 0.0
  %1526 = vrot.lane.b32.xlu0 %v1479, 18
  %v1527 = vpop.permute.xlu0 %1526
  %1528 = vrot.lane.b32.xlu0 %v1480, 18
  %v1529 = vpop.permute.xlu0 %1528
  %1530 = vrot.lane.b32.xlu0 %v1481, 18
  %v1531 = vpop.permute.xlu0 %1530
  %1532 = vrot.lane.b32.xlu0 %v1482, 18
  %v1533 = vpop.permute.xlu0 %1532
  %1534 = vrot.lane.b32.xlu0 %v1483, 18
  %v1535 = vpop.permute.xlu0 %1534
  %1536 = vrot.lane.b32.xlu0 %v1484, 18
  %v1537 = vpop.permute.xlu0 %1536
  %v1538 = vsel %vm137, %v1535, %v1537
  %v1539 = vsel %vm137, %v1533, %v1535
  %v1540 = vsel %vm137, %v1531, %v1533
  %v1541 = vsel %vm137, %v1529, %v1531
  %v1542 = vsel %vm137, %v1527, %v1529
  %v1543 = vsel %vm137, %v1537, %v1527
  %1544 = vset.pattern.permute.xlu0 1
  %1545 = vperm.xlu0 %1544, %v1485
  %v1546 = vpop.permute.xlu0 %1545
  %v1548 = vmul.f32 %v1543, %v1546
  %v1549 = vmul.f32 %v1542, %v1546
  %v1550 = vmul.f32 %v1541, %v1546
  %v1551 = vmul.f32 %v1540, %v1546
  %v1552 = vmul.f32 %v1539, %v1546
  %v1553 = vmul.f32 %v1538, %v1546
  %v1554 = vadd.f32 %v1520, %v1548
  %v1555 = vadd.f32 %v1521, %v1549
  %v1556 = vadd.f32 %v1522, %v1550
  %v1557 = vadd.f32 %v1523, %v1551
  %v1558 = vadd.f32 %v1524, %v1552
  %v1559 = vadd.f32 %v1525, %v1553
  %1560 = vrot.lane.b32.xlu0 %v1479, 17
  %v1561 = vpop.permute.xlu0 %1560
  %1562 = vrot.lane.b32.xlu0 %v1480, 17
  %v1563 = vpop.permute.xlu0 %1562
  %1564 = vrot.lane.b32.xlu0 %v1481, 17
  %v1565 = vpop.permute.xlu0 %1564
  %1566 = vrot.lane.b32.xlu0 %v1482, 17
  %v1567 = vpop.permute.xlu0 %1566
  %1568 = vrot.lane.b32.xlu0 %v1483, 17
  %v1569 = vpop.permute.xlu0 %1568
  %1570 = vrot.lane.b32.xlu0 %v1484, 17
  %v1571 = vpop.permute.xlu0 %1570
  %v1572 = vsel %vm172, %v1569, %v1571
  %v1573 = vsel %vm172, %v1567, %v1569
  %v1574 = vsel %vm172, %v1565, %v1567
  %v1575 = vsel %vm172, %v1563, %v1565
  %v1576 = vsel %vm172, %v1561, %v1563
  %v1577 = vsel %vm172, %v1571, %v1561
  %1578 = vset.pattern.permute.xlu0 2
  %1579 = vperm.xlu0 %1578, %v1485
  %v1580 = vpop.permute.xlu0 %1579
  %v1582 = vmul.f32 %v1577, %v1580
  %v1583 = vmul.f32 %v1576, %v1580
  %v1584 = vmul.f32 %v1575, %v1580
  %v1585 = vmul.f32 %v1574, %v1580
  %v1586 = vmul.f32 %v1573, %v1580
  %v1587 = vmul.f32 %v1572, %v1580
  %v1588 = vadd.f32 %v1554, %v1582
  %v1589 = vadd.f32 %v1555, %v1583
  %v1590 = vadd.f32 %v1556, %v1584
  %v1591 = vadd.f32 %v1557, %v1585
  %v1592 = vadd.f32 %v1558, %v1586
  %v1593 = vadd.f32 %v1559, %v1587
  %1594 = vrot.lane.b32.xlu0 %v1479, 1
  %v1595 = vpop.permute.xlu0 %1594
  %1596 = vrot.lane.b32.xlu0 %v1480, 1
  %v1597 = vpop.permute.xlu0 %1596
  %1598 = vrot.lane.b32.xlu0 %v1481, 1
  %v1599 = vpop.permute.xlu0 %1598
  %1600 = vrot.lane.b32.xlu0 %v1482, 1
  %v1601 = vpop.permute.xlu0 %1600
  %1602 = vrot.lane.b32.xlu0 %v1483, 1
  %v1603 = vpop.permute.xlu0 %1602
  %1604 = vrot.lane.b32.xlu0 %v1484, 1
  %v1605 = vpop.permute.xlu0 %1604
  %v1606 = vsel %vm207, %v1603, %v1605
  %v1607 = vsel %vm207, %v1601, %v1603
  %v1608 = vsel %vm207, %v1599, %v1601
  %v1609 = vsel %vm207, %v1597, %v1599
  %v1610 = vsel %vm207, %v1595, %v1597
  %v1611 = vsel %vm207, %v1605, %v1595
  %1612 = vset.pattern.permute.xlu0 3
  %1613 = vperm.xlu0 %1612, %v1485
  %v1614 = vpop.permute.xlu0 %1613
  %v1616 = vmul.f32 %v1611, %v1614
  %v1617 = vmul.f32 %v1610, %v1614
  %v1618 = vmul.f32 %v1609, %v1614
  %v1619 = vmul.f32 %v1608, %v1614
  %v1620 = vmul.f32 %v1607, %v1614
  %v1621 = vmul.f32 %v1606, %v1614
  %v1622 = vadd.f32 %v1588, %v1616
  %v1623 = vadd.f32 %v1589, %v1617
  %v1624 = vadd.f32 %v1590, %v1618
  %v1625 = vadd.f32 %v1591, %v1619
  %v1626 = vadd.f32 %v1592, %v1620
  %v1627 = vadd.f32 %v1593, %v1621
  %1628 = vset.pattern.permute.xlu0 4
  %1629 = vperm.xlu0 %1628, %v1485
  %v1630 = vpop.permute.xlu0 %1629
  %v1632 = vmul.f32 %v1479, %v1630
  %v1633 = vmul.f32 %v1480, %v1630
  %v1634 = vmul.f32 %v1481, %v1630
  %v1635 = vmul.f32 %v1482, %v1630
  %v1636 = vmul.f32 %v1483, %v1630
  %v1637 = vmul.f32 %v1484, %v1630
  %v1638 = vadd.f32 %v1622, %v1632
  %v1639 = vadd.f32 %v1623, %v1633
  %v1640 = vadd.f32 %v1624, %v1634
  %v1641 = vadd.f32 %v1625, %v1635
  %v1642 = vadd.f32 %v1626, %v1636
  %v1643 = vadd.f32 %v1627, %v1637
  %1644 = vrot.lane.b32.xlu0 %v1479, 127
  %v1645 = vpop.permute.xlu0 %1644
  %1646 = vrot.lane.b32.xlu0 %v1480, 127
  %v1647 = vpop.permute.xlu0 %1646
  %1648 = vrot.lane.b32.xlu0 %v1481, 127
  %v1649 = vpop.permute.xlu0 %1648
  %1650 = vrot.lane.b32.xlu0 %v1482, 127
  %v1651 = vpop.permute.xlu0 %1650
  %1652 = vrot.lane.b32.xlu0 %v1483, 127
  %v1653 = vpop.permute.xlu0 %1652
  %1654 = vrot.lane.b32.xlu0 %v1484, 127
  %v1655 = vpop.permute.xlu0 %1654
  %v1656 = vsel %vm258, %v1653, %v1655
  %v1657 = vsel %vm258, %v1651, %v1653
  %v1658 = vsel %vm258, %v1649, %v1651
  %v1659 = vsel %vm258, %v1647, %v1649
  %v1660 = vsel %vm258, %v1645, %v1647
  %v1661 = vsel %vm258, %v1655, %v1645
  %1662 = vset.pattern.permute.xlu0 5
  %1663 = vperm.xlu0 %1662, %v1485
  %v1664 = vpop.permute.xlu0 %1663
  %v1666 = vmul.f32 %v1660, %v1664
  %v1667 = vmul.f32 %v1659, %v1664
  %v1668 = vmul.f32 %v1658, %v1664
  %v1669 = vmul.f32 %v1657, %v1664
  %v1670 = vmul.f32 %v1656, %v1664
  %v1671 = vmul.f32 %v1661, %v1664
  %v1672 = vadd.f32 %v1638, %v1666
  %v1673 = vadd.f32 %v1639, %v1667
  %v1674 = vadd.f32 %v1640, %v1668
  %v1675 = vadd.f32 %v1641, %v1669
  %v1676 = vadd.f32 %v1642, %v1670
  %v1677 = vadd.f32 %v1643, %v1671
  %1678 = vrot.lane.b32.xlu0 %v1479, 111
  %v1679 = vpop.permute.xlu0 %1678
  %1680 = vrot.lane.b32.xlu0 %v1480, 111
  %v1681 = vpop.permute.xlu0 %1680
  %1682 = vrot.lane.b32.xlu0 %v1481, 111
  %v1683 = vpop.permute.xlu0 %1682
  %1684 = vrot.lane.b32.xlu0 %v1482, 111
  %v1685 = vpop.permute.xlu0 %1684
  %1686 = vrot.lane.b32.xlu0 %v1483, 111
  %v1687 = vpop.permute.xlu0 %1686
  %1688 = vrot.lane.b32.xlu0 %v1484, 111
  %v1689 = vpop.permute.xlu0 %1688
  %v1690 = vsel %vm293, %v1687, %v1689
  %v1691 = vsel %vm293, %v1685, %v1687
  %v1692 = vsel %vm293, %v1683, %v1685
  %v1693 = vsel %vm293, %v1681, %v1683
  %v1694 = vsel %vm293, %v1679, %v1681
  %v1695 = vsel %vm293, %v1689, %v1679
  %1696 = vset.pattern.permute.xlu0 6
  %1697 = vperm.xlu0 %1696, %v1485
  %v1698 = vpop.permute.xlu0 %1697
  %v1700 = vmul.f32 %v1694, %v1698
  %v1701 = vmul.f32 %v1693, %v1698
  %v1702 = vmul.f32 %v1692, %v1698
  %v1703 = vmul.f32 %v1691, %v1698
  %v1704 = vmul.f32 %v1690, %v1698
  %v1705 = vmul.f32 %v1695, %v1698
  %v1706 = vadd.f32 %v1672, %v1700
  %v1707 = vadd.f32 %v1673, %v1701
  %v1708 = vadd.f32 %v1674, %v1702
  %v1709 = vadd.f32 %v1675, %v1703
  %v1710 = vadd.f32 %v1676, %v1704
  %v1711 = vadd.f32 %v1677, %v1705
  %1712 = vrot.lane.b32.xlu0 %v1479, 110
  %v1713 = vpop.permute.xlu0 %1712
  %1714 = vrot.lane.b32.xlu0 %v1480, 110
  %v1715 = vpop.permute.xlu0 %1714
  %1716 = vrot.lane.b32.xlu0 %v1481, 110
  %v1717 = vpop.permute.xlu0 %1716
  %1718 = vrot.lane.b32.xlu0 %v1482, 110
  %v1719 = vpop.permute.xlu0 %1718
  %1720 = vrot.lane.b32.xlu0 %v1483, 110
  %v1721 = vpop.permute.xlu0 %1720
  %1722 = vrot.lane.b32.xlu0 %v1484, 110
  %v1723 = vpop.permute.xlu0 %1722
  %v1724 = vsel %vm328, %v1721, %v1723
  %v1725 = vsel %vm328, %v1719, %v1721
  %v1726 = vsel %vm328, %v1717, %v1719
  %v1727 = vsel %vm328, %v1715, %v1717
  %v1728 = vsel %vm328, %v1713, %v1715
  %v1729 = vsel %vm328, %v1723, %v1713
  %1730 = vset.pattern.permute.xlu0 7
  %1731 = vperm.xlu0 %1730, %v1485
  %v1732 = vpop.permute.xlu0 %1731
  %v1734 = vmul.f32 %v1728, %v1732
  %v1735 = vmul.f32 %v1727, %v1732
  %v1736 = vmul.f32 %v1726, %v1732
  %v1737 = vmul.f32 %v1725, %v1732
  %v1738 = vmul.f32 %v1724, %v1732
  %v1739 = vmul.f32 %v1729, %v1732
  %v1740 = vadd.f32 %v1706, %v1734
  %v1741 = vadd.f32 %v1707, %v1735
  %v1742 = vadd.f32 %v1708, %v1736
  %v1743 = vadd.f32 %v1709, %v1737
  %v1744 = vadd.f32 %v1710, %v1738
  %v1745 = vadd.f32 %v1711, %v1739
  %1746 = vrot.lane.b32.xlu0 %v1479, 109
  %v1747 = vpop.permute.xlu0 %1746
  %1748 = vrot.lane.b32.xlu0 %v1480, 109
  %v1749 = vpop.permute.xlu0 %1748
  %1750 = vrot.lane.b32.xlu0 %v1481, 109
  %v1751 = vpop.permute.xlu0 %1750
  %1752 = vrot.lane.b32.xlu0 %v1482, 109
  %v1753 = vpop.permute.xlu0 %1752
  %1754 = vrot.lane.b32.xlu0 %v1483, 109
  %v1755 = vpop.permute.xlu0 %1754
  %1756 = vrot.lane.b32.xlu0 %v1484, 109
  %v1757 = vpop.permute.xlu0 %1756
  %v1758 = vsel %vm363, %v1755, %v1757
  %v1759 = vsel %vm363, %v1753, %v1755
  %v1760 = vsel %vm363, %v1751, %v1753
  %v1761 = vsel %vm363, %v1749, %v1751
  %v1762 = vsel %vm363, %v1747, %v1749
  %v1763 = vsel %vm363, %v1757, %v1747
  %1764 = vset.pattern.permute.xlu0 8
  %1765 = vperm.xlu0 %1764, %v1485
  %v1766 = vpop.permute.xlu0 %1765
  %v1768 = vmul.f32 %v1762, %v1766
  %v1769 = vmul.f32 %v1761, %v1766
  %v1770 = vmul.f32 %v1760, %v1766
  %v1771 = vmul.f32 %v1759, %v1766
  %v1772 = vmul.f32 %v1758, %v1766
  %v1773 = vmul.f32 %v1763, %v1766
  %v1774 = vadd.f32 %v1740, %v1768
  %v1775 = vadd.f32 %v1741, %v1769
  %v1776 = vadd.f32 %v1742, %v1770
  %v1777 = vadd.f32 %v1743, %v1771
  %v1778 = vadd.f32 %v1744, %v1772
  %v1779 = vadd.f32 %v1745, %v1773
  %v1780 = vmul.f32 %v1774, %v390
  %v1781 = vmul.f32 %v1775, %v394
  %v1782 = vmul.f32 %v1776, %v398
  %v1783 = vmul.f32 %v1777, %v402
  %v1784 = vmul.f32 %v1778, %v406
  %v1785 = vmul.f32 %v1779, %v410
  %v1786 = vadd.f32 %v1780, %v1781
  %v1787 = vadd.f32 %v1786, %v1782
  %v1788 = vadd.f32 %v1787, %v1783
  %v1789 = vadd.f32 %v1788, %v1784
  %v1790 = vadd.f32 %v1789, %v1785
  %1791 = vadd.xlane.f32.xlu0 %v1790
  %v1792 = vpop.xlane.xlu0 %1791
  %v1793 = vmul.f32 %v1792, 0.001953125
  %v1794 = vsub.f32 %v1774, %v1793
  %v1795 = vsub.f32 %v1775, %v1793
  %v1796 = vsub.f32 %v1776, %v1793
  %v1797 = vsub.f32 %v1777, %v1793
  %v1798 = vsub.f32 %v1778, %v1793
  %v1799 = vsub.f32 %v1779, %v1793
  %v1800 = vmul.f32 %v1794, %v390
  %v1801 = vmul.f32 %v1795, %v394
  %v1802 = vmul.f32 %v1796, %v398
  %v1803 = vmul.f32 %v1797, %v402
  %v1804 = vmul.f32 %v1798, %v406
  %v1805 = vmul.f32 %v1799, %v410
  %v1806 = vmul.f32 %v1800, %v1800
  %v1807 = vmul.f32 %v1801, %v1801
  %v1808 = vmul.f32 %v1802, %v1802
  %v1809 = vmul.f32 %v1803, %v1803
  %v1810 = vmul.f32 %v1804, %v1804
  %v1811 = vmul.f32 %v1805, %v1805
  %v1812 = vadd.f32 %v1806, %v1807
  %v1813 = vadd.f32 %v1812, %v1808
  %v1814 = vadd.f32 %v1813, %v1809
  %v1815 = vadd.f32 %v1814, %v1810
  %v1816 = vadd.f32 %v1815, %v1811
  %1817 = vadd.xlane.f32.xlu0 %v1816
  %v1818 = vpop.xlane.xlu0 %1817
  %v1819 = vmul.f32 %v1818, 0.001953125
  %v1820 = vadd.f32 %v1819, 1e-05
  %v1821 = vrsqrt.pop %v1820
  %v1822 = vmul.f32 %v1794, %v1821
  %v1823 = vmul.f32 %v1795, %v1821
  %v1824 = vmul.f32 %v1796, %v1821
  %v1825 = vmul.f32 %v1797, %v1821
  %v1826 = vmul.f32 %v1798, %v1821
  %v1827 = vmul.f32 %v1799, %v1821
  %1829 = vset.pattern.permute.xlu0 0
  %1830 = vperm.xlu0 %1829, %v1486
  %v1831 = vpop.permute.xlu0 %1830
  %v1833 = vmul.f32 %v1822, %v1831
  %v1834 = vmul.f32 %v1823, %v1831
  %v1835 = vmul.f32 %v1824, %v1831
  %v1836 = vmul.f32 %v1825, %v1831
  %v1837 = vmul.f32 %v1826, %v1831
  %v1838 = vmul.f32 %v1827, %v1831
  %1840 = vset.pattern.permute.xlu0 0
  %1841 = vperm.xlu0 %1840, %v1487
  %v1842 = vpop.permute.xlu0 %1841
  %v1844 = vadd.f32 %v1833, %v1842
  %v1845 = vadd.f32 %v1834, %v1842
  %v1846 = vadd.f32 %v1835, %v1842
  %v1847 = vadd.f32 %v1836, %v1842
  %v1848 = vadd.f32 %v1837, %v1842
  %v1849 = vadd.f32 %v1838, %v1842
  %v1850 = vmax.f32 %v1844, 0.0
  %v1851 = vmax.f32 %v1845, 0.0
  %v1852 = vmax.f32 %v1846, 0.0
  %v1853 = vmax.f32 %v1847, 0.0
  %v1854 = vmax.f32 %v1848, 0.0
  %v1855 = vmax.f32 %v1849, 0.0
  %v1857 = vsel %vm493, %v1488, 0
  %1859 = vmatprep.subr.mxu0 0.0
  %1860 = vmatpush1.msra.mxu0 0.0
  %1861 = vmatprep.subr.mxu0 0.0
  %1862 = vmatpush1.msra.mxu0 0.0
  %1863 = vmatprep.subr.mxu0 0.0
  %1864 = vmatpush1.msra.mxu0 0.0
  %1865 = vmatprep.subr.mxu0 0.0
  %1866 = vmatpush1.msra.mxu0 0.0
  %1867 = vmatprep.subr.mxu0 0.0
  %1868 = vmatpush1.msra.mxu0 0.0
  %1869 = vmatprep.subr.mxu0 0.0
  %1870 = vmatpush1.msra.mxu0 0.0
  %1871 = vmatprep.subr.mxu0 0.0
  %1872 = vmatpush1.msra.mxu0 0.0
  %1873 = vmatprep.subr.mxu0 0.0
  %1874 = vmatpush1.msra.mxu0 0.0
  %1875 = vmatprep.subr.mxu0 0.0
  %1876 = vmatpush1.msra.mxu0 0.0
  %1877 = vmatprep.subr.mxu0 0.0
  %1878 = vmatpush1.msra.mxu0 0.0
  %1879 = vmatprep.subr.mxu0 0.0
  %1880 = vmatpush1.msra.mxu0 0.0
  %1881 = vmatprep.subr.mxu0 0.0
  %1882 = vmatpush1.msra.mxu0 0.0
  %1883 = vmatprep.subr.mxu0 0.0
  %1884 = vmatpush1.msra.mxu0 0.0
  %1885 = vmatprep.subr.mxu0 0.0
  %1886 = vmatpush1.msra.mxu0 0.0
  %1887 = vmatprep.subr.mxu0 0.0
  %1888 = vmatpush1.msra.mxu0 0.0
  %1889 = vmatprep.subr.mxu0 %v1851
  %1890 = vmatpush1.msra.mxu0 %v1850
  %1891 = vmatprep.subr.mxu0 0.0
  %1892 = vmatpush2.msra.mxu0 0.0
  %1893 = vmatprep.subr.mxu0 0.0
  %1894 = vmatpush2.msra.mxu0 0.0
  %1895 = vmatprep.subr.mxu0 0.0
  %1896 = vmatpush2.msra.mxu0 0.0
  %1897 = vmatprep.subr.mxu0 0.0
  %1898 = vmatpush2.msra.mxu0 0.0
  %1899 = vmatprep.subr.mxu0 0.0
  %1900 = vmatpush2.msra.mxu0 0.0
  %1901 = vmatprep.subr.mxu0 0.0
  %1902 = vmatpush2.msra.mxu0 0.0
  %1903 = vmatprep.subr.mxu0 0.0
  %1904 = vmatpush2.msra.mxu0 0.0
  %1905 = vmatprep.subr.mxu0 0.0
  %1906 = vmatpush2.msra.mxu0 0.0
  %1907 = vmatprep.subr.mxu0 0.0
  %1908 = vmatpush2.msra.mxu0 0.0
  %1909 = vmatprep.subr.mxu0 0.0
  %1910 = vmatpush2.msra.mxu0 0.0
  %1911 = vmatprep.subr.mxu0 0.0
  %1912 = vmatpush2.msra.mxu0 0.0
  %1913 = vmatprep.subr.mxu0 0.0
  %1914 = vmatpush2.msra.mxu0 0.0
  %1915 = vmatprep.subr.mxu0 0.0
  %1916 = vmatpush2.msra.mxu0 0.0
  %1917 = vmatprep.subr.mxu0 0.0
  %1918 = vmatpush2.msra.mxu0 0.0
  %1919 = vmatprep.subr.mxu0 0.0
  %1920 = vmatpush2.msra.mxu0 0.0
  %1921 = vmatprep.subr.mxu0 0.0
  %1922 = vmatpush2.msra.mxu0 0.0
  %1923 = vmatprep.mubr.f32.mxu0 0.0
  %1924 = vmatmul.mubr.f32.gmra.mxu0 %v1857
  %v1925 = vpop.f32.mrf.mxu0
  %v1926 = vadd.f32 0.0, %v1925
  %v1927 = vpop.f32.mrf.mxu0
  %v1928 = vadd.f32 0.0, %v1927
  %1929 = vdwg.mxu0
  %1930 = vmatprep.subr.mxu0 0.0
  %1931 = vmatpush1.msra.mxu0 0.0
  %1932 = vmatprep.subr.mxu0 0.0
  %1933 = vmatpush1.msra.mxu0 0.0
  %1934 = vmatprep.subr.mxu0 0.0
  %1935 = vmatpush1.msra.mxu0 0.0
  %1936 = vmatprep.subr.mxu0 0.0
  %1937 = vmatpush1.msra.mxu0 0.0
  %1938 = vmatprep.subr.mxu0 0.0
  %1939 = vmatpush1.msra.mxu0 0.0
  %1940 = vmatprep.subr.mxu0 0.0
  %1941 = vmatpush1.msra.mxu0 0.0
  %1942 = vmatprep.subr.mxu0 0.0
  %1943 = vmatpush1.msra.mxu0 0.0
  %1944 = vmatprep.subr.mxu0 0.0
  %1945 = vmatpush1.msra.mxu0 0.0
  %1946 = vmatprep.subr.mxu0 0.0
  %1947 = vmatpush1.msra.mxu0 0.0
  %1948 = vmatprep.subr.mxu0 0.0
  %1949 = vmatpush1.msra.mxu0 0.0
  %1950 = vmatprep.subr.mxu0 0.0
  %1951 = vmatpush1.msra.mxu0 0.0
  %1952 = vmatprep.subr.mxu0 0.0
  %1953 = vmatpush1.msra.mxu0 0.0
  %1954 = vmatprep.subr.mxu0 0.0
  %1955 = vmatpush1.msra.mxu0 0.0
  %1956 = vmatprep.subr.mxu0 0.0
  %1957 = vmatpush1.msra.mxu0 0.0
  %1958 = vmatprep.subr.mxu0 0.0
  %1959 = vmatpush1.msra.mxu0 0.0
  %1960 = vmatprep.subr.mxu0 %v1853
  %1961 = vmatpush1.msra.mxu0 %v1852
  %1962 = vmatprep.subr.mxu0 0.0
  %1963 = vmatpush2.msra.mxu0 0.0
  %1964 = vmatprep.subr.mxu0 0.0
  %1965 = vmatpush2.msra.mxu0 0.0
  %1966 = vmatprep.subr.mxu0 0.0
  %1967 = vmatpush2.msra.mxu0 0.0
  %1968 = vmatprep.subr.mxu0 0.0
  %1969 = vmatpush2.msra.mxu0 0.0
  %1970 = vmatprep.subr.mxu0 0.0
  %1971 = vmatpush2.msra.mxu0 0.0
  %1972 = vmatprep.subr.mxu0 0.0
  %1973 = vmatpush2.msra.mxu0 0.0
  %1974 = vmatprep.subr.mxu0 0.0
  %1975 = vmatpush2.msra.mxu0 0.0
  %1976 = vmatprep.subr.mxu0 0.0
  %1977 = vmatpush2.msra.mxu0 0.0
  %1978 = vmatprep.subr.mxu0 0.0
  %1979 = vmatpush2.msra.mxu0 0.0
  %1980 = vmatprep.subr.mxu0 0.0
  %1981 = vmatpush2.msra.mxu0 0.0
  %1982 = vmatprep.subr.mxu0 0.0
  %1983 = vmatpush2.msra.mxu0 0.0
  %1984 = vmatprep.subr.mxu0 0.0
  %1985 = vmatpush2.msra.mxu0 0.0
  %1986 = vmatprep.subr.mxu0 0.0
  %1987 = vmatpush2.msra.mxu0 0.0
  %1988 = vmatprep.subr.mxu0 0.0
  %1989 = vmatpush2.msra.mxu0 0.0
  %1990 = vmatprep.subr.mxu0 0.0
  %1991 = vmatpush2.msra.mxu0 0.0
  %1992 = vmatprep.subr.mxu0 0.0
  %1993 = vmatpush2.msra.mxu0 0.0
  %1994 = vmatprep.mubr.f32.mxu0 0.0
  %1995 = vmatmul.mubr.f32.gmra.mxu0 %v1857
  %v1996 = vpop.f32.mrf.mxu0
  %v1997 = vadd.f32 0.0, %v1996
  %v1998 = vpop.f32.mrf.mxu0
  %v1999 = vadd.f32 0.0, %v1998
  %2000 = vdwg.mxu0
  %2001 = vmatprep.subr.mxu0 0.0
  %2002 = vmatpush1.msra.mxu0 0.0
  %2003 = vmatprep.subr.mxu0 0.0
  %2004 = vmatpush1.msra.mxu0 0.0
  %2005 = vmatprep.subr.mxu0 0.0
  %2006 = vmatpush1.msra.mxu0 0.0
  %2007 = vmatprep.subr.mxu0 0.0
  %2008 = vmatpush1.msra.mxu0 0.0
  %2009 = vmatprep.subr.mxu0 0.0
  %2010 = vmatpush1.msra.mxu0 0.0
  %2011 = vmatprep.subr.mxu0 0.0
  %2012 = vmatpush1.msra.mxu0 0.0
  %2013 = vmatprep.subr.mxu0 0.0
  %2014 = vmatpush1.msra.mxu0 0.0
  %2015 = vmatprep.subr.mxu0 0.0
  %2016 = vmatpush1.msra.mxu0 0.0
  %2017 = vmatprep.subr.mxu0 0.0
  %2018 = vmatpush1.msra.mxu0 0.0
  %2019 = vmatprep.subr.mxu0 0.0
  %2020 = vmatpush1.msra.mxu0 0.0
  %2021 = vmatprep.subr.mxu0 0.0
  %2022 = vmatpush1.msra.mxu0 0.0
  %2023 = vmatprep.subr.mxu0 0.0
  %2024 = vmatpush1.msra.mxu0 0.0
  %2025 = vmatprep.subr.mxu0 0.0
  %2026 = vmatpush1.msra.mxu0 0.0
  %2027 = vmatprep.subr.mxu0 0.0
  %2028 = vmatpush1.msra.mxu0 0.0
  %2029 = vmatprep.subr.mxu0 0.0
  %2030 = vmatpush1.msra.mxu0 0.0
  %2031 = vmatprep.subr.mxu0 %v1855
  %2032 = vmatpush1.msra.mxu0 %v1854
  %2033 = vmatprep.subr.mxu0 0.0
  %2034 = vmatpush2.msra.mxu0 0.0
  %2035 = vmatprep.subr.mxu0 0.0
  %2036 = vmatpush2.msra.mxu0 0.0
  %2037 = vmatprep.subr.mxu0 0.0
  %2038 = vmatpush2.msra.mxu0 0.0
  %2039 = vmatprep.subr.mxu0 0.0
  %2040 = vmatpush2.msra.mxu0 0.0
  %2041 = vmatprep.subr.mxu0 0.0
  %2042 = vmatpush2.msra.mxu0 0.0
  %2043 = vmatprep.subr.mxu0 0.0
  %2044 = vmatpush2.msra.mxu0 0.0
  %2045 = vmatprep.subr.mxu0 0.0
  %2046 = vmatpush2.msra.mxu0 0.0
  %2047 = vmatprep.subr.mxu0 0.0
  %2048 = vmatpush2.msra.mxu0 0.0
  %2049 = vmatprep.subr.mxu0 0.0
  %2050 = vmatpush2.msra.mxu0 0.0
  %2051 = vmatprep.subr.mxu0 0.0
  %2052 = vmatpush2.msra.mxu0 0.0
  %2053 = vmatprep.subr.mxu0 0.0
  %2054 = vmatpush2.msra.mxu0 0.0
  %2055 = vmatprep.subr.mxu0 0.0
  %2056 = vmatpush2.msra.mxu0 0.0
  %2057 = vmatprep.subr.mxu0 0.0
  %2058 = vmatpush2.msra.mxu0 0.0
  %2059 = vmatprep.subr.mxu0 0.0
  %2060 = vmatpush2.msra.mxu0 0.0
  %2061 = vmatprep.subr.mxu0 0.0
  %2062 = vmatpush2.msra.mxu0 0.0
  %2063 = vmatprep.subr.mxu0 0.0
  %2064 = vmatpush2.msra.mxu0 0.0
  %2065 = vmatprep.mubr.f32.mxu0 0.0
  %2066 = vmatmul.mubr.f32.gmra.mxu0 %v1857
  %v2067 = vpop.f32.mrf.mxu0
  %v2068 = vadd.f32 0.0, %v2067
  %v2069 = vpop.f32.mrf.mxu0
  %v2070 = vadd.f32 0.0, %v2069
  %2071 = vdwg.mxu0
  %v2072 = vmul.f32 %v1926, %v390
  %v2073 = vmul.f32 %v1928, %v394
  %v2074 = vmul.f32 %v1997, %v398
  %v2075 = vmul.f32 %v1999, %v402
  %v2076 = vmul.f32 %v2068, %v406
  %v2077 = vmul.f32 %v2070, %v410
  %v2078 = vadd.f32 %v2072, %v2073
  %v2079 = vadd.f32 %v2078, %v2074
  %v2080 = vadd.f32 %v2079, %v2075
  %v2081 = vadd.f32 %v2080, %v2076
  %v2082 = vadd.f32 %v2081, %v2077
  %2083 = vadd.xlane.f32.xlu0 %v2082
  %v2084 = vpop.xlane.xlu0 %2083
  %v2085 = vmul.f32 %v2084, 0.001953125
  %v2086 = vsub.f32 %v1926, %v2085
  %v2087 = vsub.f32 %v1928, %v2085
  %v2088 = vsub.f32 %v1997, %v2085
  %v2089 = vsub.f32 %v1999, %v2085
  %v2090 = vsub.f32 %v2068, %v2085
  %v2091 = vsub.f32 %v2070, %v2085
  %v2092 = vmul.f32 %v2086, %v390
  %v2093 = vmul.f32 %v2087, %v394
  %v2094 = vmul.f32 %v2088, %v398
  %v2095 = vmul.f32 %v2089, %v402
  %v2096 = vmul.f32 %v2090, %v406
  %v2097 = vmul.f32 %v2091, %v410
  %v2098 = vmul.f32 %v2092, %v2092
  %v2099 = vmul.f32 %v2093, %v2093
  %v2100 = vmul.f32 %v2094, %v2094
  %v2101 = vmul.f32 %v2095, %v2095
  %v2102 = vmul.f32 %v2096, %v2096
  %v2103 = vmul.f32 %v2097, %v2097
  %v2104 = vadd.f32 %v2098, %v2099
  %v2105 = vadd.f32 %v2104, %v2100
  %v2106 = vadd.f32 %v2105, %v2101
  %v2107 = vadd.f32 %v2106, %v2102
  %v2108 = vadd.f32 %v2107, %v2103
  %2109 = vadd.xlane.f32.xlu0 %v2108
  %v2110 = vpop.xlane.xlu0 %2109
  %v2111 = vmul.f32 %v2110, 0.001953125
  %v2112 = vadd.f32 %v2111, 1e-05
  %v2113 = vrsqrt.pop %v2112
  %v2114 = vmul.f32 %v2086, %v2113
  %v2115 = vmul.f32 %v2087, %v2113
  %v2116 = vmul.f32 %v2088, %v2113
  %v2117 = vmul.f32 %v2089, %v2113
  %v2118 = vmul.f32 %v2090, %v2113
  %v2119 = vmul.f32 %v2091, %v2113
  %2121 = vset.pattern.permute.xlu0 0
  %2122 = vperm.xlu0 %2121, %v1489
  %v2123 = vpop.permute.xlu0 %2122
  %v2125 = vmul.f32 %v2114, %v2123
  %v2126 = vmul.f32 %v2115, %v2123
  %v2127 = vmul.f32 %v2116, %v2123
  %v2128 = vmul.f32 %v2117, %v2123
  %v2129 = vmul.f32 %v2118, %v2123
  %v2130 = vmul.f32 %v2119, %v2123
  %2132 = vset.pattern.permute.xlu0 0
  %2133 = vperm.xlu0 %2132, %v1490
  %v2134 = vpop.permute.xlu0 %2133
  %v2136 = vadd.f32 %v2125, %v2134
  %v2137 = vadd.f32 %v2126, %v2134
  %v2138 = vadd.f32 %v2127, %v2134
  %v2139 = vadd.f32 %v2128, %v2134
  %v2140 = vadd.f32 %v2129, %v2134
  %v2141 = vadd.f32 %v2130, %v2134
  %v2142 = vmax.f32 %v2136, 0.0
  %v2143 = vmax.f32 %v2137, 0.0
  %v2144 = vmax.f32 %v2138, 0.0
  %v2145 = vmax.f32 %v2139, 0.0
  %v2146 = vmax.f32 %v2140, 0.0
  %v2147 = vmax.f32 %v2141, 0.0
  %2148 = vst [vmem:[%s23] sm:$0xff] %v2142
  %2149 = vst [vmem:[%s23 + $0x8] sm:$0xff] %v2143
  %2150 = vst [vmem:[%s23 + $0x10] sm:$0xff] %v2144
  %2151 = vst [vmem:[%s23 + $0x18] sm:$0xff] %v2145
  %2152 = vst [vmem:[%s23 + $0x20] sm:$0xff] %v2146
  %2153 = vst [vmem:[%s23 + $0x28] sm:$0xff] %v2147
  // Predicated region
  $region94: #{fdw_v2_forward.3} parent=0 // pred_check
    _
  $region95: #{fdw_v2_forward.3} parent=0 // pred_check_branch
    %2155 = sbr.rel (0) target = $region97
  $region96: #{fdw_v2_forward.3} parent=0 // pred_region
    _
  $region97: #{fdw_v2_forward.3} parent=0 // pred_fallthru
    _
  // Predicated region
  $region98: #{fdw_v2_forward.3} parent=0 // pred_check
    _
  $region99: #{fdw_v2_forward.3} parent=0 // pred_check_branch
    %2157 = sbr.rel (0) target = $region101
  $region100: #{fdw_v2_forward.3} parent=0 // pred_region
    _
  $region101: #{fdw_v2_forward.3} parent=0 // pred_fallthru
    _

</llo_original>
